<compile_context>
chip_gen: v6e
topology: v6e:2x2x1
jax: 0.10.0
libtpu: 0.0.40
codegen_flags: <defaults>
</compile_context>

<pallas_src>
import functools

import jax
import jax.numpy as jnp
from jax.experimental import pallas as pl
from jax.experimental.pallas import tpu as pltpu

MAX_TM = 1024                          # only-large-dim (M) tile for the matmul kernels
VMEM_LIMIT = 32 * 1024 * 1024          # safe on v5e (16 MiB default scoped) .. v7x (64 MiB phys)
FUSED_CONV_VMEM_CAP = 8 * 1024 * 1024  # per-image bf16 block cap for the fused 3x3 kernel


def _round_up(x, m):
    return (x + m - 1) // m * m


def _pick_tile_m(M, max_tm=MAX_TM):
    """Pick an M tile that divides M (no pad + slice HBM round-trips)."""
    if M <= max_tm:
        if M >= 512 and M % 16 == 0:
            return M // 2, M            # >=2 parallel grid steps -> both TCs busy on v7x
        return M, M
    best = None
    for tm in range(max_tm, 7, -1):
        if M % tm == 0:
            if tm % 8 == 0:
                return tm, M
            if best is None:
                best = tm
    if best is not None:
        return best, M
    return max_tm, _round_up(M, max_tm)  # pathological M: fall back to padding


# ---------------------------------------------------------------------------
# Pallas kernel: single-K-block matmul with fused bias + optional ReLU
#   x: (TM, K) bf16, w: (K, N) bf16, b: (1, N) fp32 -> o: (TM, N) out_dtype
# ---------------------------------------------------------------------------
def _matmul_bias_kernel(x_ref, w_ref, b_ref, o_ref, *, relu):
    acc = jnp.dot(x_ref[...], w_ref[...], preferred_element_type=jnp.float32)
    acc = acc + b_ref[...]                  # BN-folded bias in fp32
    if relu:
        acc = jnp.maximum(acc, 0.0)
    o_ref[...] = acc.astype(o_ref.dtype)


def matmul_bias(x, w, b, relu=False, out_dtype=jnp.bfloat16):
    """x:(M,K) @ w:(K,N) + b:(N,) [+ReLU] in one Pallas kernel.

    bf16 operands, fp32 accumulation.  K and N stay at their true sizes
    (single full-dim block); only M is tiled, with a tile that divides M.
    """
    M, K = x.shape
    _, N = w.shape
    x_bf = x.astype(jnp.bfloat16)
    w_bf = w.astype(jnp.bfloat16)
    b2 = b.astype(jnp.float32).reshape(1, N)

    tm, Mp = _pick_tile_m(M)
    xp = x_bf if Mp == M else jnp.pad(x_bf, ((0, Mp - M), (0, 0)))

    out = pl.pallas_call(
        functools.partial(_matmul_bias_kernel, relu=relu),
        out_shape=jax.ShapeDtypeStruct((Mp, N), out_dtype),
        grid_spec=pltpu.PrefetchScalarGridSpec(
            num_scalar_prefetch=0,
            grid=(Mp // tm,),
            in_specs=[
                pl.BlockSpec((tm, K), lambda i: (i, 0)),   # activations: tile M only
                pl.BlockSpec((K, N), lambda i: (0, 0)),    # full weight, VMEM-resident
                pl.BlockSpec((1, N), lambda i: (0, 0)),    # bias row
            ],
            out_specs=pl.BlockSpec((tm, N), lambda i: (i, 0)),
        ),
        compiler_params=pltpu.CompilerParams(
            dimension_semantics=("parallel",),             # shard M tiles across TCs
            vmem_limit_bytes=VMEM_LIMIT),
    )(xp, w_bf, b2)
    return out if Mp == M else out[:M]


# ---------------------------------------------------------------------------
# Fused stride-1 3x3 conv kernels (no im2col in HBM)
#
# The zero-padded image (pad: top=1, bottom=2, left=1, right=1) is flattened to
# (Hp*Wp, Cin).  For output position m = r*Wp + c (wide layout, c in [0,Wp)):
#   out[m] = sum_{i,j} xflat[m + i*Wp + j] @ W[i,j]
# i.e. 9 shifted contiguous 2-D slices of the same block, each a plain matmul.
# Columns c in {W, W+1} are junk and stripped by the wrapper.
# ---------------------------------------------------------------------------
def _conv3x3s1_kernel(x_ref, w_ref, b_ref, o_ref, *, H, Wp, relu):
    L = H * Wp
    acc = jnp.dot(x_ref[pl.ds(0, L), :], w_ref[0],
                  preferred_element_type=jnp.float32)
    for t in range(1, 9):
        off = (t // 3) * Wp + (t % 3)
        acc = acc + jnp.dot(x_ref[pl.ds(off, L), :], w_ref[t],
                            preferred_element_type=jnp.float32)
    acc = acc + b_ref[...]
    if relu:
        acc = jnp.maximum(acc, 0.0)
    o_ref[...] = acc.astype(o_ref.dtype)


def _fcn_head_kernel(x_ref, w1_ref, b1_ref, w2_ref, b2_ref, o_ref, *, H, Wp):
    L = H * Wp
    acc = jnp.dot(x_ref[pl.ds(0, L), :], w1_ref[0],
                  preferred_element_type=jnp.float32)
    for t in range(1, 9):
        off = (t // 3) * Wp + (t % 3)
        acc = acc + jnp.dot(x_ref[pl.ds(off, L), :], w1_ref[t],
                            preferred_element_type=jnp.float32)
    h = jnp.maximum(acc + b1_ref[...], 0.0).astype(jnp.bfloat16)   # conv3x3+BN+ReLU
    out = jnp.dot(h, w2_ref[...], preferred_element_type=jnp.float32) + b2_ref[...]
    o_ref[...] = out.astype(o_ref.dtype)   # narrow (Cout=2) store happens exactly once


def _pad_flat(x_bf16):
    """Zero-pad NHWC by (top=1, bottom=2, left=1, right=1), flatten spatial."""
    N, H, W, C = x_bf16.shape
    Hp, Wp = H + 3, W + 2           # extra bottom row keeps the largest shifted slice in-bounds
    xp = jnp.pad(x_bf16, ((0, 0), (1, 2), (1, 1), (0, 0)))
    return xp.reshape(N, Hp * Wp, C), Hp, Wp


def conv3x3_s1(x, w, b, relu=True, out_dtype=jnp.bfloat16):
    """Fused stride-1 pad-1 3x3 conv (+folded-BN bias, optional ReLU), NHWC."""
    N, H, W, C = x.shape
    Cout = w.shape[-1]
    xflat, Hp, Wp = _pad_flat(x.astype(jnp.bfloat16))
    w9 = w.reshape(9, C, Cout).astype(jnp.bfloat16)
    b1 = b.astype(jnp.float32).reshape(1, Cout)
    L = H * Wp

    out = pl.pallas_call(
        functools.partial(_conv3x3s1_kernel, H=H, Wp=Wp, relu=relu),
        out_shape=jax.ShapeDtypeStruct((N, L, Cout), out_dtype),
        grid_spec=pltpu.PrefetchScalarGridSpec(
            num_scalar_prefetch=0,
            grid=(N,),
            in_specs=[
                pl.BlockSpec((None, Hp * Wp, C), lambda n: (n, 0, 0)),
                pl.BlockSpec((9, C, Cout), lambda n: (0, 0, 0)),
                pl.BlockSpec((1, Cout), lambda n: (0, 0)),
            ],
            out_specs=pl.BlockSpec((None, L, Cout), lambda n: (n, 0, 0)),
        ),
        compiler_params=pltpu.CompilerParams(
            dimension_semantics=("parallel",),
            vmem_limit_bytes=VMEM_LIMIT),
    )(xflat, w9, b1)
    return out.reshape(N, H, Wp, Cout)[:, :, :W, :]   # strip the 2 junk columns


def fcn_head_fused(x, head_params):
    """FCNHead: conv3x3+BN+ReLU then conv1x1 (C->2), both fused in ONE kernel."""
    w1, b1 = head_params['conv1']
    w2, b2 = head_params['conv2']
    N, H, W, C = x.shape
    Cmid = w1.shape[-1]
    Cout = w2.shape[-1]
    xflat, Hp, Wp = _pad_flat(x.astype(jnp.bfloat16))
    w19 = w1.reshape(9, C, Cmid).astype(jnp.bfloat16)
    b1r = b1.astype(jnp.float32).reshape(1, Cmid)
    w2m = w2.reshape(Cmid, Cout).astype(jnp.bfloat16)
    b2r = b2.astype(jnp.float32).reshape(1, Cout)
    L = H * Wp

    out = pl.pallas_call(
        functools.partial(_fcn_head_kernel, H=H, Wp=Wp),
        out_shape=jax.ShapeDtypeStruct((N, L, Cout), jnp.float32),  # fp32: feeds final resize
        grid_spec=pltpu.PrefetchScalarGridSpec(
            num_scalar_prefetch=0,
            grid=(N,),
            in_specs=[
                pl.BlockSpec((None, Hp * Wp, C), lambda n: (n, 0, 0)),
                pl.BlockSpec((9, C, Cmid), lambda n: (0, 0, 0)),
                pl.BlockSpec((1, Cmid), lambda n: (0, 0)),
                pl.BlockSpec((Cmid, Cout), lambda n: (0, 0)),
                pl.BlockSpec((1, Cout), lambda n: (0, 0)),
            ],
            out_specs=pl.BlockSpec((None, L, Cout), lambda n: (n, 0, 0)),
        ),
        compiler_params=pltpu.CompilerParams(
            dimension_semantics=("parallel",),
            vmem_limit_bytes=VMEM_LIMIT),
    )(xflat, w19, b1r, w2m, b2r)
    return out.reshape(N, H, Wp, Cout)[:, :, :W, :]


# ---------------------------------------------------------------------------
# Conv2d dispatcher (BN folded into w/b, optional fused ReLU), NHWC.
# Matches PyTorch Conv2d (cross-correlation, zero padding).
# ---------------------------------------------------------------------------
def conv2d(x, w, b, stride=1, padding=1, relu=False, out_dtype=jnp.bfloat16):
    N, H, W, C = x.shape
    kh, kw, _, Cout = w.shape
    x = x.astype(jnp.bfloat16)

    if kh == 1 and kw == 1 and padding == 0 and stride == 1:
        out = matmul_bias(x.reshape(N * H * W, C), w.reshape(C, Cout), b,
                          relu=relu, out_dtype=out_dtype)
        return out.reshape(N, H, W, Cout)

    if (kh == 3 and kw == 3 and stride == 1 and padding == 1
            and (H + 3) * (W + 2) * C * 2 <= FUSED_CONV_VMEM_CAP):
        # TODO(synk): add spatial row-tiling so very large images also take the
        # fused (no-im2col) path instead of falling through to im2col below.
        return conv3x3_s1(x, w, b, relu=relu, out_dtype=out_dtype)

    # Strided convs: im2col (built in bf16 directly) + fused matmul kernel.
    # At stride 4 (first stage) there is no blow-up; at stride 2 it's 2.25x.
    xp = jnp.pad(x, ((0, 0), (padding, padding), (padding, padding), (0, 0)))
    Hp, Wp = H + 2 * padding, W + 2 * padding
    OH = (Hp - kh) // stride + 1
    OW = (Wp - kw) // stride + 1
    patches = []
    for i in range(kh):
        for j in range(kw):
            patches.append(
                xp[:, i:i + (OH - 1) * stride + 1:stride,
                      j:j + (OW - 1) * stride + 1:stride, :])
    # feature ordering (kh, kw, Cin) matches w.reshape(kh*kw*Cin, Cout)
    im2col = jnp.stack(patches, axis=3).reshape(N * OH * OW, kh * kw * C)
    out = matmul_bias(im2col, w.reshape(kh * kw * C, Cout), b,
                      relu=relu, out_dtype=out_dtype)
    return out.reshape(N, OH, OW, Cout)


# ---------------------------------------------------------------------------
# Bilinear resize, align_corners=True (F.interpolate semantics), NHWC (JAX glue)
# ---------------------------------------------------------------------------
def _gather2d(x, yi, xi):
    return x[:, yi[:, None], xi[None, :], :]


def bilinear_resize(x, out_h, out_w):
    N, H, W, C = x.shape
    dtype = x.dtype
    xf = x.astype(jnp.float32)
    ys = jnp.zeros((out_h,), jnp.float32) if H == 1 else jnp.linspace(0.0, H - 1.0, out_h)
    xs = jnp.zeros((out_w,), jnp.float32) if W == 1 else jnp.linspace(0.0, W - 1.0, out_w)
    y0 = jnp.floor(ys).astype(jnp.int32)
    x0 = jnp.floor(xs).astype(jnp.int32)
    y1 = jnp.minimum(y0 + 1, H - 1)
    x1 = jnp.minimum(x0 + 1, W - 1)
    wy = (ys - y0.astype(jnp.float32))[None, :, None, None]
    wx = (xs - x0.astype(jnp.float32))[None, None, :, None]
    a = _gather2d(xf, y0, x0)
    b = _gather2d(xf, y0, x1)
    c = _gather2d(xf, y1, x0)
    d = _gather2d(xf, y1, x1)
    top = a * (1.0 - wx) + b * wx
    bot = c * (1.0 - wx) + d * wx
    return (top * (1.0 - wy) + bot * wy).astype(dtype)


# ---------------------------------------------------------------------------
# Deterministic parameter construction (Conv weights + folded BatchNorm)
# ---------------------------------------------------------------------------
def _fold_bn(w, b, gamma, beta, mean, var, eps=1e-5):
    scale = gamma / jnp.sqrt(var + eps)
    return w * scale[None, None, None, :], (b - mean) * scale + beta


def _conv_bn_params(key, kh, kw, cin, cout):
    k1, k2, k3, k4, k5 = jax.random.split(key, 5)
    fan_out = kh * kw * cout
    w = jax.random.normal(k1, (kh, kw, cin, cout), jnp.float32) * jnp.sqrt(2.0 / fan_out)
    b = jnp.zeros((cout,), jnp.float32)
    gamma = 0.5 + jax.random.uniform(k2, (cout,), jnp.float32)
    beta = 0.1 * jax.random.normal(k3, (cout,), jnp.float32)
    mean = 0.1 * jax.random.normal(k4, (cout,), jnp.float32)
    var = 0.5 + jax.random.uniform(k5, (cout,), jnp.float32)
    w, b = _fold_bn(w, b, gamma, beta, mean, var)
    # pre-cast once: bf16 weights for the MXU, fp32 biases
    return w.astype(jnp.bfloat16), b.astype(jnp.float32)


def init_params(key, inplanes=8):
    C = inplanes
    chans = [C, 2 * C, 4 * C, 8 * C]
    keys = jax.random.split(key, 16)
    params = {}

    # backbone: 4 conv3x3 (+BN+ReLU) stages, strides 4/2/2/2
    cin = 3
    backbone = []
    for i, cout in enumerate(chans):
        backbone.append(_conv_bn_params(keys[i], 3, 3, cin, cout))
        cin = cout
    params['backbone'] = backbone

    # neck: lateral 1x1 convs on cat([fa_i, fb_i]) -> C, plus a 3x3 smooth conv
    lateral = []
    for i, c in enumerate(chans):
        lateral.append(_conv_bn_params(keys[4 + i], 1, 1, 2 * c, C))
    params['neck'] = {
        'lateral': lateral,
        'smooth': _conv_bn_params(keys[8], 3, 3, C, C),
    }

    # head1 (FCNHead(inplanes, 2)): conv3x3 C->C + BN + ReLU, then conv1x1 C->2
    kw1, kw2, kb2 = keys[9], keys[10], keys[11]
    w2 = (jax.random.normal(kw2, (1, 1, C, 2), jnp.float32)
          * jnp.sqrt(2.0 / 2)).astype(jnp.bfloat16)
    b2 = (0.01 * jax.random.normal(kb2, (2,), jnp.float32)).astype(jnp.float32)
    params['head1'] = {
        'conv1': _conv_bn_params(kw1, 3, 3, C, C),
        'conv2': (w2, b2),
    }
    return params


# ---------------------------------------------------------------------------
# Model forward (== ChangeDetection.forward_once, dual_label=False, eval mode)
# ---------------------------------------------------------------------------
def backbone_forward(x, bb_params):
    feats = []
    for (w, b), stride in zip(bb_params, [4, 2, 2, 2]):
        x = conv2d(x, w, b, stride=stride, padding=1, relu=True)
        feats.append(x)
    return feats  # strides 4, 8, 16, 32 (bf16)


def neck_forward(fa, fb, neck_params):
    ps = []
    for fa_i, fb_i, (w, b) in zip(fa, fb, neck_params['lateral']):
        d = jnp.concatenate([fa_i, fb_i], axis=-1)
        ps.append(conv2d(d, w, b, stride=1, padding=0, relu=True))
    p = ps[3]
    for i in (2, 1, 0):  # top-down pathway
        p = ps[i] + bilinear_resize(p, ps[i].shape[1], ps[i].shape[2])
    w, b = neck_params['smooth']
    return conv2d(p, w, b, stride=1, padding=1, relu=True)   # fused 3x3 kernel


def change_detection_forward(xa_nchw, xb_nchw, params):
    assert xa_nchw.shape == xb_nchw.shape, \
        'The two images are not the same size, please check it.'
    n_batch, _, h_input, w_input = xa_nchw.shape
    xa = jnp.transpose(xa_nchw, (0, 2, 3, 1))   # NCHW -> NHWC
    xb = jnp.transpose(xb_nchw, (0, 2, 3, 1))

    # shared backbone weights: run xa & xb in ONE pass (batch-axis concat)
    x_cat = jnp.concatenate([xa, xb], axis=0)
    feats = backbone_forward(x_cat, params['backbone'])
    fa = [f[:n_batch] for f in feats]
    fb = [f[n_batch:] for f in feats]

    change = neck_forward(fa, fb, params['neck'])
    out = fcn_head_fused(change, params['head1'])          # fp32, stride-4 resolution
    out = bilinear_resize(out, h_input, w_input)           # align_corners=True
    return jnp.transpose(out, (0, 3, 1, 2))                # back to NCHW, (N,2,H,W)


# ---------------------------------------------------------------------------
if __name__ == "__main__":
    key = jax.random.PRNGKey(0)
    k_xa, k_xb, k_params = jax.random.split(key, 3)

    N, Cimg, H, W = 2, 3, 32, 32   # input divisible by 32 (stride-32 stage)
    xa = jax.random.normal(k_xa, (N, Cimg, H, W), jnp.float32)
    xb = jax.random.normal(k_xb, (N, Cimg, H, W), jnp.float32)

    params = init_params(k_params, inplanes=8)

    fwd = jax.jit(change_detection_forward)
    out = fwd(xa, xb, params)
    out = jax.block_until_ready(out)
    assert out.shape == (N, 2, H, W), out.shape
    assert bool(jnp.all(jnp.isfinite(out))), "non-finite output"
    print("KERNEL_OK")
</pallas_src>

<mosaic_0001>
module attributes {stable_mosaic.version = 11 : i64} {
  func.func @_matmul_bias_kernel(%arg0: i32, %arg1: memref<256x27xbf16, #tpu.memory_space<vmem>>, %arg2: memref<27x8xbf16, #tpu.memory_space<vmem>>, %arg3: memref<1x8xf32, #tpu.memory_space<vmem>>, %arg4: memref<256x8xbf16, #tpu.memory_space<vmem>>) attributes {dimension_semantics = [#tpu.dimension_semantics<parallel>], iteration_bounds = array<i64: 1>, scalar_prefetch = 0 : i64, scratch_operands = 0 : i64, tpu.core_type = #tpu.core_type<tc>, window_params = [{transform_indices = @transform_0, window_bounds = array<i64: 256, 27>}, {pipeline_mode = #tpu.pipeline_mode<synchronous>, transform_indices = @transform_1, window_bounds = array<i64: 27, 8>}, {pipeline_mode = #tpu.pipeline_mode<synchronous>, transform_indices = @transform_2, window_bounds = array<i64: 1, 8>}, {transform_indices = @transform_3, window_bounds = array<i64: 256, 8>}]} {
    %c0 = arith.constant 0 : index
    %c0_0 = arith.constant 0 : index
    %0 = vector.load %arg1[%c0, %c0_0] : memref<256x27xbf16, #tpu.memory_space<vmem>>, vector<256x27xbf16>
    %c0_1 = arith.constant 0 : index
    %c0_2 = arith.constant 0 : index
    %1 = vector.load %arg2[%c0_1, %c0_2] : memref<27x8xbf16, #tpu.memory_space<vmem>>, vector<27x8xbf16>
    %cst = arith.constant dense<0.000000e+00> : vector<256x8xf32>
    %2 = tpu.matmul %0, %1, %cst {dimension_numbers = #tpu.dot_dimension_numbers<[1], [0], [0], [1], [0, 0, 1, 1], [], []>} : vector<256x27xbf16>, vector<27x8xbf16>, vector<256x8xf32> -> vector<256x8xf32>
    %c0_3 = arith.constant 0 : index
    %c0_4 = arith.constant 0 : index
    %3 = vector.load %arg3[%c0_3, %c0_4] : memref<1x8xf32, #tpu.memory_space<vmem>>, vector<1x8xf32>
    %4 = vector.broadcast %3 : vector<1x8xf32> to vector<256x8xf32>
    %5 = arith.addf %2, %4 : vector<256x8xf32>
    %cst_5 = arith.constant 0.000000e+00 : f32
    %6 = vector.broadcast %cst_5 : f32 to vector<256x8xf32>
    %7 = arith.maximumf %5, %6 : vector<256x8xf32>
    %8 = arith.truncf %7 : vector<256x8xf32> to vector<256x8xbf16>
    %c0_6 = arith.constant 0 : index
    %c0_7 = arith.constant 0 : index
    %9 = vector.load %arg4[%c0_6, %c0_7] : memref<256x8xbf16, #tpu.memory_space<vmem>>, vector<256x8xbf16>
    tpu.vector_store %arg4[%c0_6, %c0_7], %8 {strides = array<i32>} : memref<256x8xbf16, #tpu.memory_space<vmem>>, vector<256x8xbf16>,
    return
  }
  func.func @transform_0(%arg0: i32) -> (i32, i32) {
    %c0_i32 = arith.constant 0 : i32
    %c0_i32_0 = arith.constant 0 : i32
    return %arg0, %c0_i32 : i32, i32
  }
  func.func @transform_1(%arg0: i32) -> (i32, i32) {
    %c0_i32 = arith.constant 0 : i32
    %c0_i32_0 = arith.constant 0 : i32
    %c0_i32_1 = arith.constant 0 : i32
    return %c0_i32, %c0_i32_0 : i32, i32
  }
  func.func @transform_2(%arg0: i32) -> (i32, i32) {
    %c0_i32 = arith.constant 0 : i32
    %c0_i32_0 = arith.constant 0 : i32
    %c0_i32_1 = arith.constant 0 : i32
    return %c0_i32, %c0_i32_0 : i32, i32
  }
  func.func @transform_3(%arg0: i32) -> (i32, i32) {
    %c0_i32 = arith.constant 0 : i32
    %c0_i32_0 = arith.constant 0 : i32
    return %arg0, %c0_i32 : i32, i32
  }
}

module attributes {stable_mosaic.version = 11 : i64} {
  func.func @_matmul_bias_kernel(%arg0: i32, %arg1: memref<128x16xbf16, #tpu.memory_space<vmem>>, %arg2: memref<16x8xbf16, #tpu.memory_space<vmem>>, %arg3: memref<1x8xf32, #tpu.memory_space<vmem>>, %arg4: memref<128x8xbf16, #tpu.memory_space<vmem>>) attributes {dimension_semantics = [#tpu.dimension_semantics<parallel>], iteration_bounds = array<i64: 1>, scalar_prefetch = 0 : i64, scratch_operands = 0 : i64, tpu.core_type = #tpu.core_type<tc>, window_params = [{transform_indices = @transform_0, window_bounds = array<i64: 128, 16>}, {pipeline_mode = #tpu.pipeline_mode<synchronous>, transform_indices = @transform_1, window_bounds = array<i64: 16, 8>}, {pipeline_mode = #tpu.pipeline_mode<synchronous>, transform_indices = @transform_2, window_bounds = array<i64: 1, 8>}, {transform_indices = @transform_3, window_bounds = array<i64: 128, 8>}]} {
    %c0 = arith.constant 0 : index
    %c0_0 = arith.constant 0 : index
    %0 = vector.load %arg1[%c0, %c0_0] : memref<128x16xbf16, #tpu.memory_space<vmem>>, vector<128x16xbf16>
    %c0_1 = arith.constant 0 : index
    %c0_2 = arith.constant 0 : index
    %1 = vector.load %arg2[%c0_1, %c0_2] : memref<16x8xbf16, #tpu.memory_space<vmem>>, vector<16x8xbf16>
    %cst = arith.constant dense<0.000000e+00> : vector<128x8xf32>
    %2 = tpu.matmul %0, %1, %cst {dimension_numbers = #tpu.dot_dimension_numbers<[1], [0], [0], [1], [0, 0, 1, 1], [], []>} : vector<128x16xbf16>, vector<16x8xbf16>, vector<128x8xf32> -> vector<128x8xf32>
    %c0_3 = arith.constant 0 : index
    %c0_4 = arith.constant 0 : index
    %3 = vector.load %arg3[%c0_3, %c0_4] : memref<1x8xf32, #tpu.memory_space<vmem>>, vector<1x8xf32>
    %4 = vector.broadcast %3 : vector<1x8xf32> to vector<128x8xf32>
    %5 = arith.addf %2, %4 : vector<128x8xf32>
    %cst_5 = arith.constant 0.000000e+00 : f32
    %6 = vector.broadcast %cst_5 : f32 to vector<128x8xf32>
    %7 = arith.maximumf %5, %6 : vector<128x8xf32>
    %8 = arith.truncf %7 : vector<128x8xf32> to vector<128x8xbf16>
    %c0_6 = arith.constant 0 : index
    %c0_7 = arith.constant 0 : index
    %9 = vector.load %arg4[%c0_6, %c0_7] : memref<128x8xbf16, #tpu.memory_space<vmem>>, vector<128x8xbf16>
    tpu.vector_store %arg4[%c0_6, %c0_7], %8 {strides = array<i32>} : memref<128x8xbf16, #tpu.memory_space<vmem>>, vector<128x8xbf16>,
    return
  }
  func.func @transform_0(%arg0: i32) -> (i32, i32) {
    %c0_i32 = arith.constant 0 : i32
    %c0_i32_0 = arith.constant 0 : i32
    return %arg0, %c0_i32 : i32, i32
  }
  func.func @transform_1(%arg0: i32) -> (i32, i32) {
    %c0_i32 = arith.constant 0 : i32
    %c0_i32_0 = arith.constant 0 : i32
    %c0_i32_1 = arith.constant 0 : i32
    return %c0_i32, %c0_i32_0 : i32, i32
  }
  func.func @transform_2(%arg0: i32) -> (i32, i32) {
    %c0_i32 = arith.constant 0 : i32
    %c0_i32_0 = arith.constant 0 : i32
    %c0_i32_1 = arith.constant 0 : i32
    return %c0_i32, %c0_i32_0 : i32, i32
  }
  func.func @transform_3(%arg0: i32) -> (i32, i32) {
    %c0_i32 = arith.constant 0 : i32
    %c0_i32_0 = arith.constant 0 : i32
    return %arg0, %c0_i32 : i32, i32
  }
}

module attributes {stable_mosaic.version = 11 : i64} {
  func.func @_matmul_bias_kernel(%arg0: i32, %arg1: memref<64x72xbf16, #tpu.memory_space<vmem>>, %arg2: memref<72x16xbf16, #tpu.memory_space<vmem>>, %arg3: memref<1x16xf32, #tpu.memory_space<vmem>>, %arg4: memref<64x16xbf16, #tpu.memory_space<vmem>>) attributes {dimension_semantics = [#tpu.dimension_semantics<parallel>], iteration_bounds = array<i64: 1>, scalar_prefetch = 0 : i64, scratch_operands = 0 : i64, tpu.core_type = #tpu.core_type<tc>, window_params = [{transform_indices = @transform_0, window_bounds = array<i64: 64, 72>}, {pipeline_mode = #tpu.pipeline_mode<synchronous>, transform_indices = @transform_1, window_bounds = array<i64: 72, 16>}, {pipeline_mode = #tpu.pipeline_mode<synchronous>, transform_indices = @transform_2, window_bounds = array<i64: 1, 16>}, {transform_indices = @transform_3, window_bounds = array<i64: 64, 16>}]} {
    %c0 = arith.constant 0 : index
    %c0_0 = arith.constant 0 : index
    %0 = vector.load %arg1[%c0, %c0_0] : memref<64x72xbf16, #tpu.memory_space<vmem>>, vector<64x72xbf16>
    %c0_1 = arith.constant 0 : index
    %c0_2 = arith.constant 0 : index
    %1 = vector.load %arg2[%c0_1, %c0_2] : memref<72x16xbf16, #tpu.memory_space<vmem>>, vector<72x16xbf16>
    %cst = arith.constant dense<0.000000e+00> : vector<64x16xf32>
    %2 = tpu.matmul %0, %1, %cst {dimension_numbers = #tpu.dot_dimension_numbers<[1], [0], [0], [1], [0, 0, 1, 1], [], []>} : vector<64x72xbf16>, vector<72x16xbf16>, vector<64x16xf32> -> vector<64x16xf32>
    %c0_3 = arith.constant 0 : index
    %c0_4 = arith.constant 0 : index
    %3 = vector.load %arg3[%c0_3, %c0_4] : memref<1x16xf32, #tpu.memory_space<vmem>>, vector<1x16xf32>
    %4 = vector.broadcast %3 : vector<1x16xf32> to vector<64x16xf32>
    %5 = arith.addf %2, %4 : vector<64x16xf32>
    %cst_5 = arith.constant 0.000000e+00 : f32
    %6 = vector.broadcast %cst_5 : f32 to vector<64x16xf32>
    %7 = arith.maximumf %5, %6 : vector<64x16xf32>
    %8 = arith.truncf %7 : vector<64x16xf32> to vector<64x16xbf16>
    %c0_6 = arith.constant 0 : index
    %c0_7 = arith.constant 0 : index
    %9 = vector.load %arg4[%c0_6, %c0_7] : memref<64x16xbf16, #tpu.memory_space<vmem>>, vector<64x16xbf16>
    tpu.vector_store %arg4[%c0_6, %c0_7], %8 {strides = array<i32>} : memref<64x16xbf16, #tpu.memory_space<vmem>>, vector<64x16xbf16>,
    return
  }
  func.func @transform_0(%arg0: i32) -> (i32, i32) {
    %c0_i32 = arith.constant 0 : i32
    %c0_i32_0 = arith.constant 0 : i32
    return %arg0, %c0_i32 : i32, i32
  }
  func.func @transform_1(%arg0: i32) -> (i32, i32) {
    %c0_i32 = arith.constant 0 : i32
    %c0_i32_0 = arith.constant 0 : i32
    %c0_i32_1 = arith.constant 0 : i32
    return %c0_i32, %c0_i32_0 : i32, i32
  }
  func.func @transform_2(%arg0: i32) -> (i32, i32) {
    %c0_i32 = arith.constant 0 : i32
    %c0_i32_0 = arith.constant 0 : i32
    %c0_i32_1 = arith.constant 0 : i32
    return %c0_i32, %c0_i32_0 : i32, i32
  }
  func.func @transform_3(%arg0: i32) -> (i32, i32) {
    %c0_i32 = arith.constant 0 : i32
    %c0_i32_0 = arith.constant 0 : i32
    return %arg0, %c0_i32 : i32, i32
  }
}

module attributes {stable_mosaic.version = 11 : i64} {
  func.func @_matmul_bias_kernel(%arg0: i32, %arg1: memref<32x32xbf16, #tpu.memory_space<vmem>>, %arg2: memref<32x8xbf16, #tpu.memory_space<vmem>>, %arg3: memref<1x8xf32, #tpu.memory_space<vmem>>, %arg4: memref<32x8xbf16, #tpu.memory_space<vmem>>) attributes {dimension_semantics = [#tpu.dimension_semantics<parallel>], iteration_bounds = array<i64: 1>, scalar_prefetch = 0 : i64, scratch_operands = 0 : i64, tpu.core_type = #tpu.core_type<tc>, window_params = [{transform_indices = @transform_0, window_bounds = array<i64: 32, 32>}, {pipeline_mode = #tpu.pipeline_mode<synchronous>, transform_indices = @transform_1, window_bounds = array<i64: 32, 8>}, {pipeline_mode = #tpu.pipeline_mode<synchronous>, transform_indices = @transform_2, window_bounds = array<i64: 1, 8>}, {transform_indices = @transform_3, window_bounds = array<i64: 32, 8>}]} {
    %c0 = arith.constant 0 : index
    %c0_0 = arith.constant 0 : index
    %0 = vector.load %arg1[%c0, %c0_0] : memref<32x32xbf16, #tpu.memory_space<vmem>>, vector<32x32xbf16>
    %c0_1 = arith.constant 0 : index
    %c0_2 = arith.constant 0 : index
    %1 = vector.load %arg2[%c0_1, %c0_2] : memref<32x8xbf16, #tpu.memory_space<vmem>>, vector<32x8xbf16>
    %cst = arith.constant dense<0.000000e+00> : vector<32x8xf32>
    %2 = tpu.matmul %0, %1, %cst {dimension_numbers = #tpu.dot_dimension_numbers<[1], [0], [0], [1], [0, 0, 1, 1], [], []>} : vector<32x32xbf16>, vector<32x8xbf16>, vector<32x8xf32> -> vector<32x8xf32>
    %c0_3 = arith.constant 0 : index
    %c0_4 = arith.constant 0 : index
    %3 = vector.load %arg3[%c0_3, %c0_4] : memref<1x8xf32, #tpu.memory_space<vmem>>, vector<1x8xf32>
    %4 = vector.broadcast %3 : vector<1x8xf32> to vector<32x8xf32>
    %5 = arith.addf %2, %4 : vector<32x8xf32>
    %cst_5 = arith.constant 0.000000e+00 : f32
    %6 = vector.broadcast %cst_5 : f32 to vector<32x8xf32>
    %7 = arith.maximumf %5, %6 : vector<32x8xf32>
    %8 = arith.truncf %7 : vector<32x8xf32> to vector<32x8xbf16>
    %c0_6 = arith.constant 0 : index
    %c0_7 = arith.constant 0 : index
    %9 = vector.load %arg4[%c0_6, %c0_7] : memref<32x8xbf16, #tpu.memory_space<vmem>>, vector<32x8xbf16>
    tpu.vector_store %arg4[%c0_6, %c0_7], %8 {strides = array<i32>} : memref<32x8xbf16, #tpu.memory_space<vmem>>, vector<32x8xbf16>,
    return
  }
  func.func @transform_0(%arg0: i32) -> (i32, i32) {
    %c0_i32 = arith.constant 0 : i32
    %c0_i32_0 = arith.constant 0 : i32
    return %arg0, %c0_i32 : i32, i32
  }
  func.func @transform_1(%arg0: i32) -> (i32, i32) {
    %c0_i32 = arith.constant 0 : i32
    %c0_i32_0 = arith.constant 0 : i32
    %c0_i32_1 = arith.constant 0 : i32
    return %c0_i32, %c0_i32_0 : i32, i32
  }
  func.func @transform_2(%arg0: i32) -> (i32, i32) {
    %c0_i32 = arith.constant 0 : i32
    %c0_i32_0 = arith.constant 0 : i32
    %c0_i32_1 = arith.constant 0 : i32
    return %c0_i32, %c0_i32_0 : i32, i32
  }
  func.func @transform_3(%arg0: i32) -> (i32, i32) {
    %c0_i32 = arith.constant 0 : i32
    %c0_i32_0 = arith.constant 0 : i32
    return %arg0, %c0_i32 : i32, i32
  }
}

module attributes {stable_mosaic.version = 11 : i64} {
  func.func @_matmul_bias_kernel(%arg0: i32, %arg1: memref<16x144xbf16, #tpu.memory_space<vmem>>, %arg2: memref<144x32xbf16, #tpu.memory_space<vmem>>, %arg3: memref<1x32xf32, #tpu.memory_space<vmem>>, %arg4: memref<16x32xbf16, #tpu.memory_space<vmem>>) attributes {dimension_semantics = [#tpu.dimension_semantics<parallel>], iteration_bounds = array<i64: 1>, scalar_prefetch = 0 : i64, scratch_operands = 0 : i64, tpu.core_type = #tpu.core_type<tc>, window_params = [{transform_indices = @transform_0, window_bounds = array<i64: 16, 144>}, {pipeline_mode = #tpu.pipeline_mode<synchronous>, transform_indices = @transform_1, window_bounds = array<i64: 144, 32>}, {pipeline_mode = #tpu.pipeline_mode<synchronous>, transform_indices = @transform_2, window_bounds = array<i64: 1, 32>}, {transform_indices = @transform_3, window_bounds = array<i64: 16, 32>}]} {
    %c0 = arith.constant 0 : index
    %c0_0 = arith.constant 0 : index
    %0 = vector.load %arg1[%c0, %c0_0] : memref<16x144xbf16, #tpu.memory_space<vmem>>, vector<16x144xbf16>
    %c0_1 = arith.constant 0 : index
    %c0_2 = arith.constant 0 : index
    %1 = vector.load %arg2[%c0_1, %c0_2] : memref<144x32xbf16, #tpu.memory_space<vmem>>, vector<144x32xbf16>
    %cst = arith.constant dense<0.000000e+00> : vector<16x32xf32>
    %2 = tpu.matmul %0, %1, %cst {dimension_numbers = #tpu.dot_dimension_numbers<[1], [0], [0], [1], [0, 0, 1, 1], [], []>} : vector<16x144xbf16>, vector<144x32xbf16>, vector<16x32xf32> -> vector<16x32xf32>
    %c0_3 = arith.constant 0 : index
    %c0_4 = arith.constant 0 : index
    %3 = vector.load %arg3[%c0_3, %c0_4] : memref<1x32xf32, #tpu.memory_space<vmem>>, vector<1x32xf32>
    %4 = vector.broadcast %3 : vector<1x32xf32> to vector<16x32xf32>
    %5 = arith.addf %2, %4 : vector<16x32xf32>
    %cst_5 = arith.constant 0.000000e+00 : f32
    %6 = vector.broadcast %cst_5 : f32 to vector<16x32xf32>
    %7 = arith.maximumf %5, %6 : vector<16x32xf32>
    %8 = arith.truncf %7 : vector<16x32xf32> to vector<16x32xbf16>
    %c0_6 = arith.constant 0 : index
    %c0_7 = arith.constant 0 : index
    %9 = vector.load %arg4[%c0_6, %c0_7] : memref<16x32xbf16, #tpu.memory_space<vmem>>, vector<16x32xbf16>
    tpu.vector_store %arg4[%c0_6, %c0_7], %8 {strides = array<i32>} : memref<16x32xbf16, #tpu.memory_space<vmem>>, vector<16x32xbf16>,
    return
  }
  func.func @transform_0(%arg0: i32) -> (i32, i32) {
    %c0_i32 = arith.constant 0 : i32
    %c0_i32_0 = arith.constant 0 : i32
    return %arg0, %c0_i32 : i32, i32
  }
  func.func @transform_1(%arg0: i32) -> (i32, i32) {
    %c0_i32 = arith.constant 0 : i32
    %c0_i32_0 = arith.constant 0 : i32
    %c0_i32_1 = arith.constant 0 : i32
    return %c0_i32, %c0_i32_0 : i32, i32
  }
  func.func @transform_2(%arg0: i32) -> (i32, i32) {
    %c0_i32 = arith.constant 0 : i32
    %c0_i32_0 = arith.constant 0 : i32
    %c0_i32_1 = arith.constant 0 : i32
    return %c0_i32, %c0_i32_0 : i32, i32
  }
  func.func @transform_3(%arg0: i32) -> (i32, i32) {
    %c0_i32 = arith.constant 0 : i32
    %c0_i32_0 = arith.constant 0 : i32
    return %arg0, %c0_i32 : i32, i32
  }
}

module attributes {stable_mosaic.version = 11 : i64} {
  func.func @_matmul_bias_kernel(%arg0: i32, %arg1: memref<8x64xbf16, #tpu.memory_space<vmem>>, %arg2: memref<64x8xbf16, #tpu.memory_space<vmem>>, %arg3: memref<1x8xf32, #tpu.memory_space<vmem>>, %arg4: memref<8x8xbf16, #tpu.memory_space<vmem>>) attributes {dimension_semantics = [#tpu.dimension_semantics<parallel>], iteration_bounds = array<i64: 1>, scalar_prefetch = 0 : i64, scratch_operands = 0 : i64, tpu.core_type = #tpu.core_type<tc>, window_params = [{transform_indices = @transform_0, window_bounds = array<i64: 8, 64>}, {pipeline_mode = #tpu.pipeline_mode<synchronous>, transform_indices = @transform_1, window_bounds = array<i64: 64, 8>}, {pipeline_mode = #tpu.pipeline_mode<synchronous>, transform_indices = @transform_2, window_bounds = array<i64: 1, 8>}, {transform_indices = @transform_3, window_bounds = array<i64: 8, 8>}]} {
    %c0 = arith.constant 0 : index
    %c0_0 = arith.constant 0 : index
    %0 = vector.load %arg1[%c0, %c0_0] : memref<8x64xbf16, #tpu.memory_space<vmem>>, vector<8x64xbf16>
    %c0_1 = arith.constant 0 : index
    %c0_2 = arith.constant 0 : index
    %1 = vector.load %arg2[%c0_1, %c0_2] : memref<64x8xbf16, #tpu.memory_space<vmem>>, vector<64x8xbf16>
    %cst = arith.constant dense<0.000000e+00> : vector<8x8xf32>
    %2 = tpu.matmul %0, %1, %cst {dimension_numbers = #tpu.dot_dimension_numbers<[1], [0], [0], [1], [0, 0, 1, 1], [], []>} : vector<8x64xbf16>, vector<64x8xbf16>, vector<8x8xf32> -> vector<8x8xf32>
    %c0_3 = arith.constant 0 : index
    %c0_4 = arith.constant 0 : index
    %3 = vector.load %arg3[%c0_3, %c0_4] : memref<1x8xf32, #tpu.memory_space<vmem>>, vector<1x8xf32>
    %4 = vector.broadcast %3 : vector<1x8xf32> to vector<8x8xf32>
    %5 = arith.addf %2, %4 : vector<8x8xf32>
    %cst_5 = arith.constant 0.000000e+00 : f32
    %6 = vector.broadcast %cst_5 : f32 to vector<8x8xf32>
    %7 = arith.maximumf %5, %6 : vector<8x8xf32>
    %8 = arith.truncf %7 : vector<8x8xf32> to vector<8x8xbf16>
    %c0_6 = arith.constant 0 : index
    %c0_7 = arith.constant 0 : index
    %9 = vector.load %arg4[%c0_6, %c0_7] : memref<8x8xbf16, #tpu.memory_space<vmem>>, vector<8x8xbf16>
    tpu.vector_store %arg4[%c0_6, %c0_7], %8 {strides = array<i32>} : memref<8x8xbf16, #tpu.memory_space<vmem>>, vector<8x8xbf16>,
    return
  }
  func.func @transform_0(%arg0: i32) -> (i32, i32) {
    %c0_i32 = arith.constant 0 : i32
    %c0_i32_0 = arith.constant 0 : i32
    return %arg0, %c0_i32 : i32, i32
  }
  func.func @transform_1(%arg0: i32) -> (i32, i32) {
    %c0_i32 = arith.constant 0 : i32
    %c0_i32_0 = arith.constant 0 : i32
    %c0_i32_1 = arith.constant 0 : i32
    return %c0_i32, %c0_i32_0 : i32, i32
  }
  func.func @transform_2(%arg0: i32) -> (i32, i32) {
    %c0_i32 = arith.constant 0 : i32
    %c0_i32_0 = arith.constant 0 : i32
    %c0_i32_1 = arith.constant 0 : i32
    return %c0_i32, %c0_i32_0 : i32, i32
  }
  func.func @transform_3(%arg0: i32) -> (i32, i32) {
    %c0_i32 = arith.constant 0 : i32
    %c0_i32_0 = arith.constant 0 : i32
    return %arg0, %c0_i32 : i32, i32
  }
}

module attributes {stable_mosaic.version = 11 : i64} {
  func.func @_matmul_bias_kernel(%arg0: i32, %arg1: memref<4x288xbf16, #tpu.memory_space<vmem>>, %arg2: memref<288x64xbf16, #tpu.memory_space<vmem>>, %arg3: memref<1x64xf32, #tpu.memory_space<vmem>>, %arg4: memref<4x64xbf16, #tpu.memory_space<vmem>>) attributes {dimension_semantics = [#tpu.dimension_semantics<parallel>], iteration_bounds = array<i64: 1>, scalar_prefetch = 0 : i64, scratch_operands = 0 : i64, tpu.core_type = #tpu.core_type<tc>, window_params = [{transform_indices = @transform_0, window_bounds = array<i64: 4, 288>}, {pipeline_mode = #tpu.pipeline_mode<synchronous>, transform_indices = @transform_1, window_bounds = array<i64: 288, 64>}, {pipeline_mode = #tpu.pipeline_mode<synchronous>, transform_indices = @transform_2, window_bounds = array<i64: 1, 64>}, {transform_indices = @transform_3, window_bounds = array<i64: 4, 64>}]} {
    %c0 = arith.constant 0 : index
    %c0_0 = arith.constant 0 : index
    %0 = vector.load %arg1[%c0, %c0_0] : memref<4x288xbf16, #tpu.memory_space<vmem>>, vector<4x288xbf16>
    %c0_1 = arith.constant 0 : index
    %c0_2 = arith.constant 0 : index
    %1 = vector.load %arg2[%c0_1, %c0_2] : memref<288x64xbf16, #tpu.memory_space<vmem>>, vector<288x64xbf16>
    %cst = arith.constant dense<0.000000e+00> : vector<4x64xf32>
    %2 = tpu.matmul %0, %1, %cst {dimension_numbers = #tpu.dot_dimension_numbers<[1], [0], [0], [1], [0, 0, 1, 1], [], []>} : vector<4x288xbf16>, vector<288x64xbf16>, vector<4x64xf32> -> vector<4x64xf32>
    %c0_3 = arith.constant 0 : index
    %c0_4 = arith.constant 0 : index
    %3 = vector.load %arg3[%c0_3, %c0_4] : memref<1x64xf32, #tpu.memory_space<vmem>>, vector<1x64xf32>
    %4 = vector.broadcast %3 : vector<1x64xf32> to vector<4x64xf32>
    %5 = arith.addf %2, %4 : vector<4x64xf32>
    %cst_5 = arith.constant 0.000000e+00 : f32
    %6 = vector.broadcast %cst_5 : f32 to vector<4x64xf32>
    %7 = arith.maximumf %5, %6 : vector<4x64xf32>
    %8 = arith.truncf %7 : vector<4x64xf32> to vector<4x64xbf16>
    %c0_6 = arith.constant 0 : index
    %c0_7 = arith.constant 0 : index
    %9 = vector.load %arg4[%c0_6, %c0_7] : memref<4x64xbf16, #tpu.memory_space<vmem>>, vector<4x64xbf16>
    tpu.vector_store %arg4[%c0_6, %c0_7], %8 {strides = array<i32>} : memref<4x64xbf16, #tpu.memory_space<vmem>>, vector<4x64xbf16>,
    return
  }
  func.func @transform_0(%arg0: i32) -> (i32, i32) {
    %c0_i32 = arith.constant 0 : i32
    %c0_i32_0 = arith.constant 0 : i32
    return %arg0, %c0_i32 : i32, i32
  }
  func.func @transform_1(%arg0: i32) -> (i32, i32) {
    %c0_i32 = arith.constant 0 : i32
    %c0_i32_0 = arith.constant 0 : i32
    %c0_i32_1 = arith.constant 0 : i32
    return %c0_i32, %c0_i32_0 : i32, i32
  }
  func.func @transform_2(%arg0: i32) -> (i32, i32) {
    %c0_i32 = arith.constant 0 : i32
    %c0_i32_0 = arith.constant 0 : i32
    %c0_i32_1 = arith.constant 0 : i32
    return %c0_i32, %c0_i32_0 : i32, i32
  }
  func.func @transform_3(%arg0: i32) -> (i32, i32) {
    %c0_i32 = arith.constant 0 : i32
    %c0_i32_0 = arith.constant 0 : i32
    return %arg0, %c0_i32 : i32, i32
  }
}

module attributes {stable_mosaic.version = 11 : i64} {
  func.func @_matmul_bias_kernel(%arg0: i32, %arg1: memref<2x128xbf16, #tpu.memory_space<vmem>>, %arg2: memref<128x8xbf16, #tpu.memory_space<vmem>>, %arg3: memref<1x8xf32, #tpu.memory_space<vmem>>, %arg4: memref<2x8xbf16, #tpu.memory_space<vmem>>) attributes {dimension_semantics = [#tpu.dimension_semantics<parallel>], iteration_bounds = array<i64: 1>, scalar_prefetch = 0 : i64, scratch_operands = 0 : i64, tpu.core_type = #tpu.core_type<tc>, window_params = [{transform_indices = @transform_0, window_bounds = array<i64: 2, 128>}, {pipeline_mode = #tpu.pipeline_mode<synchronous>, transform_indices = @transform_1, window_bounds = array<i64: 128, 8>}, {pipeline_mode = #tpu.pipeline_mode<synchronous>, transform_indices = @transform_2, window_bounds = array<i64: 1, 8>}, {transform_indices = @transform_3, window_bounds = array<i64: 2, 8>}]} {
    %c0 = arith.constant 0 : index
    %c0_0 = arith.constant 0 : index
    %0 = vector.load %arg1[%c0, %c0_0] : memref<2x128xbf16, #tpu.memory_space<vmem>>, vector<2x128xbf16>
    %c0_1 = arith.constant 0 : index
    %c0_2 = arith.constant 0 : index
    %1 = vector.load %arg2[%c0_1, %c0_2] : memref<128x8xbf16, #tpu.memory_space<vmem>>, vector<128x8xbf16>
    %cst = arith.constant dense<0.000000e+00> : vector<2x8xf32>
    %2 = tpu.matmul %0, %1, %cst {dimension_numbers = #tpu.dot_dimension_numbers<[1], [0], [0], [1], [0, 0, 1, 1], [], []>} : vector<2x128xbf16>, vector<128x8xbf16>, vector<2x8xf32> -> vector<2x8xf32>
    %c0_3 = arith.constant 0 : index
    %c0_4 = arith.constant 0 : index
    %3 = vector.load %arg3[%c0_3, %c0_4] : memref<1x8xf32, #tpu.memory_space<vmem>>, vector<1x8xf32>
    %4 = vector.broadcast %3 : vector<1x8xf32> to vector<2x8xf32>
    %5 = arith.addf %2, %4 : vector<2x8xf32>
    %cst_5 = arith.constant 0.000000e+00 : f32
    %6 = vector.broadcast %cst_5 : f32 to vector<2x8xf32>
    %7 = arith.maximumf %5, %6 : vector<2x8xf32>
    %8 = arith.truncf %7 : vector<2x8xf32> to vector<2x8xbf16>
    %c0_6 = arith.constant 0 : index
    %c0_7 = arith.constant 0 : index
    %9 = vector.load %arg4[%c0_6, %c0_7] : memref<2x8xbf16, #tpu.memory_space<vmem>>, vector<2x8xbf16>
    tpu.vector_store %arg4[%c0_6, %c0_7], %8 {strides = array<i32>} : memref<2x8xbf16, #tpu.memory_space<vmem>>, vector<2x8xbf16>,
    return
  }
  func.func @transform_0(%arg0: i32) -> (i32, i32) {
    %c0_i32 = arith.constant 0 : i32
    %c0_i32_0 = arith.constant 0 : i32
    return %arg0, %c0_i32 : i32, i32
  }
  func.func @transform_1(%arg0: i32) -> (i32, i32) {
    %c0_i32 = arith.constant 0 : i32
    %c0_i32_0 = arith.constant 0 : i32
    %c0_i32_1 = arith.constant 0 : i32
    return %c0_i32, %c0_i32_0 : i32, i32
  }
  func.func @transform_2(%arg0: i32) -> (i32, i32) {
    %c0_i32 = arith.constant 0 : i32
    %c0_i32_0 = arith.constant 0 : i32
    %c0_i32_1 = arith.constant 0 : i32
    return %c0_i32, %c0_i32_0 : i32, i32
  }
  func.func @transform_3(%arg0: i32) -> (i32, i32) {
    %c0_i32 = arith.constant 0 : i32
    %c0_i32_0 = arith.constant 0 : i32
    return %arg0, %c0_i32 : i32, i32
  }
}

module attributes {stable_mosaic.version = 11 : i64} {
  func.func @_conv3x3s1_kernel(%arg0: i32, %arg1: memref<1x110x8xbf16, #tpu.memory_space<vmem>>, %arg2: memref<9x8x8xbf16, #tpu.memory_space<vmem>>, %arg3: memref<1x8xf32, #tpu.memory_space<vmem>>, %arg4: memref<1x80x8xbf16, #tpu.memory_space<vmem>>) attributes {dimension_semantics = [#tpu.dimension_semantics<parallel>], iteration_bounds = array<i64: 2>, scalar_prefetch = 0 : i64, scratch_operands = 0 : i64, tpu.core_type = #tpu.core_type<tc>, window_params = [{transform_indices = @transform_0, window_bounds = array<i64: 1, 110, 8>}, {pipeline_mode = #tpu.pipeline_mode<synchronous>, transform_indices = @transform_1, window_bounds = array<i64: 9, 8, 8>}, {pipeline_mode = #tpu.pipeline_mode<synchronous>, transform_indices = @transform_2, window_bounds = array<i64: 1, 8>}, {transform_indices = @transform_3, window_bounds = array<i64: 1, 80, 8>}]} {
    %c0 = arith.constant 0 : index
    %c0_0 = arith.constant 0 : index
    %c0_1 = arith.constant 0 : index
    %0 = vector.load %arg1[%c0, %c0_0, %c0_1] : memref<1x110x8xbf16, #tpu.memory_space<vmem>>, vector<1x80x8xbf16>
    %1 = vector.shape_cast %0 : vector<1x80x8xbf16> to vector<80x8xbf16>
    %c0_2 = arith.constant 0 : index
    %c0_3 = arith.constant 0 : index
    %c0_4 = arith.constant 0 : index
    %2 = vector.load %arg2[%c0_2, %c0_3, %c0_4] : memref<9x8x8xbf16, #tpu.memory_space<vmem>>, vector<1x8x8xbf16>
    %3 = vector.shape_cast %2 : vector<1x8x8xbf16> to vector<8x8xbf16>
    %cst = arith.constant dense<0.000000e+00> : vector<80x8xf32>
    %4 = tpu.matmul %1, %3, %cst {dimension_numbers = #tpu.dot_dimension_numbers<[1], [0], [0], [1], [0, 0, 1, 1], [], []>} : vector<80x8xbf16>, vector<8x8xbf16>, vector<80x8xf32> -> vector<80x8xf32>
    %c0_5 = arith.constant 0 : index
    %c1 = arith.constant 1 : index
    %c0_6 = arith.constant 0 : index
    %5 = vector.load %arg1[%c0_5, %c1, %c0_6] : memref<1x110x8xbf16, #tpu.memory_space<vmem>>, vector<1x80x8xbf16>
    %6 = vector.shape_cast %5 : vector<1x80x8xbf16> to vector<80x8xbf16>
    %c1_7 = arith.constant 1 : index
    %c0_8 = arith.constant 0 : index
    %c0_9 = arith.constant 0 : index
    %7 = vector.load %arg2[%c1_7, %c0_8, %c0_9] : memref<9x8x8xbf16, #tpu.memory_space<vmem>>, vector<1x8x8xbf16>
    %8 = vector.shape_cast %7 : vector<1x8x8xbf16> to vector<8x8xbf16>
    %cst_10 = arith.constant dense<0.000000e+00> : vector<80x8xf32>
    %9 = tpu.matmul %6, %8, %cst_10 {dimension_numbers = #tpu.dot_dimension_numbers<[1], [0], [0], [1], [0, 0, 1, 1], [], []>} : vector<80x8xbf16>, vector<8x8xbf16>, vector<80x8xf32> -> vector<80x8xf32>
    %10 = arith.addf %4, %9 : vector<80x8xf32>
    %c0_11 = arith.constant 0 : index
    %c2 = arith.constant 2 : index
    %c0_12 = arith.constant 0 : index
    %11 = vector.load %arg1[%c0_11, %c2, %c0_12] : memref<1x110x8xbf16, #tpu.memory_space<vmem>>, vector<1x80x8xbf16>
    %12 = vector.shape_cast %11 : vector<1x80x8xbf16> to vector<80x8xbf16>
    %c2_13 = arith.constant 2 : index
    %c0_14 = arith.constant 0 : index
    %c0_15 = arith.constant 0 : index
    %13 = vector.load %arg2[%c2_13, %c0_14, %c0_15] : memref<9x8x8xbf16, #tpu.memory_space<vmem>>, vector<1x8x8xbf16>
    %14 = vector.shape_cast %13 : vector<1x8x8xbf16> to vector<8x8xbf16>
    %cst_16 = arith.constant dense<0.000000e+00> : vector<80x8xf32>
    %15 = tpu.matmul %12, %14, %cst_16 {dimension_numbers = #tpu.dot_dimension_numbers<[1], [0], [0], [1], [0, 0, 1, 1], [], []>} : vector<80x8xbf16>, vector<8x8xbf16>, vector<80x8xf32> -> vector<80x8xf32>
    %16 = arith.addf %10, %15 : vector<80x8xf32>
    %c0_17 = arith.constant 0 : index
    %c10 = arith.constant 10 : index
    %c0_18 = arith.constant 0 : index
    %17 = vector.load %arg1[%c0_17, %c10, %c0_18] : memref<1x110x8xbf16, #tpu.memory_space<vmem>>, vector<1x80x8xbf16>
    %18 = vector.shape_cast %17 : vector<1x80x8xbf16> to vector<80x8xbf16>
    %c3 = arith.constant 3 : index
    %c0_19 = arith.constant 0 : index
    %c0_20 = arith.constant 0 : index
    %19 = vector.load %arg2[%c3, %c0_19, %c0_20] : memref<9x8x8xbf16, #tpu.memory_space<vmem>>, vector<1x8x8xbf16>
    %20 = vector.shape_cast %19 : vector<1x8x8xbf16> to vector<8x8xbf16>
    %cst_21 = arith.constant dense<0.000000e+00> : vector<80x8xf32>
    %21 = tpu.matmul %18, %20, %cst_21 {dimension_numbers = #tpu.dot_dimension_numbers<[1], [0], [0], [1], [0, 0, 1, 1], [], []>} : vector<80x8xbf16>, vector<8x8xbf16>, vector<80x8xf32> -> vector<80x8xf32>
    %22 = arith.addf %16, %21 : vector<80x8xf32>
    %c0_22 = arith.constant 0 : index
    %c11 = arith.constant 11 : index
    %c0_23 = arith.constant 0 : index
    %23 = vector.load %arg1[%c0_22, %c11, %c0_23] : memref<1x110x8xbf16, #tpu.memory_space<vmem>>, vector<1x80x8xbf16>
    %24 = vector.shape_cast %23 : vector<1x80x8xbf16> to vector<80x8xbf16>
    %c4 = arith.constant 4 : index
    %c0_24 = arith.constant 0 : index
    %c0_25 = arith.constant 0 : index
    %25 = vector.load %arg2[%c4, %c0_24, %c0_25] : memref<9x8x8xbf16, #tpu.memory_space<vmem>>, vector<1x8x8xbf16>
    %26 = vector.shape_cast %25 : vector<1x8x8xbf16> to vector<8x8xbf16>
    %cst_26 = arith.constant dense<0.000000e+00> : vector<80x8xf32>
    %27 = tpu.matmul %24, %26, %cst_26 {dimension_numbers = #tpu.dot_dimension_numbers<[1], [0], [0], [1], [0, 0, 1, 1], [], []>} : vector<80x8xbf16>, vector<8x8xbf16>, vector<80x8xf32> -> vector<80x8xf32>
    %28 = arith.addf %22, %27 : vector<80x8xf32>
    %c0_27 = arith.constant 0 : index
    %c12 = arith.constant 12 : index
    %c0_28 = arith.constant 0 : index
    %29 = vector.load %arg1[%c0_27, %c12, %c0_28] : memref<1x110x8xbf16, #tpu.memory_space<vmem>>, vector<1x80x8xbf16>
    %30 = vector.shape_cast %29 : vector<1x80x8xbf16> to vector<80x8xbf16>
    %c5 = arith.constant 5 : index
    %c0_29 = arith.constant 0 : index
    %c0_30 = arith.constant 0 : index
    %31 = vector.load %arg2[%c5, %c0_29, %c0_30] : memref<9x8x8xbf16, #tpu.memory_space<vmem>>, vector<1x8x8xbf16>
    %32 = vector.shape_cast %31 : vector<1x8x8xbf16> to vector<8x8xbf16>
    %cst_31 = arith.constant dense<0.000000e+00> : vector<80x8xf32>
    %33 = tpu.matmul %30, %32, %cst_31 {dimension_numbers = #tpu.dot_dimension_numbers<[1], [0], [0], [1], [0, 0, 1, 1], [], []>} : vector<80x8xbf16>, vector<8x8xbf16>, vector<80x8xf32> -> vector<80x8xf32>
    %34 = arith.addf %28, %33 : vector<80x8xf32>
    %c0_32 = arith.constant 0 : index
    %c20 = arith.constant 20 : index
    %c0_33 = arith.constant 0 : index
    %35 = vector.load %arg1[%c0_32, %c20, %c0_33] : memref<1x110x8xbf16, #tpu.memory_space<vmem>>, vector<1x80x8xbf16>
    %36 = vector.shape_cast %35 : vector<1x80x8xbf16> to vector<80x8xbf16>
    %c6 = arith.constant 6 : index
    %c0_34 = arith.constant 0 : index
    %c0_35 = arith.constant 0 : index
    %37 = vector.load %arg2[%c6, %c0_34, %c0_35] : memref<9x8x8xbf16, #tpu.memory_space<vmem>>, vector<1x8x8xbf16>
    %38 = vector.shape_cast %37 : vector<1x8x8xbf16> to vector<8x8xbf16>
    %cst_36 = arith.constant dense<0.000000e+00> : vector<80x8xf32>
    %39 = tpu.matmul %36, %38, %cst_36 {dimension_numbers = #tpu.dot_dimension_numbers<[1], [0], [0], [1], [0, 0, 1, 1], [], []>} : vector<80x8xbf16>, vector<8x8xbf16>, vector<80x8xf32> -> vector<80x8xf32>
    %40 = arith.addf %34, %39 : vector<80x8xf32>
    %c0_37 = arith.constant 0 : index
    %c21 = arith.constant 21 : index
    %c0_38 = arith.constant 0 : index
    %41 = vector.load %arg1[%c0_37, %c21, %c0_38] : memref<1x110x8xbf16, #tpu.memory_space<vmem>>, vector<1x80x8xbf16>
    %42 = vector.shape_cast %41 : vector<1x80x8xbf16> to vector<80x8xbf16>
    %c7 = arith.constant 7 : index
    %c0_39 = arith.constant 0 : index
    %c0_40 = arith.constant 0 : index
    %43 = vector.load %arg2[%c7, %c0_39, %c0_40] : memref<9x8x8xbf16, #tpu.memory_space<vmem>>, vector<1x8x8xbf16>
    %44 = vector.shape_cast %43 : vector<1x8x8xbf16> to vector<8x8xbf16>
    %cst_41 = arith.constant dense<0.000000e+00> : vector<80x8xf32>
    %45 = tpu.matmul %42, %44, %cst_41 {dimension_numbers = #tpu.dot_dimension_numbers<[1], [0], [0], [1], [0, 0, 1, 1], [], []>} : vector<80x8xbf16>, vector<8x8xbf16>, vector<80x8xf32> -> vector<80x8xf32>
    %46 = arith.addf %40, %45 : vector<80x8xf32>
    %c0_42 = arith.constant 0 : index
    %c22 = arith.constant 22 : index
    %c0_43 = arith.constant 0 : index
    %47 = vector.load %arg1[%c0_42, %c22, %c0_43] : memref<1x110x8xbf16, #tpu.memory_space<vmem>>, vector<1x80x8xbf16>
    %48 = vector.shape_cast %47 : vector<1x80x8xbf16> to vector<80x8xbf16>
    %c8 = arith.constant 8 : index
    %c0_44 = arith.constant 0 : index
    %c0_45 = arith.constant 0 : index
    %49 = vector.load %arg2[%c8, %c0_44, %c0_45] : memref<9x8x8xbf16, #tpu.memory_space<vmem>>, vector<1x8x8xbf16>
    %50 = vector.shape_cast %49 : vector<1x8x8xbf16> to vector<8x8xbf16>
    %cst_46 = arith.constant dense<0.000000e+00> : vector<80x8xf32>
    %51 = tpu.matmul %48, %50, %cst_46 {dimension_numbers = #tpu.dot_dimension_numbers<[1], [0], [0], [1], [0, 0, 1, 1], [], []>} : vector<80x8xbf16>, vector<8x8xbf16>, vector<80x8xf32> -> vector<80x8xf32>
    %52 = arith.addf %46, %51 : vector<80x8xf32>
    %c0_47 = arith.constant 0 : index
    %c0_48 = arith.constant 0 : index
    %53 = vector.load %arg3[%c0_47, %c0_48] : memref<1x8xf32, #tpu.memory_space<vmem>>, vector<1x8xf32>
    %54 = vector.broadcast %53 : vector<1x8xf32> to vector<80x8xf32>
    %55 = arith.addf %52, %54 : vector<80x8xf32>
    %cst_49 = arith.constant 0.000000e+00 : f32
    %56 = vector.broadcast %cst_49 : f32 to vector<80x8xf32>
    %57 = arith.maximumf %55, %56 : vector<80x8xf32>
    %58 = arith.truncf %57 : vector<80x8xf32> to vector<80x8xbf16>
    %c0_50 = arith.constant 0 : index
    %c0_51 = arith.constant 0 : index
    %c0_52 = arith.constant 0 : index
    %59 = vector.load %arg4[%c0_50, %c0_51, %c0_52] : memref<1x80x8xbf16, #tpu.memory_space<vmem>>, vector<1x80x8xbf16>
    %60 = vector.shape_cast %59 : vector<1x80x8xbf16> to vector<80x8xbf16>
    %61 = vector.shape_cast %58 : vector<80x8xbf16> to vector<1x80x8xbf16>
    tpu.vector_store %arg4[%c0_50, %c0_51, %c0_52], %61 {strides = array<i32>} : memref<1x80x8xbf16, #tpu.memory_space<vmem>>, vector<1x80x8xbf16>,
    return
  }
  func.func @transform_0(%arg0: i32) -> (i32, i32, i32) {
    %c0_i32 = arith.constant 0 : i32
    %c0_i32_0 = arith.constant 0 : i32
    %c0_i32_1 = arith.constant 0 : i32
    return %arg0, %c0_i32, %c0_i32_0 : i32, i32, i32
  }
  func.func @transform_1(%arg0: i32) -> (i32, i32, i32) {
    %c0_i32 = arith.constant 0 : i32
    %c0_i32_0 = arith.constant 0 : i32
    %c0_i32_1 = arith.constant 0 : i32
    %c0_i32_2 = arith.constant 0 : i32
    return %c0_i32, %c0_i32_0, %c0_i32_1 : i32, i32, i32
  }
  func.func @transform_2(%arg0: i32) -> (i32, i32) {
    %c0_i32 = arith.constant 0 : i32
    %c0_i32_0 = arith.constant 0 : i32
    %c0_i32_1 = arith.constant 0 : i32
    return %c0_i32, %c0_i32_0 : i32, i32
  }
  func.func @transform_3(%arg0: i32) -> (i32, i32, i32) {
    %c0_i32 = arith.constant 0 : i32
    %c0_i32_0 = arith.constant 0 : i32
    %c0_i32_1 = arith.constant 0 : i32
    return %arg0, %c0_i32, %c0_i32_0 : i32, i32, i32
  }
}

module attributes {stable_mosaic.version = 11 : i64} {
  func.func @_fcn_head_kernel(%arg0: i32, %arg1: memref<1x110x8xbf16, #tpu.memory_space<vmem>>, %arg2: memref<9x8x8xbf16, #tpu.memory_space<vmem>>, %arg3: memref<1x8xf32, #tpu.memory_space<vmem>>, %arg4: memref<8x2xbf16, #tpu.memory_space<vmem>>, %arg5: memref<1x2xf32, #tpu.memory_space<vmem>>, %arg6: memref<1x80x2xf32, #tpu.memory_space<vmem>>) attributes {dimension_semantics = [#tpu.dimension_semantics<parallel>], iteration_bounds = array<i64: 2>, scalar_prefetch = 0 : i64, scratch_operands = 0 : i64, tpu.core_type = #tpu.core_type<tc>, window_params = [{transform_indices = @transform_0, window_bounds = array<i64: 1, 110, 8>}, {pipeline_mode = #tpu.pipeline_mode<synchronous>, transform_indices = @transform_1, window_bounds = array<i64: 9, 8, 8>}, {pipeline_mode = #tpu.pipeline_mode<synchronous>, transform_indices = @transform_2, window_bounds = array<i64: 1, 8>}, {pipeline_mode = #tpu.pipeline_mode<synchronous>, transform_indices = @transform_3, window_bounds = array<i64: 8, 2>}, {pipeline_mode = #tpu.pipeline_mode<synchronous>, transform_indices = @transform_4, window_bounds = array<i64: 1, 2>}, {transform_indices = @transform_5, window_bounds = array<i64: 1, 80, 2>}]} {
    %c0 = arith.constant 0 : index
    %c0_0 = arith.constant 0 : index
    %c0_1 = arith.constant 0 : index
    %0 = vector.load %arg1[%c0, %c0_0, %c0_1] : memref<1x110x8xbf16, #tpu.memory_space<vmem>>, vector<1x80x8xbf16>
    %1 = vector.shape_cast %0 : vector<1x80x8xbf16> to vector<80x8xbf16>
    %c0_2 = arith.constant 0 : index
    %c0_3 = arith.constant 0 : index
    %c0_4 = arith.constant 0 : index
    %2 = vector.load %arg2[%c0_2, %c0_3, %c0_4] : memref<9x8x8xbf16, #tpu.memory_space<vmem>>, vector<1x8x8xbf16>
    %3 = vector.shape_cast %2 : vector<1x8x8xbf16> to vector<8x8xbf16>
    %cst = arith.constant dense<0.000000e+00> : vector<80x8xf32>
    %4 = tpu.matmul %1, %3, %cst {dimension_numbers = #tpu.dot_dimension_numbers<[1], [0], [0], [1], [0, 0, 1, 1], [], []>} : vector<80x8xbf16>, vector<8x8xbf16>, vector<80x8xf32> -> vector<80x8xf32>
    %c0_5 = arith.constant 0 : index
    %c1 = arith.constant 1 : index
    %c0_6 = arith.constant 0 : index
    %5 = vector.load %arg1[%c0_5, %c1, %c0_6] : memref<1x110x8xbf16, #tpu.memory_space<vmem>>, vector<1x80x8xbf16>
    %6 = vector.shape_cast %5 : vector<1x80x8xbf16> to vector<80x8xbf16>
    %c1_7 = arith.constant 1 : index
    %c0_8 = arith.constant 0 : index
    %c0_9 = arith.constant 0 : index
    %7 = vector.load %arg2[%c1_7, %c0_8, %c0_9] : memref<9x8x8xbf16, #tpu.memory_space<vmem>>, vector<1x8x8xbf16>
    %8 = vector.shape_cast %7 : vector<1x8x8xbf16> to vector<8x8xbf16>
    %cst_10 = arith.constant dense<0.000000e+00> : vector<80x8xf32>
    %9 = tpu.matmul %6, %8, %cst_10 {dimension_numbers = #tpu.dot_dimension_numbers<[1], [0], [0], [1], [0, 0, 1, 1], [], []>} : vector<80x8xbf16>, vector<8x8xbf16>, vector<80x8xf32> -> vector<80x8xf32>
    %10 = arith.addf %4, %9 : vector<80x8xf32>
    %c0_11 = arith.constant 0 : index
    %c2 = arith.constant 2 : index
    %c0_12 = arith.constant 0 : index
    %11 = vector.load %arg1[%c0_11, %c2, %c0_12] : memref<1x110x8xbf16, #tpu.memory_space<vmem>>, vector<1x80x8xbf16>
    %12 = vector.shape_cast %11 : vector<1x80x8xbf16> to vector<80x8xbf16>
    %c2_13 = arith.constant 2 : index
    %c0_14 = arith.constant 0 : index
    %c0_15 = arith.constant 0 : index
    %13 = vector.load %arg2[%c2_13, %c0_14, %c0_15] : memref<9x8x8xbf16, #tpu.memory_space<vmem>>, vector<1x8x8xbf16>
    %14 = vector.shape_cast %13 : vector<1x8x8xbf16> to vector<8x8xbf16>
    %cst_16 = arith.constant dense<0.000000e+00> : vector<80x8xf32>
    %15 = tpu.matmul %12, %14, %cst_16 {dimension_numbers = #tpu.dot_dimension_numbers<[1], [0], [0], [1], [0, 0, 1, 1], [], []>} : vector<80x8xbf16>, vector<8x8xbf16>, vector<80x8xf32> -> vector<80x8xf32>
    %16 = arith.addf %10, %15 : vector<80x8xf32>
    %c0_17 = arith.constant 0 : index
    %c10 = arith.constant 10 : index
    %c0_18 = arith.constant 0 : index
    %17 = vector.load %arg1[%c0_17, %c10, %c0_18] : memref<1x110x8xbf16, #tpu.memory_space<vmem>>, vector<1x80x8xbf16>
    %18 = vector.shape_cast %17 : vector<1x80x8xbf16> to vector<80x8xbf16>
    %c3 = arith.constant 3 : index
    %c0_19 = arith.constant 0 : index
    %c0_20 = arith.constant 0 : index
    %19 = vector.load %arg2[%c3, %c0_19, %c0_20] : memref<9x8x8xbf16, #tpu.memory_space<vmem>>, vector<1x8x8xbf16>
    %20 = vector.shape_cast %19 : vector<1x8x8xbf16> to vector<8x8xbf16>
    %cst_21 = arith.constant dense<0.000000e+00> : vector<80x8xf32>
    %21 = tpu.matmul %18, %20, %cst_21 {dimension_numbers = #tpu.dot_dimension_numbers<[1], [0], [0], [1], [0, 0, 1, 1], [], []>} : vector<80x8xbf16>, vector<8x8xbf16>, vector<80x8xf32> -> vector<80x8xf32>
    %22 = arith.addf %16, %21 : vector<80x8xf32>
    %c0_22 = arith.constant 0 : index
    %c11 = arith.constant 11 : index
    %c0_23 = arith.constant 0 : index
    %23 = vector.load %arg1[%c0_22, %c11, %c0_23] : memref<1x110x8xbf16, #tpu.memory_space<vmem>>, vector<1x80x8xbf16>
    %24 = vector.shape_cast %23 : vector<1x80x8xbf16> to vector<80x8xbf16>
    %c4 = arith.constant 4 : index
    %c0_24 = arith.constant 0 : index
    %c0_25 = arith.constant 0 : index
    %25 = vector.load %arg2[%c4, %c0_24, %c0_25] : memref<9x8x8xbf16, #tpu.memory_space<vmem>>, vector<1x8x8xbf16>
    %26 = vector.shape_cast %25 : vector<1x8x8xbf16> to vector<8x8xbf16>
    %cst_26 = arith.constant dense<0.000000e+00> : vector<80x8xf32>
    %27 = tpu.matmul %24, %26, %cst_26 {dimension_numbers = #tpu.dot_dimension_numbers<[1], [0], [0], [1], [0, 0, 1, 1], [], []>} : vector<80x8xbf16>, vector<8x8xbf16>, vector<80x8xf32> -> vector<80x8xf32>
    %28 = arith.addf %22, %27 : vector<80x8xf32>
    %c0_27 = arith.constant 0 : index
    %c12 = arith.constant 12 : index
    %c0_28 = arith.constant 0 : index
    %29 = vector.load %arg1[%c0_27, %c12, %c0_28] : memref<1x110x8xbf16, #tpu.memory_space<vmem>>, vector<1x80x8xbf16>
    %30 = vector.shape_cast %29 : vector<1x80x8xbf16> to vector<80x8xbf16>
    %c5 = arith.constant 5 : index
    %c0_29 = arith.constant 0 : index
    %c0_30 = arith.constant 0 : index
    %31 = vector.load %arg2[%c5, %c0_29, %c0_30] : memref<9x8x8xbf16, #tpu.memory_space<vmem>>, vector<1x8x8xbf16>
    %32 = vector.shape_cast %31 : vector<1x8x8xbf16> to vector<8x8xbf16>
    %cst_31 = arith.constant dense<0.000000e+00> : vector<80x8xf32>
    %33 = tpu.matmul %30, %32, %cst_31 {dimension_numbers = #tpu.dot_dimension_numbers<[1], [0], [0], [1], [0, 0, 1, 1], [], []>} : vector<80x8xbf16>, vector<8x8xbf16>, vector<80x8xf32> -> vector<80x8xf32>
    %34 = arith.addf %28, %33 : vector<80x8xf32>
    %c0_32 = arith.constant 0 : index
    %c20 = arith.constant 20 : index
    %c0_33 = arith.constant 0 : index
    %35 = vector.load %arg1[%c0_32, %c20, %c0_33] : memref<1x110x8xbf16, #tpu.memory_space<vmem>>, vector<1x80x8xbf16>
    %36 = vector.shape_cast %35 : vector<1x80x8xbf16> to vector<80x8xbf16>
    %c6 = arith.constant 6 : index
    %c0_34 = arith.constant 0 : index
    %c0_35 = arith.constant 0 : index
    %37 = vector.load %arg2[%c6, %c0_34, %c0_35] : memref<9x8x8xbf16, #tpu.memory_space<vmem>>, vector<1x8x8xbf16>
    %38 = vector.shape_cast %37 : vector<1x8x8xbf16> to vector<8x8xbf16>
    %cst_36 = arith.constant dense<0.000000e+00> : vector<80x8xf32>
    %39 = tpu.matmul %36, %38, %cst_36 {dimension_numbers = #tpu.dot_dimension_numbers<[1], [0], [0], [1], [0, 0, 1, 1], [], []>} : vector<80x8xbf16>, vector<8x8xbf16>, vector<80x8xf32> -> vector<80x8xf32>
    %40 = arith.addf %34, %39 : vector<80x8xf32>
    %c0_37 = arith.constant 0 : index
    %c21 = arith.constant 21 : index
    %c0_38 = arith.constant 0 : index
    %41 = vector.load %arg1[%c0_37, %c21, %c0_38] : memref<1x110x8xbf16, #tpu.memory_space<vmem>>, vector<1x80x8xbf16>
    %42 = vector.shape_cast %41 : vector<1x80x8xbf16> to vector<80x8xbf16>
    %c7 = arith.constant 7 : index
    %c0_39 = arith.constant 0 : index
    %c0_40 = arith.constant 0 : index
    %43 = vector.load %arg2[%c7, %c0_39, %c0_40] : memref<9x8x8xbf16, #tpu.memory_space<vmem>>, vector<1x8x8xbf16>
    %44 = vector.shape_cast %43 : vector<1x8x8xbf16> to vector<8x8xbf16>
    %cst_41 = arith.constant dense<0.000000e+00> : vector<80x8xf32>
    %45 = tpu.matmul %42, %44, %cst_41 {dimension_numbers = #tpu.dot_dimension_numbers<[1], [0], [0], [1], [0, 0, 1, 1], [], []>} : vector<80x8xbf16>, vector<8x8xbf16>, vector<80x8xf32> -> vector<80x8xf32>
    %46 = arith.addf %40, %45 : vector<80x8xf32>
    %c0_42 = arith.constant 0 : index
    %c22 = arith.constant 22 : index
    %c0_43 = arith.constant 0 : index
    %47 = vector.load %arg1[%c0_42, %c22, %c0_43] : memref<1x110x8xbf16, #tpu.memory_space<vmem>>, vector<1x80x8xbf16>
    %48 = vector.shape_cast %47 : vector<1x80x8xbf16> to vector<80x8xbf16>
    %c8 = arith.constant 8 : index
    %c0_44 = arith.constant 0 : index
    %c0_45 = arith.constant 0 : index
    %49 = vector.load %arg2[%c8, %c0_44, %c0_45] : memref<9x8x8xbf16, #tpu.memory_space<vmem>>, vector<1x8x8xbf16>
    %50 = vector.shape_cast %49 : vector<1x8x8xbf16> to vector<8x8xbf16>
    %cst_46 = arith.constant dense<0.000000e+00> : vector<80x8xf32>
    %51 = tpu.matmul %48, %50, %cst_46 {dimension_numbers = #tpu.dot_dimension_numbers<[1], [0], [0], [1], [0, 0, 1, 1], [], []>} : vector<80x8xbf16>, vector<8x8xbf16>, vector<80x8xf32> -> vector<80x8xf32>
    %52 = arith.addf %46, %51 : vector<80x8xf32>
    %c0_47 = arith.constant 0 : index
    %c0_48 = arith.constant 0 : index
    %53 = vector.load %arg3[%c0_47, %c0_48] : memref<1x8xf32, #tpu.memory_space<vmem>>, vector<1x8xf32>
    %54 = vector.broadcast %53 : vector<1x8xf32> to vector<80x8xf32>
    %55 = arith.addf %52, %54 : vector<80x8xf32>
    %cst_49 = arith.constant 0.000000e+00 : f32
    %56 = vector.broadcast %cst_49 : f32 to vector<80x8xf32>
    %57 = arith.maximumf %55, %56 : vector<80x8xf32>
    %58 = arith.truncf %57 : vector<80x8xf32> to vector<80x8xbf16>
    %c0_50 = arith.constant 0 : index
    %c0_51 = arith.constant 0 : index
    %59 = vector.load %arg4[%c0_50, %c0_51] : memref<8x2xbf16, #tpu.memory_space<vmem>>, vector<8x2xbf16>
    %cst_52 = arith.constant dense<0.000000e+00> : vector<80x2xf32>
    %60 = tpu.matmul %58, %59, %cst_52 {dimension_numbers = #tpu.dot_dimension_numbers<[1], [0], [0], [1], [0, 0, 1, 1], [], []>} : vector<80x8xbf16>, vector<8x2xbf16>, vector<80x2xf32> -> vector<80x2xf32>
    %c0_53 = arith.constant 0 : index
    %c0_54 = arith.constant 0 : index
    %61 = vector.load %arg5[%c0_53, %c0_54] : memref<1x2xf32, #tpu.memory_space<vmem>>, vector<1x2xf32>
    %62 = vector.broadcast %61 : vector<1x2xf32> to vector<80x2xf32>
    %63 = arith.addf %60, %62 : vector<80x2xf32>
    %c0_55 = arith.constant 0 : index
    %c0_56 = arith.constant 0 : index
    %c0_57 = arith.constant 0 : index
    %64 = vector.load %arg6[%c0_55, %c0_56, %c0_57] : memref<1x80x2xf32, #tpu.memory_space<vmem>>, vector<1x80x2xf32>
    %65 = vector.shape_cast %64 : vector<1x80x2xf32> to vector<80x2xf32>
    %66 = vector.shape_cast %63 : vector<80x2xf32> to vector<1x80x2xf32>
    tpu.vector_store %arg6[%c0_55, %c0_56, %c0_57], %66 {strides = array<i32>} : memref<1x80x2xf32, #tpu.memory_space<vmem>>, vector<1x80x2xf32>,
    return
  }
  func.func @transform_0(%arg0: i32) -> (i32, i32, i32) {
    %c0_i32 = arith.constant 0 : i32
    %c0_i32_0 = arith.constant 0 : i32
    %c0_i32_1 = arith.constant 0 : i32
    return %arg0, %c0_i32, %c0_i32_0 : i32, i32, i32
  }
  func.func @transform_1(%arg0: i32) -> (i32, i32, i32) {
    %c0_i32 = arith.constant 0 : i32
    %c0_i32_0 = arith.constant 0 : i32
    %c0_i32_1 = arith.constant 0 : i32
    %c0_i32_2 = arith.constant 0 : i32
    return %c0_i32, %c0_i32_0, %c0_i32_1 : i32, i32, i32
  }
  func.func @transform_2(%arg0: i32) -> (i32, i32) {
    %c0_i32 = arith.constant 0 : i32
    %c0_i32_0 = arith.constant 0 : i32
    %c0_i32_1 = arith.constant 0 : i32
    return %c0_i32, %c0_i32_0 : i32, i32
  }
  func.func @transform_3(%arg0: i32) -> (i32, i32) {
    %c0_i32 = arith.constant 0 : i32
    %c0_i32_0 = arith.constant 0 : i32
    %c0_i32_1 = arith.constant 0 : i32
    return %c0_i32, %c0_i32_0 : i32, i32
  }
  func.func @transform_4(%arg0: i32) -> (i32, i32) {
    %c0_i32 = arith.constant 0 : i32
    %c0_i32_0 = arith.constant 0 : i32
    %c0_i32_1 = arith.constant 0 : i32
    return %c0_i32, %c0_i32_0 : i32, i32
  }
  func.func @transform_5(%arg0: i32) -> (i32, i32, i32) {
    %c0_i32 = arith.constant 0 : i32
    %c0_i32_0 = arith.constant 0 : i32
    %c0_i32_1 = arith.constant 0 : i32
    return %arg0, %c0_i32, %c0_i32_0 : i32, i32, i32
  }
}

</mosaic_0001>

<llo_original>
// kernel: change_detection_forward.14
$region0: #{change_detection_forward.14}
  #allocation0 [shape = 'u32[]', space=smem, size = 0x4, offset = 0x4, fixed_abs, tag = 'smem constant byte address 0x4 - core index']
  #allocation1 [shape = 'u32[144,128]{1,0:T(1,128)}', space=vmem, size = 0x12000, scoped, tag = 'internal scratch']
  %s0 = inlined_call_operand.vmem [shape: bf16[128,16], index: 0, kind: input, shape index: {}]
  %s1 = inlined_call_operand.vmem [shape: bf16[16,8], index: 1, kind: input, shape index: {}]
  %s2 = inlined_call_operand.vmem [shape: f32[1,8], index: 2, kind: input, shape index: {}]
  %s3 = inlined_call_operand.vmem [shape: bf16[128,8], index: 3, kind: output, shape index: {}]
  %s4 = sld [smem:[#allocation0]]
  $region22: #{change_detection_forward.14} parent=0
    _
  %s6 = ssub.s32 1, %s4
  %s7 = scalar_select 0, %s6, %s4
  // Predicated region
  $region2: #{change_detection_forward.14} parent=0 // pred_check
    _
  $region3: #{change_detection_forward.14} parent=0 // pred_check_branch
    %9 = sbr.rel (0) target = $region5
  $region4: #{change_detection_forward.14} parent=0 // pred_region
    _
  $region5: #{change_detection_forward.14} parent=0 // pred_fallthru
    _
  // Predicated region
  $region6: #{change_detection_forward.14} parent=0 // pred_check
    _
  $region7: #{change_detection_forward.14} parent=0 // pred_check_branch
    %11 = sbr.rel (0) target = $region9
  $region8: #{change_detection_forward.14} parent=0 // pred_region
    _
  $region9: #{change_detection_forward.14} parent=0 // pred_fallthru
    _
  // Predicated region
  $region10: #{change_detection_forward.14} parent=0 // pred_check
    _
  $region11: #{change_detection_forward.14} parent=0 // pred_check_branch
    %13 = sbr.rel (0) target = $region13
  $region12: #{change_detection_forward.14} parent=0 // pred_region
    _
  $region13: #{change_detection_forward.14} parent=0 // pred_fallthru
    _
  %v15 = vld [vmem:[%s0] sm:$0xf]
  %v16 = vld [vmem:[%s0 + $0x4] sm:$0xf]
  %v17 = vld [vmem:[%s0 + $0x8] sm:$0xf]
  %v18 = vld [vmem:[%s0 + $0xc] sm:$0xf]
  %v19 = vld [vmem:[%s0 + $0x10] sm:$0xf]
  %v20 = vld [vmem:[%s0 + $0x14] sm:$0xf]
  %v21 = vld [vmem:[%s0 + $0x18] sm:$0xf]
  %v22 = vld [vmem:[%s0 + $0x1c] sm:$0xf]
  %v23 = vld [vmem:[%s0 + $0x20] sm:$0xf]
  %v24 = vld [vmem:[%s0 + $0x24] sm:$0xf]
  %v25 = vld [vmem:[%s0 + $0x28] sm:$0xf]
  %v26 = vld [vmem:[%s0 + $0x2c] sm:$0xf]
  %v27 = vld [vmem:[%s0 + $0x30] sm:$0xf]
  %v28 = vld [vmem:[%s0 + $0x34] sm:$0xf]
  %v29 = vld [vmem:[%s0 + $0x38] sm:$0xf]
  %v30 = vld [vmem:[%s0 + $0x3c] sm:$0xf]
  %v31 = vld [vmem:[%s1] sm:$0xf]
  %v32 = vld [vmem:[%s1 + $0x4] sm:$0xf]
  %v33 = vld [vmem:[%s2] sm:$0x1]
  %v35 = vlaneseq
  %v36 = vshrl.u32 %v35, 7
  %v37 = vsub.s32 0, %v36
  %v38 = vrot.slane %v33, %v37
  %v56 = vunpack.c.l.b16 %v15
  %v57 = vunpack.c.l.b16 %v16
  %v58 = vunpack.c.l.b16 %v17
  %v59 = vunpack.c.l.b16 %v18
  %v60 = vunpack.c.l.b16 %v19
  %v61 = vunpack.c.l.b16 %v20
  %v62 = vunpack.c.l.b16 %v21
  %v63 = vunpack.c.l.b16 %v22
  %v64 = vunpack.c.l.b16 %v23
  %v65 = vunpack.c.l.b16 %v24
  %v66 = vunpack.c.l.b16 %v25
  %v67 = vunpack.c.l.b16 %v26
  %v68 = vunpack.c.l.b16 %v27
  %v69 = vunpack.c.l.b16 %v28
  %v70 = vunpack.c.l.b16 %v29
  %v71 = vunpack.c.l.b16 %v30
  %v72 = vpack.c.b16 %v57, %v56
  %v73 = vpack.c.b16 %v59, %v58
  %v74 = vpack.c.b16 %v61, %v60
  %v75 = vpack.c.b16 %v63, %v62
  %v76 = vpack.c.b16 %v65, %v64
  %v77 = vpack.c.b16 %v67, %v66
  %v78 = vpack.c.b16 %v69, %v68
  %v79 = vpack.c.b16 %v71, %v70
  %v82 = vunpack.c.l.b16 %v31
  %v83 = vunpack.c.l.b16 %v32
  %v84 = vpack.c.b16 %v83, %v82
  %vm86 = vcmask 130048
  %v88 = vsel %vm86, %v72, 0
  %v91 = vsel %vm86, %v73, 0
  %v94 = vsel %vm86, %v74, 0
  %v97 = vsel %vm86, %v75, 0
  %v100 = vsel %vm86, %v76, 0
  %v103 = vsel %vm86, %v77, 0
  %v106 = vsel %vm86, %v78, 0
  %v109 = vsel %vm86, %v79, 0
  %111 = vmatprep.subr.bf16.mxu0 0
  %112 = vmatpush1.bf16.msra.mxu0 0
  %113 = vmatprep.subr.bf16.mxu0 0
  %114 = vmatpush1.bf16.msra.mxu0 0
  %115 = vmatprep.subr.bf16.mxu0 0
  %116 = vmatpush1.bf16.msra.mxu0 0
  %117 = vmatprep.subr.bf16.mxu0 0
  %118 = vmatpush1.bf16.msra.mxu0 0
  %119 = vmatprep.subr.bf16.mxu0 0
  %120 = vmatpush1.bf16.msra.mxu0 0
  %121 = vmatprep.subr.bf16.mxu0 0
  %122 = vmatpush1.bf16.msra.mxu0 0
  %123 = vmatprep.subr.bf16.mxu0 0
  %124 = vmatpush1.bf16.msra.mxu0 0
  %125 = vmatprep.subr.bf16.mxu0 0
  %126 = vmatpush1.bf16.msra.mxu0 %v84
  %127 = vmatprep.subr.bf16.mxu0 0
  %128 = vmatpush2.bf16.msra.mxu0 0
  %129 = vmatprep.subr.bf16.mxu0 0
  %130 = vmatpush2.bf16.msra.mxu0 0
  %131 = vmatprep.subr.bf16.mxu0 0
  %132 = vmatpush2.bf16.msra.mxu0 0
  %133 = vmatprep.subr.bf16.mxu0 0
  %134 = vmatpush2.bf16.msra.mxu0 0
  %135 = vmatprep.subr.bf16.mxu0 0
  %136 = vmatpush2.bf16.msra.mxu0 0
  %137 = vmatprep.subr.bf16.mxu0 0
  %138 = vmatpush2.bf16.msra.mxu0 0
  %139 = vmatprep.subr.bf16.mxu0 0
  %140 = vmatpush2.bf16.msra.mxu0 0
  %141 = vmatprep.subr.bf16.mxu0 0
  %142 = vmatpush2.bf16.msra.mxu0 0
  %143 = vmatprep.mubr.bf16.mxu0 0
  %144 = vmatmul.mubr.bf16.gmra.mxu0 %v88
  %v145 = vpop.f32.mrf.mxu0
  %v146 = vadd.f32 %v38, %v145
  %v147 = vpop.f32.mrf.mxu0
  %v148 = vpop.f32.mrf.mxu0
  %v149 = vadd.f32 %v38, %v148
  %v150 = vpop.f32.mrf.mxu0
  %151 = vmatprep.mubr.bf16.mxu0 0
  %152 = vmatmul.mubr.bf16.gmra.mxu0 %v91
  %v153 = vpop.f32.mrf.mxu0
  %v154 = vadd.f32 %v38, %v153
  %v155 = vpop.f32.mrf.mxu0
  %v156 = vpop.f32.mrf.mxu0
  %v157 = vadd.f32 %v38, %v156
  %v158 = vpop.f32.mrf.mxu0
  %159 = vmatprep.mubr.bf16.mxu0 0
  %160 = vmatmul.mubr.bf16.gmra.mxu0 %v94
  %v161 = vpop.f32.mrf.mxu0
  %v162 = vadd.f32 %v38, %v161
  %v163 = vpop.f32.mrf.mxu0
  %v164 = vpop.f32.mrf.mxu0
  %v165 = vadd.f32 %v38, %v164
  %v166 = vpop.f32.mrf.mxu0
  %167 = vmatprep.mubr.bf16.mxu0 0
  %168 = vmatmul.mubr.bf16.gmra.mxu0 %v97
  %v169 = vpop.f32.mrf.mxu0
  %v170 = vadd.f32 %v38, %v169
  %v171 = vpop.f32.mrf.mxu0
  %v172 = vpop.f32.mrf.mxu0
  %v173 = vadd.f32 %v38, %v172
  %v174 = vpop.f32.mrf.mxu0
  %175 = vmatprep.mubr.bf16.mxu0 0
  %176 = vmatmul.mubr.bf16.gmra.mxu0 %v100
  %v177 = vpop.f32.mrf.mxu0
  %v178 = vadd.f32 %v38, %v177
  %v179 = vpop.f32.mrf.mxu0
  %v180 = vpop.f32.mrf.mxu0
  %v181 = vadd.f32 %v38, %v180
  %v182 = vpop.f32.mrf.mxu0
  %183 = vmatprep.mubr.bf16.mxu0 0
  %184 = vmatmul.mubr.bf16.gmra.mxu0 %v103
  %v185 = vpop.f32.mrf.mxu0
  %v186 = vadd.f32 %v38, %v185
  %v187 = vpop.f32.mrf.mxu0
  %v188 = vpop.f32.mrf.mxu0
  %v189 = vadd.f32 %v38, %v188
  %v190 = vpop.f32.mrf.mxu0
  %191 = vmatprep.mubr.bf16.mxu0 0
  %192 = vmatmul.mubr.bf16.gmra.mxu0 %v106
  %v193 = vpop.f32.mrf.mxu0
  %v194 = vadd.f32 %v38, %v193
  %v195 = vpop.f32.mrf.mxu0
  %v196 = vpop.f32.mrf.mxu0
  %v197 = vadd.f32 %v38, %v196
  %v198 = vpop.f32.mrf.mxu0
  %199 = vmatprep.mubr.bf16.mxu0 0
  %200 = vmatmul.mubr.bf16.gmra.mxu0 %v109
  %v201 = vpop.f32.mrf.mxu0
  %v202 = vadd.f32 %v38, %v201
  %v203 = vpop.f32.mrf.mxu0
  %v204 = vpop.f32.mrf.mxu0
  %v205 = vadd.f32 %v38, %v204
  %v206 = vpop.f32.mrf.mxu0
  %207 = vdwg.mxu0
  %v208 = vmax.f32 %v146, 0.0
  %v209 = vmax.f32 %v149, 0.0
  %v210 = vmax.f32 %v154, 0.0
  %v211 = vmax.f32 %v157, 0.0
  %v212 = vmax.f32 %v162, 0.0
  %v213 = vmax.f32 %v165, 0.0
  %v214 = vmax.f32 %v170, 0.0
  %v215 = vmax.f32 %v173, 0.0
  %v216 = vmax.f32 %v178, 0.0
  %v217 = vmax.f32 %v181, 0.0
  %v218 = vmax.f32 %v186, 0.0
  %v219 = vmax.f32 %v189, 0.0
  %v220 = vmax.f32 %v194, 0.0
  %v221 = vmax.f32 %v197, 0.0
  %v222 = vmax.f32 %v202, 0.0
  %v223 = vmax.f32 %v205, 0.0
  %v224 = vpack.c.bf16 %v209, %v208
  %v225 = vpack.c.bf16 %v211, %v210
  %v226 = vpack.c.bf16 %v213, %v212
  %v227 = vpack.c.bf16 %v215, %v214
  %v228 = vpack.c.bf16 %v217, %v216
  %v229 = vpack.c.bf16 %v219, %v218
  %v230 = vpack.c.bf16 %v221, %v220
  %v231 = vpack.c.bf16 %v223, %v222
  %v240 = vunpack.c.l.b16 %v224
  %v241 = vunpack.c.h.b16 %v224
  %v242 = vunpack.c.l.b16 %v225
  %v243 = vunpack.c.h.b16 %v225
  %v244 = vunpack.c.l.b16 %v226
  %v245 = vunpack.c.h.b16 %v226
  %v246 = vunpack.c.l.b16 %v227
  %v247 = vunpack.c.h.b16 %v227
  %v248 = vunpack.c.l.b16 %v228
  %v249 = vunpack.c.h.b16 %v228
  %v250 = vunpack.c.l.b16 %v229
  %v251 = vunpack.c.h.b16 %v229
  %v252 = vunpack.c.l.b16 %v230
  %v253 = vunpack.c.h.b16 %v230
  %v254 = vunpack.c.l.b16 %v231
  %v255 = vunpack.c.h.b16 %v231
  %v256 = vpack.c.b16 %v240, %v240
  %v257 = vpack.c.b16 %v241, %v241
  %v258 = vpack.c.b16 %v242, %v242
  %v259 = vpack.c.b16 %v243, %v243
  %v260 = vpack.c.b16 %v244, %v244
  %v261 = vpack.c.b16 %v245, %v245
  %v262 = vpack.c.b16 %v246, %v246
  %v263 = vpack.c.b16 %v247, %v247
  %v264 = vpack.c.b16 %v248, %v248
  %v265 = vpack.c.b16 %v249, %v249
  %v266 = vpack.c.b16 %v250, %v250
  %v267 = vpack.c.b16 %v251, %v251
  %v268 = vpack.c.b16 %v252, %v252
  %v269 = vpack.c.b16 %v253, %v253
  %v270 = vpack.c.b16 %v254, %v254
  %v271 = vpack.c.b16 %v255, %v255
  %vm288 = vcmask 60416
  %289 = vst.msk [vmem:[%s3] sm:$0xf] %vm288, %v256
  %290 = vst.msk [vmem:[%s3 + $0x4] sm:$0xf] %vm288, %v257
  %291 = vst.msk [vmem:[%s3 + $0x8] sm:$0xf] %vm288, %v258
  %292 = vst.msk [vmem:[%s3 + $0xc] sm:$0xf] %vm288, %v259
  %293 = vst.msk [vmem:[%s3 + $0x10] sm:$0xf] %vm288, %v260
  %294 = vst.msk [vmem:[%s3 + $0x14] sm:$0xf] %vm288, %v261
  %295 = vst.msk [vmem:[%s3 + $0x18] sm:$0xf] %vm288, %v262
  %296 = vst.msk [vmem:[%s3 + $0x1c] sm:$0xf] %vm288, %v263
  %297 = vst.msk [vmem:[%s3 + $0x20] sm:$0xf] %vm288, %v264
  %298 = vst.msk [vmem:[%s3 + $0x24] sm:$0xf] %vm288, %v265
  %299 = vst.msk [vmem:[%s3 + $0x28] sm:$0xf] %vm288, %v266
  %300 = vst.msk [vmem:[%s3 + $0x2c] sm:$0xf] %vm288, %v267
  %301 = vst.msk [vmem:[%s3 + $0x30] sm:$0xf] %vm288, %v268
  %302 = vst.msk [vmem:[%s3 + $0x34] sm:$0xf] %vm288, %v269
  %303 = vst.msk [vmem:[%s3 + $0x38] sm:$0xf] %vm288, %v270
  %304 = vst.msk [vmem:[%s3 + $0x3c] sm:$0xf] %vm288, %v271
  // Predicated region
  $region14: #{change_detection_forward.14} parent=0 // pred_check
    _
  $region15: #{change_detection_forward.14} parent=0 // pred_check_branch
    %306 = sbr.rel (0) target = $region17
  $region16: #{change_detection_forward.14} parent=0 // pred_region
    _
  $region17: #{change_detection_forward.14} parent=0 // pred_fallthru
    _
  // Predicated region
  $region18: #{change_detection_forward.14} parent=0 // pred_check
    _
  $region19: #{change_detection_forward.14} parent=0 // pred_check_branch
    %308 = sbr.rel (0) target = $region21
  $region20: #{change_detection_forward.14} parent=0 // pred_region
    _
  $region21: #{change_detection_forward.14} parent=0 // pred_fallthru
    _

// kernel: change_detection_forward.10
$region0: #{change_detection_forward.10}
  #allocation0 [shape = 'u32[]', space=smem, size = 0x4, offset = 0x4, fixed_abs, tag = 'smem constant byte address 0x4 - core index']
  #allocation1 [shape = 'u32[144,128]{1,0:T(1,128)}', space=vmem, size = 0x12000, scoped, tag = 'internal scratch']
  %s0 = inlined_call_operand.vmem [shape: bf16[256,27], index: 0, kind: input, shape index: {}]
  %s1 = inlined_call_operand.vmem [shape: bf16[27,8], index: 1, kind: input, shape index: {}]
  %s2 = inlined_call_operand.vmem [shape: f32[1,8], index: 2, kind: input, shape index: {}]
  %s3 = inlined_call_operand.vmem [shape: bf16[256,8], index: 3, kind: output, shape index: {}]
  %s4 = sld [smem:[#allocation0]]
  $region22: #{change_detection_forward.10} parent=0
    _
  %s6 = ssub.s32 1, %s4
  %s7 = scalar_select 0, %s6, %s4
  // Predicated region
  $region2: #{change_detection_forward.10} parent=0 // pred_check
    _
  $region3: #{change_detection_forward.10} parent=0 // pred_check_branch
    %9 = sbr.rel (0) target = $region5
  $region4: #{change_detection_forward.10} parent=0 // pred_region
    _
  $region5: #{change_detection_forward.10} parent=0 // pred_fallthru
    _
  // Predicated region
  $region6: #{change_detection_forward.10} parent=0 // pred_check
    _
  $region7: #{change_detection_forward.10} parent=0 // pred_check_branch
    %11 = sbr.rel (0) target = $region9
  $region8: #{change_detection_forward.10} parent=0 // pred_region
    _
  $region9: #{change_detection_forward.10} parent=0 // pred_fallthru
    _
  // Predicated region
  $region10: #{change_detection_forward.10} parent=0 // pred_check
    _
  $region11: #{change_detection_forward.10} parent=0 // pred_check_branch
    %13 = sbr.rel (0) target = $region13
  $region12: #{change_detection_forward.10} parent=0 // pred_region
    _
  $region13: #{change_detection_forward.10} parent=0 // pred_fallthru
    _
  %v15 = vld [vmem:[%s0] sm:$0xf]
  %v16 = vld [vmem:[%s0 + $0x4] sm:$0xf]
  %v17 = vld [vmem:[%s0 + $0x8] sm:$0xf]
  %v18 = vld [vmem:[%s0 + $0xc] sm:$0xf]
  %v19 = vld [vmem:[%s0 + $0x10] sm:$0xf]
  %v20 = vld [vmem:[%s0 + $0x14] sm:$0xf]
  %v21 = vld [vmem:[%s0 + $0x18] sm:$0xf]
  %v22 = vld [vmem:[%s0 + $0x1c] sm:$0xf]
  %v23 = vld [vmem:[%s0 + $0x20] sm:$0xf]
  %v24 = vld [vmem:[%s0 + $0x24] sm:$0xf]
  %v25 = vld [vmem:[%s0 + $0x28] sm:$0xf]
  %v26 = vld [vmem:[%s0 + $0x2c] sm:$0xf]
  %v27 = vld [vmem:[%s0 + $0x30] sm:$0xf]
  %v28 = vld [vmem:[%s0 + $0x34] sm:$0xf]
  %v29 = vld [vmem:[%s0 + $0x38] sm:$0xf]
  %v30 = vld [vmem:[%s0 + $0x3c] sm:$0xf]
  %v31 = vld [vmem:[%s0 + $0x40] sm:$0xf]
  %v32 = vld [vmem:[%s0 + $0x44] sm:$0xf]
  %v33 = vld [vmem:[%s0 + $0x48] sm:$0xf]
  %v34 = vld [vmem:[%s0 + $0x4c] sm:$0xf]
  %v35 = vld [vmem:[%s0 + $0x50] sm:$0xf]
  %v36 = vld [vmem:[%s0 + $0x54] sm:$0xf]
  %v37 = vld [vmem:[%s0 + $0x58] sm:$0xf]
  %v38 = vld [vmem:[%s0 + $0x5c] sm:$0xf]
  %v39 = vld [vmem:[%s0 + $0x60] sm:$0xf]
  %v40 = vld [vmem:[%s0 + $0x64] sm:$0xf]
  %v41 = vld [vmem:[%s0 + $0x68] sm:$0xf]
  %v42 = vld [vmem:[%s0 + $0x6c] sm:$0xf]
  %v43 = vld [vmem:[%s0 + $0x70] sm:$0xf]
  %v44 = vld [vmem:[%s0 + $0x74] sm:$0xf]
  %v45 = vld [vmem:[%s0 + $0x78] sm:$0xf]
  %v46 = vld [vmem:[%s0 + $0x7c] sm:$0xf]
  %v47 = vld [vmem:[%s1] sm:$0xf]
  %v48 = vld [vmem:[%s1 + $0x4] sm:$0xf]
  %v49 = vld [vmem:[%s1 + $0x8] sm:$0xf]
  %v50 = vld [vmem:[%s1 + $0xc] sm:$0x3]
  %v51 = vld [vmem:[%s2] sm:$0x1]
  %v53 = vlaneseq
  %v54 = vshrl.u32 %v53, 7
  %v55 = vsub.s32 0, %v54
  %v56 = vrot.slane %v51, %v55
  %v90 = vunpack.c.l.b16 %v15
  %v91 = vunpack.c.l.b16 %v16
  %v92 = vunpack.c.l.b16 %v17
  %v93 = vunpack.c.l.b16 %v18
  %v94 = vunpack.c.l.b16 %v19
  %v95 = vunpack.c.l.b16 %v20
  %v96 = vunpack.c.l.b16 %v21
  %v97 = vunpack.c.l.b16 %v22
  %v98 = vunpack.c.l.b16 %v23
  %v99 = vunpack.c.l.b16 %v24
  %v100 = vunpack.c.l.b16 %v25
  %v101 = vunpack.c.l.b16 %v26
  %v102 = vunpack.c.l.b16 %v27
  %v103 = vunpack.c.l.b16 %v28
  %v104 = vunpack.c.l.b16 %v29
  %v105 = vunpack.c.l.b16 %v30
  %v106 = vunpack.c.l.b16 %v31
  %v107 = vunpack.c.l.b16 %v32
  %v108 = vunpack.c.l.b16 %v33
  %v109 = vunpack.c.l.b16 %v34
  %v110 = vunpack.c.l.b16 %v35
  %v111 = vunpack.c.l.b16 %v36
  %v112 = vunpack.c.l.b16 %v37
  %v113 = vunpack.c.l.b16 %v38
  %v114 = vunpack.c.l.b16 %v39
  %v115 = vunpack.c.l.b16 %v40
  %v116 = vunpack.c.l.b16 %v41
  %v117 = vunpack.c.l.b16 %v42
  %v118 = vunpack.c.l.b16 %v43
  %v119 = vunpack.c.l.b16 %v44
  %v120 = vunpack.c.l.b16 %v45
  %v121 = vunpack.c.l.b16 %v46
  %v122 = vpack.c.b16 %v91, %v90
  %v123 = vpack.c.b16 %v93, %v92
  %v124 = vpack.c.b16 %v95, %v94
  %v125 = vpack.c.b16 %v97, %v96
  %v126 = vpack.c.b16 %v99, %v98
  %v127 = vpack.c.b16 %v101, %v100
  %v128 = vpack.c.b16 %v103, %v102
  %v129 = vpack.c.b16 %v105, %v104
  %v130 = vpack.c.b16 %v107, %v106
  %v131 = vpack.c.b16 %v109, %v108
  %v132 = vpack.c.b16 %v111, %v110
  %v133 = vpack.c.b16 %v113, %v112
  %v134 = vpack.c.b16 %v115, %v114
  %v135 = vpack.c.b16 %v117, %v116
  %v136 = vpack.c.b16 %v119, %v118
  %v137 = vpack.c.b16 %v121, %v120
  %v142 = vunpack.c.l.b16 %v47
  %v143 = vunpack.c.l.b16 %v48
  %v144 = vunpack.c.l.b16 %v49
  %v145 = vunpack.c.l.b16 %v50
  %v146 = vpack.c.b16 %v143, %v142
  %v147 = vpack.c.b16 %v145, %v144
  %vm149 = vcmask 220160
  %v151 = vsel %vm149, %v122, 0
  %v154 = vsel %vm149, %v123, 0
  %v157 = vsel %vm149, %v124, 0
  %v160 = vsel %vm149, %v125, 0
  %v163 = vsel %vm149, %v126, 0
  %v166 = vsel %vm149, %v127, 0
  %v169 = vsel %vm149, %v128, 0
  %v172 = vsel %vm149, %v129, 0
  %v175 = vsel %vm149, %v130, 0
  %v178 = vsel %vm149, %v131, 0
  %v181 = vsel %vm149, %v132, 0
  %v184 = vsel %vm149, %v133, 0
  %v187 = vsel %vm149, %v134, 0
  %v190 = vsel %vm149, %v135, 0
  %v193 = vsel %vm149, %v136, 0
  %v196 = vsel %vm149, %v137, 0
  %vm198 = vcmask 1044480
  %vm199 = vcmask 1045504
  %v200 = vsel %vm198, 4294967295, 65535
  %v201 = vsel %vm199, %v200, 0
  %v203 = vand.u32 %v147, %v201
  %205 = vmatprep.subr.bf16.mxu0 0
  %206 = vmatpush1.bf16.msra.mxu0 0
  %207 = vmatprep.subr.bf16.mxu0 0
  %208 = vmatpush1.bf16.msra.mxu0 0
  %209 = vmatprep.subr.bf16.mxu0 0
  %210 = vmatpush1.bf16.msra.mxu0 0
  %211 = vmatprep.subr.bf16.mxu0 0
  %212 = vmatpush1.bf16.msra.mxu0 0
  %213 = vmatprep.subr.bf16.mxu0 0
  %214 = vmatpush1.bf16.msra.mxu0 0
  %215 = vmatprep.subr.bf16.mxu0 0
  %216 = vmatpush1.bf16.msra.mxu0 0
  %217 = vmatprep.subr.bf16.mxu0 0
  %218 = vmatpush1.bf16.msra.mxu0 %v203
  %219 = vmatprep.subr.bf16.mxu0 0
  %220 = vmatpush1.bf16.msra.mxu0 %v146
  %221 = vmatprep.subr.bf16.mxu0 0
  %222 = vmatpush2.bf16.msra.mxu0 0
  %223 = vmatprep.subr.bf16.mxu0 0
  %224 = vmatpush2.bf16.msra.mxu0 0
  %225 = vmatprep.subr.bf16.mxu0 0
  %226 = vmatpush2.bf16.msra.mxu0 0
  %227 = vmatprep.subr.bf16.mxu0 0
  %228 = vmatpush2.bf16.msra.mxu0 0
  %229 = vmatprep.subr.bf16.mxu0 0
  %230 = vmatpush2.bf16.msra.mxu0 0
  %231 = vmatprep.subr.bf16.mxu0 0
  %232 = vmatpush2.bf16.msra.mxu0 0
  %233 = vmatprep.subr.bf16.mxu0 0
  %234 = vmatpush2.bf16.msra.mxu0 0
  %235 = vmatprep.subr.bf16.mxu0 0
  %236 = vmatpush2.bf16.msra.mxu0 0
  %237 = vmatprep.mubr.bf16.mxu0 0
  %238 = vmatmul.mubr.bf16.gmra.mxu0 %v151
  %v239 = vpop.f32.mrf.mxu0
  %v240 = vadd.f32 %v56, %v239
  %v241 = vpop.f32.mrf.mxu0
  %v242 = vpop.f32.mrf.mxu0
  %v243 = vadd.f32 %v56, %v242
  %v244 = vpop.f32.mrf.mxu0
  %245 = vmatprep.mubr.bf16.mxu0 0
  %246 = vmatmul.mubr.bf16.gmra.mxu0 %v154
  %v247 = vpop.f32.mrf.mxu0
  %v248 = vadd.f32 %v56, %v247
  %v249 = vpop.f32.mrf.mxu0
  %v250 = vpop.f32.mrf.mxu0
  %v251 = vadd.f32 %v56, %v250
  %v252 = vpop.f32.mrf.mxu0
  %253 = vmatprep.mubr.bf16.mxu0 0
  %254 = vmatmul.mubr.bf16.gmra.mxu0 %v157
  %v255 = vpop.f32.mrf.mxu0
  %v256 = vadd.f32 %v56, %v255
  %v257 = vpop.f32.mrf.mxu0
  %v258 = vpop.f32.mrf.mxu0
  %v259 = vadd.f32 %v56, %v258
  %v260 = vpop.f32.mrf.mxu0
  %261 = vmatprep.mubr.bf16.mxu0 0
  %262 = vmatmul.mubr.bf16.gmra.mxu0 %v160
  %v263 = vpop.f32.mrf.mxu0
  %v264 = vadd.f32 %v56, %v263
  %v265 = vpop.f32.mrf.mxu0
  %v266 = vpop.f32.mrf.mxu0
  %v267 = vadd.f32 %v56, %v266
  %v268 = vpop.f32.mrf.mxu0
  %269 = vmatprep.mubr.bf16.mxu0 0
  %270 = vmatmul.mubr.bf16.gmra.mxu0 %v163
  %v271 = vpop.f32.mrf.mxu0
  %v272 = vadd.f32 %v56, %v271
  %v273 = vpop.f32.mrf.mxu0
  %v274 = vpop.f32.mrf.mxu0
  %v275 = vadd.f32 %v56, %v274
  %v276 = vpop.f32.mrf.mxu0
  %277 = vmatprep.mubr.bf16.mxu0 0
  %278 = vmatmul.mubr.bf16.gmra.mxu0 %v166
  %v279 = vpop.f32.mrf.mxu0
  %v280 = vadd.f32 %v56, %v279
  %v281 = vpop.f32.mrf.mxu0
  %v282 = vpop.f32.mrf.mxu0
  %v283 = vadd.f32 %v56, %v282
  %v284 = vpop.f32.mrf.mxu0
  %285 = vmatprep.mubr.bf16.mxu0 0
  %286 = vmatmul.mubr.bf16.gmra.mxu0 %v169
  %v287 = vpop.f32.mrf.mxu0
  %v288 = vadd.f32 %v56, %v287
  %v289 = vpop.f32.mrf.mxu0
  %v290 = vpop.f32.mrf.mxu0
  %v291 = vadd.f32 %v56, %v290
  %v292 = vpop.f32.mrf.mxu0
  %293 = vmatprep.mubr.bf16.mxu0 0
  %294 = vmatmul.mubr.bf16.gmra.mxu0 %v172
  %v295 = vpop.f32.mrf.mxu0
  %v296 = vadd.f32 %v56, %v295
  %v297 = vpop.f32.mrf.mxu0
  %v298 = vpop.f32.mrf.mxu0
  %v299 = vadd.f32 %v56, %v298
  %v300 = vpop.f32.mrf.mxu0
  %301 = vmatprep.mubr.bf16.mxu0 0
  %302 = vmatmul.mubr.bf16.gmra.mxu0 %v175
  %v303 = vpop.f32.mrf.mxu0
  %v304 = vadd.f32 %v56, %v303
  %v305 = vpop.f32.mrf.mxu0
  %v306 = vpop.f32.mrf.mxu0
  %v307 = vadd.f32 %v56, %v306
  %v308 = vpop.f32.mrf.mxu0
  %309 = vmatprep.mubr.bf16.mxu0 0
  %310 = vmatmul.mubr.bf16.gmra.mxu0 %v178
  %v311 = vpop.f32.mrf.mxu0
  %v312 = vadd.f32 %v56, %v311
  %v313 = vpop.f32.mrf.mxu0
  %v314 = vpop.f32.mrf.mxu0
  %v315 = vadd.f32 %v56, %v314
  %v316 = vpop.f32.mrf.mxu0
  %317 = vmatprep.mubr.bf16.mxu0 0
  %318 = vmatmul.mubr.bf16.gmra.mxu0 %v181
  %v319 = vpop.f32.mrf.mxu0
  %v320 = vadd.f32 %v56, %v319
  %v321 = vpop.f32.mrf.mxu0
  %v322 = vpop.f32.mrf.mxu0
  %v323 = vadd.f32 %v56, %v322
  %v324 = vpop.f32.mrf.mxu0
  %325 = vmatprep.mubr.bf16.mxu0 0
  %326 = vmatmul.mubr.bf16.gmra.mxu0 %v184
  %v327 = vpop.f32.mrf.mxu0
  %v328 = vadd.f32 %v56, %v327
  %v329 = vpop.f32.mrf.mxu0
  %v330 = vpop.f32.mrf.mxu0
  %v331 = vadd.f32 %v56, %v330
  %v332 = vpop.f32.mrf.mxu0
  %333 = vmatprep.mubr.bf16.mxu0 0
  %334 = vmatmul.mubr.bf16.gmra.mxu0 %v187
  %v335 = vpop.f32.mrf.mxu0
  %v336 = vadd.f32 %v56, %v335
  %v337 = vpop.f32.mrf.mxu0
  %v338 = vpop.f32.mrf.mxu0
  %v339 = vadd.f32 %v56, %v338
  %v340 = vpop.f32.mrf.mxu0
  %341 = vmatprep.mubr.bf16.mxu0 0
  %342 = vmatmul.mubr.bf16.gmra.mxu0 %v190
  %v343 = vpop.f32.mrf.mxu0
  %v344 = vadd.f32 %v56, %v343
  %v345 = vpop.f32.mrf.mxu0
  %v346 = vpop.f32.mrf.mxu0
  %v347 = vadd.f32 %v56, %v346
  %v348 = vpop.f32.mrf.mxu0
  %349 = vmatprep.mubr.bf16.mxu0 0
  %350 = vmatmul.mubr.bf16.gmra.mxu0 %v193
  %v351 = vpop.f32.mrf.mxu0
  %v352 = vadd.f32 %v56, %v351
  %v353 = vpop.f32.mrf.mxu0
  %v354 = vpop.f32.mrf.mxu0
  %v355 = vadd.f32 %v56, %v354
  %v356 = vpop.f32.mrf.mxu0
  %357 = vmatprep.mubr.bf16.mxu0 0
  %358 = vmatmul.mubr.bf16.gmra.mxu0 %v196
  %v359 = vpop.f32.mrf.mxu0
  %v360 = vadd.f32 %v56, %v359
  %v361 = vpop.f32.mrf.mxu0
  %v362 = vpop.f32.mrf.mxu0
  %v363 = vadd.f32 %v56, %v362
  %v364 = vpop.f32.mrf.mxu0
  %365 = vdwg.mxu0
  %v366 = vmax.f32 %v240, 0.0
  %v367 = vmax.f32 %v243, 0.0
  %v368 = vmax.f32 %v248, 0.0
  %v369 = vmax.f32 %v251, 0.0
  %v370 = vmax.f32 %v256, 0.0
  %v371 = vmax.f32 %v259, 0.0
  %v372 = vmax.f32 %v264, 0.0
  %v373 = vmax.f32 %v267, 0.0
  %v374 = vmax.f32 %v272, 0.0
  %v375 = vmax.f32 %v275, 0.0
  %v376 = vmax.f32 %v280, 0.0
  %v377 = vmax.f32 %v283, 0.0
  %v378 = vmax.f32 %v288, 0.0
  %v379 = vmax.f32 %v291, 0.0
  %v380 = vmax.f32 %v296, 0.0
  %v381 = vmax.f32 %v299, 0.0
  %v382 = vmax.f32 %v304, 0.0
  %v383 = vmax.f32 %v307, 0.0
  %v384 = vmax.f32 %v312, 0.0
  %v385 = vmax.f32 %v315, 0.0
  %v386 = vmax.f32 %v320, 0.0
  %v387 = vmax.f32 %v323, 0.0
  %v388 = vmax.f32 %v328, 0.0
  %v389 = vmax.f32 %v331, 0.0
  %v390 = vmax.f32 %v336, 0.0
  %v391 = vmax.f32 %v339, 0.0
  %v392 = vmax.f32 %v344, 0.0
  %v393 = vmax.f32 %v347, 0.0
  %v394 = vmax.f32 %v352, 0.0
  %v395 = vmax.f32 %v355, 0.0
  %v396 = vmax.f32 %v360, 0.0
  %v397 = vmax.f32 %v363, 0.0
  %v398 = vpack.c.bf16 %v367, %v366
  %v399 = vpack.c.bf16 %v369, %v368
  %v400 = vpack.c.bf16 %v371, %v370
  %v401 = vpack.c.bf16 %v373, %v372
  %v402 = vpack.c.bf16 %v375, %v374
  %v403 = vpack.c.bf16 %v377, %v376
  %v404 = vpack.c.bf16 %v379, %v378
  %v405 = vpack.c.bf16 %v381, %v380
  %v406 = vpack.c.bf16 %v383, %v382
  %v407 = vpack.c.bf16 %v385, %v384
  %v408 = vpack.c.bf16 %v387, %v386
  %v409 = vpack.c.bf16 %v389, %v388
  %v410 = vpack.c.bf16 %v391, %v390
  %v411 = vpack.c.bf16 %v393, %v392
  %v412 = vpack.c.bf16 %v395, %v394
  %v413 = vpack.c.bf16 %v397, %v396
  %v430 = vunpack.c.l.b16 %v398
  %v431 = vunpack.c.h.b16 %v398
  %v432 = vunpack.c.l.b16 %v399
  %v433 = vunpack.c.h.b16 %v399
  %v434 = vunpack.c.l.b16 %v400
  %v435 = vunpack.c.h.b16 %v400
  %v436 = vunpack.c.l.b16 %v401
  %v437 = vunpack.c.h.b16 %v401
  %v438 = vunpack.c.l.b16 %v402
  %v439 = vunpack.c.h.b16 %v402
  %v440 = vunpack.c.l.b16 %v403
  %v441 = vunpack.c.h.b16 %v403
  %v442 = vunpack.c.l.b16 %v404
  %v443 = vunpack.c.h.b16 %v404
  %v444 = vunpack.c.l.b16 %v405
  %v445 = vunpack.c.h.b16 %v405
  %v446 = vunpack.c.l.b16 %v406
  %v447 = vunpack.c.h.b16 %v406
  %v448 = vunpack.c.l.b16 %v407
  %v449 = vunpack.c.h.b16 %v407
  %v450 = vunpack.c.l.b16 %v408
  %v451 = vunpack.c.h.b16 %v408
  %v452 = vunpack.c.l.b16 %v409
  %v453 = vunpack.c.h.b16 %v409
  %v454 = vunpack.c.l.b16 %v410
  %v455 = vunpack.c.h.b16 %v410
  %v456 = vunpack.c.l.b16 %v411
  %v457 = vunpack.c.h.b16 %v411
  %v458 = vunpack.c.l.b16 %v412
  %v459 = vunpack.c.h.b16 %v412
  %v460 = vunpack.c.l.b16 %v413
  %v461 = vunpack.c.h.b16 %v413
  %v462 = vpack.c.b16 %v430, %v430
  %v463 = vpack.c.b16 %v431, %v431
  %v464 = vpack.c.b16 %v432, %v432
  %v465 = vpack.c.b16 %v433, %v433
  %v466 = vpack.c.b16 %v434, %v434
  %v467 = vpack.c.b16 %v435, %v435
  %v468 = vpack.c.b16 %v436, %v436
  %v469 = vpack.c.b16 %v437, %v437
  %v470 = vpack.c.b16 %v438, %v438
  %v471 = vpack.c.b16 %v439, %v439
  %v472 = vpack.c.b16 %v440, %v440
  %v473 = vpack.c.b16 %v441, %v441
  %v474 = vpack.c.b16 %v442, %v442
  %v475 = vpack.c.b16 %v443, %v443
  %v476 = vpack.c.b16 %v444, %v444
  %v477 = vpack.c.b16 %v445, %v445
  %v478 = vpack.c.b16 %v446, %v446
  %v479 = vpack.c.b16 %v447, %v447
  %v480 = vpack.c.b16 %v448, %v448
  %v481 = vpack.c.b16 %v449, %v449
  %v482 = vpack.c.b16 %v450, %v450
  %v483 = vpack.c.b16 %v451, %v451
  %v484 = vpack.c.b16 %v452, %v452
  %v485 = vpack.c.b16 %v453, %v453
  %v486 = vpack.c.b16 %v454, %v454
  %v487 = vpack.c.b16 %v455, %v455
  %v488 = vpack.c.b16 %v456, %v456
  %v489 = vpack.c.b16 %v457, %v457
  %v490 = vpack.c.b16 %v458, %v458
  %v491 = vpack.c.b16 %v459, %v459
  %v492 = vpack.c.b16 %v460, %v460
  %v493 = vpack.c.b16 %v461, %v461
  %vm526 = vcmask 60416
  %527 = vst.msk [vmem:[%s3] sm:$0xf] %vm526, %v462
  %528 = vst.msk [vmem:[%s3 + $0x4] sm:$0xf] %vm526, %v463
  %529 = vst.msk [vmem:[%s3 + $0x8] sm:$0xf] %vm526, %v464
  %530 = vst.msk [vmem:[%s3 + $0xc] sm:$0xf] %vm526, %v465
  %531 = vst.msk [vmem:[%s3 + $0x10] sm:$0xf] %vm526, %v466
  %532 = vst.msk [vmem:[%s3 + $0x14] sm:$0xf] %vm526, %v467
  %533 = vst.msk [vmem:[%s3 + $0x18] sm:$0xf] %vm526, %v468
  %534 = vst.msk [vmem:[%s3 + $0x1c] sm:$0xf] %vm526, %v469
  %535 = vst.msk [vmem:[%s3 + $0x20] sm:$0xf] %vm526, %v470
  %536 = vst.msk [vmem:[%s3 + $0x24] sm:$0xf] %vm526, %v471
  %537 = vst.msk [vmem:[%s3 + $0x28] sm:$0xf] %vm526, %v472
  %538 = vst.msk [vmem:[%s3 + $0x2c] sm:$0xf] %vm526, %v473
  %539 = vst.msk [vmem:[%s3 + $0x30] sm:$0xf] %vm526, %v474
  %540 = vst.msk [vmem:[%s3 + $0x34] sm:$0xf] %vm526, %v475
  %541 = vst.msk [vmem:[%s3 + $0x38] sm:$0xf] %vm526, %v476
  %542 = vst.msk [vmem:[%s3 + $0x3c] sm:$0xf] %vm526, %v477
  %543 = vst.msk [vmem:[%s3 + $0x40] sm:$0xf] %vm526, %v478
  %544 = vst.msk [vmem:[%s3 + $0x44] sm:$0xf] %vm526, %v479
  %545 = vst.msk [vmem:[%s3 + $0x48] sm:$0xf] %vm526, %v480
  %546 = vst.msk [vmem:[%s3 + $0x4c] sm:$0xf] %vm526, %v481
  %547 = vst.msk [vmem:[%s3 + $0x50] sm:$0xf] %vm526, %v482
  %548 = vst.msk [vmem:[%s3 + $0x54] sm:$0xf] %vm526, %v483
  %549 = vst.msk [vmem:[%s3 + $0x58] sm:$0xf] %vm526, %v484
  %550 = vst.msk [vmem:[%s3 + $0x5c] sm:$0xf] %vm526, %v485
  %551 = vst.msk [vmem:[%s3 + $0x60] sm:$0xf] %vm526, %v486
  %552 = vst.msk [vmem:[%s3 + $0x64] sm:$0xf] %vm526, %v487
  %553 = vst.msk [vmem:[%s3 + $0x68] sm:$0xf] %vm526, %v488
  %554 = vst.msk [vmem:[%s3 + $0x6c] sm:$0xf] %vm526, %v489
  %555 = vst.msk [vmem:[%s3 + $0x70] sm:$0xf] %vm526, %v490
  %556 = vst.msk [vmem:[%s3 + $0x74] sm:$0xf] %vm526, %v491
  %557 = vst.msk [vmem:[%s3 + $0x78] sm:$0xf] %vm526, %v492
  %558 = vst.msk [vmem:[%s3 + $0x7c] sm:$0xf] %vm526, %v493
  // Predicated region
  $region14: #{change_detection_forward.10} parent=0 // pred_check
    _
  $region15: #{change_detection_forward.10} parent=0 // pred_check_branch
    %560 = sbr.rel (0) target = $region17
  $region16: #{change_detection_forward.10} parent=0 // pred_region
    _
  $region17: #{change_detection_forward.10} parent=0 // pred_fallthru
    _
  // Predicated region
  $region18: #{change_detection_forward.10} parent=0 // pred_check
    _
  $region19: #{change_detection_forward.10} parent=0 // pred_check_branch
    %562 = sbr.rel (0) target = $region21
  $region20: #{change_detection_forward.10} parent=0 // pred_region
    _
  $region21: #{change_detection_forward.10} parent=0 // pred_fallthru
    _

// kernel: change_detection_forward.11
$region0: #{change_detection_forward.11}
  #allocation0 [shape = 'u32[]', space=smem, size = 0x4, offset = 0x4, fixed_abs, tag = 'smem constant byte address 0x4 - core index']
  #allocation1 [shape = 'u32[144,128]{1,0:T(1,128)}', space=vmem, size = 0x12000, scoped, tag = 'internal scratch']
  %s0 = inlined_call_operand.vmem [shape: bf16[64,72], index: 0, kind: input, shape index: {}]
  %s1 = inlined_call_operand.vmem [shape: bf16[72,16], index: 1, kind: input, shape index: {}]
  %s2 = inlined_call_operand.vmem [shape: f32[1,16], index: 2, kind: input, shape index: {}]
  %s3 = inlined_call_operand.vmem [shape: bf16[64,16], index: 3, kind: output, shape index: {}]
  %s4 = sld [smem:[#allocation0]]
  $region22: #{change_detection_forward.11} parent=0
    _
  %s6 = ssub.s32 1, %s4
  %s7 = scalar_select 0, %s6, %s4
  // Predicated region
  $region2: #{change_detection_forward.11} parent=0 // pred_check
    _
  $region3: #{change_detection_forward.11} parent=0 // pred_check_branch
    %9 = sbr.rel (0) target = $region5
  $region4: #{change_detection_forward.11} parent=0 // pred_region
    _
  $region5: #{change_detection_forward.11} parent=0 // pred_fallthru
    _
  // Predicated region
  $region6: #{change_detection_forward.11} parent=0 // pred_check
    _
  $region7: #{change_detection_forward.11} parent=0 // pred_check_branch
    %11 = sbr.rel (0) target = $region9
  $region8: #{change_detection_forward.11} parent=0 // pred_region
    _
  $region9: #{change_detection_forward.11} parent=0 // pred_fallthru
    _
  // Predicated region
  $region10: #{change_detection_forward.11} parent=0 // pred_check
    _
  $region11: #{change_detection_forward.11} parent=0 // pred_check_branch
    %13 = sbr.rel (0) target = $region13
  $region12: #{change_detection_forward.11} parent=0 // pred_region
    _
  $region13: #{change_detection_forward.11} parent=0 // pred_fallthru
    _
  %v15 = vld [vmem:[%s0] sm:$0xf]
  %v16 = vld [vmem:[%s0 + $0x4] sm:$0xf]
  %v17 = vld [vmem:[%s0 + $0x8] sm:$0xf]
  %v18 = vld [vmem:[%s0 + $0xc] sm:$0xf]
  %v19 = vld [vmem:[%s0 + $0x10] sm:$0xf]
  %v20 = vld [vmem:[%s0 + $0x14] sm:$0xf]
  %v21 = vld [vmem:[%s0 + $0x18] sm:$0xf]
  %v22 = vld [vmem:[%s0 + $0x1c] sm:$0xf]
  %v23 = vld [vmem:[%s1] sm:$0xf]
  %v24 = vld [vmem:[%s1 + $0x4] sm:$0xf]
  %v25 = vld [vmem:[%s1 + $0x8] sm:$0xf]
  %v26 = vld [vmem:[%s1 + $0xc] sm:$0xf]
  %v27 = vld [vmem:[%s1 + $0x10] sm:$0xf]
  %v28 = vld [vmem:[%s1 + $0x14] sm:$0xf]
  %v29 = vld [vmem:[%s1 + $0x18] sm:$0xf]
  %v30 = vld [vmem:[%s1 + $0x1c] sm:$0xf]
  %v31 = vld [vmem:[%s1 + $0x20] sm:$0xf]
  %v32 = vld [vmem:[%s2] sm:$0x1]
  %v34 = vlaneseq
  %v35 = vshrl.u32 %v34, 7
  %v36 = vsub.s32 0, %v35
  %v37 = vrot.slane %v32, %v36
  %v47 = vunpack.c.l.b16 %v15
  %v48 = vunpack.c.l.b16 %v16
  %v49 = vunpack.c.l.b16 %v17
  %v50 = vunpack.c.l.b16 %v18
  %v51 = vunpack.c.l.b16 %v19
  %v52 = vunpack.c.l.b16 %v20
  %v53 = vunpack.c.l.b16 %v21
  %v54 = vunpack.c.l.b16 %v22
  %v55 = vpack.c.b16 %v48, %v47
  %v56 = vpack.c.b16 %v50, %v49
  %v57 = vpack.c.b16 %v52, %v51
  %v58 = vpack.c.b16 %v54, %v53
  %v68 = vunpack.c.l.b16 %v23
  %v69 = vunpack.c.l.b16 %v24
  %v70 = vunpack.c.l.b16 %v25
  %v71 = vunpack.c.l.b16 %v26
  %v72 = vunpack.c.l.b16 %v27
  %v73 = vunpack.c.l.b16 %v28
  %v74 = vunpack.c.l.b16 %v29
  %v75 = vunpack.c.l.b16 %v30
  %v76 = vunpack.c.l.b16 %v31
  %v77 = vpack.c.b16 %v69, %v68
  %v78 = vpack.c.b16 %v71, %v70
  %v79 = vpack.c.b16 %v73, %v72
  %v80 = vpack.c.b16 %v75, %v74
  %v81 = vpack.c.b16 %v76, %v76
  %vm86 = vcmask 588800
  %v88 = vsel %vm86, %v55, 0
  %v91 = vsel %vm86, %v56, 0
  %v94 = vsel %vm86, %v57, 0
  %v97 = vsel %vm86, %v58, 0
  %vm99 = vcmask 1043456
  %v101 = vsel %vm99, %v81, 0
  %103 = vmatprep.subr.bf16.mxu0 0
  %104 = vmatpush1.bf16.msra.mxu0 0
  %105 = vmatprep.subr.bf16.mxu0 0
  %106 = vmatpush1.bf16.msra.mxu0 0
  %107 = vmatprep.subr.bf16.mxu0 0
  %108 = vmatpush1.bf16.msra.mxu0 0
  %109 = vmatprep.subr.bf16.mxu0 0
  %110 = vmatpush1.bf16.msra.mxu0 %v101
  %111 = vmatprep.subr.bf16.mxu0 0
  %112 = vmatpush1.bf16.msra.mxu0 %v80
  %113 = vmatprep.subr.bf16.mxu0 0
  %114 = vmatpush1.bf16.msra.mxu0 %v79
  %115 = vmatprep.subr.bf16.mxu0 0
  %116 = vmatpush1.bf16.msra.mxu0 %v78
  %117 = vmatprep.subr.bf16.mxu0 0
  %118 = vmatpush1.bf16.msra.mxu0 %v77
  %119 = vmatprep.subr.bf16.mxu0 0
  %120 = vmatpush2.bf16.msra.mxu0 0
  %121 = vmatprep.subr.bf16.mxu0 0
  %122 = vmatpush2.bf16.msra.mxu0 0
  %123 = vmatprep.subr.bf16.mxu0 0
  %124 = vmatpush2.bf16.msra.mxu0 0
  %125 = vmatprep.subr.bf16.mxu0 0
  %126 = vmatpush2.bf16.msra.mxu0 0
  %127 = vmatprep.subr.bf16.mxu0 0
  %128 = vmatpush2.bf16.msra.mxu0 0
  %129 = vmatprep.subr.bf16.mxu0 0
  %130 = vmatpush2.bf16.msra.mxu0 0
  %131 = vmatprep.subr.bf16.mxu0 0
  %132 = vmatpush2.bf16.msra.mxu0 0
  %133 = vmatprep.subr.bf16.mxu0 0
  %134 = vmatpush2.bf16.msra.mxu0 0
  %135 = vmatprep.mubr.bf16.mxu0 0
  %136 = vmatmul.mubr.bf16.gmra.mxu0 %v88
  %v137 = vpop.f32.mrf.mxu0
  %v138 = vadd.f32 %v37, %v137
  %v139 = vpop.f32.mrf.mxu0
  %v140 = vpop.f32.mrf.mxu0
  %v141 = vadd.f32 %v37, %v140
  %v142 = vpop.f32.mrf.mxu0
  %143 = vmatprep.mubr.bf16.mxu0 0
  %144 = vmatmul.mubr.bf16.gmra.mxu0 %v91
  %v145 = vpop.f32.mrf.mxu0
  %v146 = vadd.f32 %v37, %v145
  %v147 = vpop.f32.mrf.mxu0
  %v148 = vpop.f32.mrf.mxu0
  %v149 = vadd.f32 %v37, %v148
  %v150 = vpop.f32.mrf.mxu0
  %151 = vmatprep.mubr.bf16.mxu0 0
  %152 = vmatmul.mubr.bf16.gmra.mxu0 %v94
  %v153 = vpop.f32.mrf.mxu0
  %v154 = vadd.f32 %v37, %v153
  %v155 = vpop.f32.mrf.mxu0
  %v156 = vpop.f32.mrf.mxu0
  %v157 = vadd.f32 %v37, %v156
  %v158 = vpop.f32.mrf.mxu0
  %159 = vmatprep.mubr.bf16.mxu0 0
  %160 = vmatmul.mubr.bf16.gmra.mxu0 %v97
  %v161 = vpop.f32.mrf.mxu0
  %v162 = vadd.f32 %v37, %v161
  %v163 = vpop.f32.mrf.mxu0
  %v164 = vpop.f32.mrf.mxu0
  %v165 = vadd.f32 %v37, %v164
  %v166 = vpop.f32.mrf.mxu0
  %167 = vdwg.mxu0
  %v168 = vmax.f32 %v138, 0.0
  %v169 = vmax.f32 %v141, 0.0
  %v170 = vmax.f32 %v146, 0.0
  %v171 = vmax.f32 %v149, 0.0
  %v172 = vmax.f32 %v154, 0.0
  %v173 = vmax.f32 %v157, 0.0
  %v174 = vmax.f32 %v162, 0.0
  %v175 = vmax.f32 %v165, 0.0
  %v176 = vpack.c.bf16 %v169, %v168
  %v177 = vpack.c.bf16 %v171, %v170
  %v178 = vpack.c.bf16 %v173, %v172
  %v179 = vpack.c.bf16 %v175, %v174
  %v184 = vunpack.c.l.b16 %v176
  %v185 = vunpack.c.h.b16 %v176
  %v186 = vunpack.c.l.b16 %v177
  %v187 = vunpack.c.h.b16 %v177
  %v188 = vunpack.c.l.b16 %v178
  %v189 = vunpack.c.h.b16 %v178
  %v190 = vunpack.c.l.b16 %v179
  %v191 = vunpack.c.h.b16 %v179
  %v192 = vpack.c.b16 %v184, %v184
  %v193 = vpack.c.b16 %v185, %v185
  %v194 = vpack.c.b16 %v186, %v186
  %v195 = vpack.c.b16 %v187, %v187
  %v196 = vpack.c.b16 %v188, %v188
  %v197 = vpack.c.b16 %v189, %v189
  %v198 = vpack.c.b16 %v190, %v190
  %v199 = vpack.c.b16 %v191, %v191
  %vm208 = vcmask 125952
  %209 = vst.msk [vmem:[%s3] sm:$0xf] %vm208, %v192
  %210 = vst.msk [vmem:[%s3 + $0x4] sm:$0xf] %vm208, %v193
  %211 = vst.msk [vmem:[%s3 + $0x8] sm:$0xf] %vm208, %v194
  %212 = vst.msk [vmem:[%s3 + $0xc] sm:$0xf] %vm208, %v195
  %213 = vst.msk [vmem:[%s3 + $0x10] sm:$0xf] %vm208, %v196
  %214 = vst.msk [vmem:[%s3 + $0x14] sm:$0xf] %vm208, %v197
  %215 = vst.msk [vmem:[%s3 + $0x18] sm:$0xf] %vm208, %v198
  %216 = vst.msk [vmem:[%s3 + $0x1c] sm:$0xf] %vm208, %v199
  // Predicated region
  $region14: #{change_detection_forward.11} parent=0 // pred_check
    _
  $region15: #{change_detection_forward.11} parent=0 // pred_check_branch
    %218 = sbr.rel (0) target = $region17
  $region16: #{change_detection_forward.11} parent=0 // pred_region
    _
  $region17: #{change_detection_forward.11} parent=0 // pred_fallthru
    _
  // Predicated region
  $region18: #{change_detection_forward.11} parent=0 // pred_check
    _
  $region19: #{change_detection_forward.11} parent=0 // pred_check_branch
    %220 = sbr.rel (0) target = $region21
  $region20: #{change_detection_forward.11} parent=0 // pred_region
    _
  $region21: #{change_detection_forward.11} parent=0 // pred_fallthru
    _

// kernel: change_detection_forward.15
$region0: #{change_detection_forward.15}
  #allocation0 [shape = 'u32[]', space=smem, size = 0x4, offset = 0x4, fixed_abs, tag = 'smem constant byte address 0x4 - core index']
  #allocation1 [shape = 'u32[144,128]{1,0:T(1,128)}', space=vmem, size = 0x12000, scoped, tag = 'internal scratch']
  %s0 = inlined_call_operand.vmem [shape: bf16[32,32], index: 0, kind: input, shape index: {}]
  %s1 = inlined_call_operand.vmem [shape: bf16[32,8], index: 1, kind: input, shape index: {}]
  %s2 = inlined_call_operand.vmem [shape: f32[1,8], index: 2, kind: input, shape index: {}]
  %s3 = inlined_call_operand.vmem [shape: bf16[32,8], index: 3, kind: output, shape index: {}]
  %s4 = sld [smem:[#allocation0]]
  $region22: #{change_detection_forward.15} parent=0
    _
  %s6 = ssub.s32 1, %s4
  %s7 = scalar_select 0, %s6, %s4
  // Predicated region
  $region2: #{change_detection_forward.15} parent=0 // pred_check
    _
  $region3: #{change_detection_forward.15} parent=0 // pred_check_branch
    %9 = sbr.rel (0) target = $region5
  $region4: #{change_detection_forward.15} parent=0 // pred_region
    _
  $region5: #{change_detection_forward.15} parent=0 // pred_fallthru
    _
  // Predicated region
  $region6: #{change_detection_forward.15} parent=0 // pred_check
    _
  $region7: #{change_detection_forward.15} parent=0 // pred_check_branch
    %11 = sbr.rel (0) target = $region9
  $region8: #{change_detection_forward.15} parent=0 // pred_region
    _
  $region9: #{change_detection_forward.15} parent=0 // pred_fallthru
    _
  // Predicated region
  $region10: #{change_detection_forward.15} parent=0 // pred_check
    _
  $region11: #{change_detection_forward.15} parent=0 // pred_check_branch
    %13 = sbr.rel (0) target = $region13
  $region12: #{change_detection_forward.15} parent=0 // pred_region
    _
  $region13: #{change_detection_forward.15} parent=0 // pred_fallthru
    _
  %v15 = vld [vmem:[%s0] sm:$0xf]
  %v16 = vld [vmem:[%s0 + $0x4] sm:$0xf]
  %v17 = vld [vmem:[%s0 + $0x8] sm:$0xf]
  %v18 = vld [vmem:[%s0 + $0xc] sm:$0xf]
  %v19 = vld [vmem:[%s1] sm:$0xf]
  %v20 = vld [vmem:[%s1 + $0x4] sm:$0xf]
  %v21 = vld [vmem:[%s1 + $0x8] sm:$0xf]
  %v22 = vld [vmem:[%s1 + $0xc] sm:$0xf]
  %v23 = vld [vmem:[%s2] sm:$0x1]
  %v25 = vlaneseq
  %v26 = vshrl.u32 %v25, 7
  %v27 = vsub.s32 0, %v26
  %v28 = vrot.slane %v23, %v27
  %v34 = vunpack.c.l.b16 %v15
  %v35 = vunpack.c.l.b16 %v16
  %v36 = vunpack.c.l.b16 %v17
  %v37 = vunpack.c.l.b16 %v18
  %v38 = vpack.c.b16 %v35, %v34
  %v39 = vpack.c.b16 %v37, %v36
  %v44 = vunpack.c.l.b16 %v19
  %v45 = vunpack.c.l.b16 %v20
  %v46 = vunpack.c.l.b16 %v21
  %v47 = vunpack.c.l.b16 %v22
  %v48 = vpack.c.b16 %v45, %v44
  %v49 = vpack.c.b16 %v47, %v46
  %vm52 = vcmask 261120
  %v54 = vsel %vm52, %v38, 0
  %v57 = vsel %vm52, %v39, 0
  %59 = vmatprep.subr.bf16.mxu0 0
  %60 = vmatpush1.bf16.msra.mxu0 0
  %61 = vmatprep.subr.bf16.mxu0 0
  %62 = vmatpush1.bf16.msra.mxu0 0
  %63 = vmatprep.subr.bf16.mxu0 0
  %64 = vmatpush1.bf16.msra.mxu0 0
  %65 = vmatprep.subr.bf16.mxu0 0
  %66 = vmatpush1.bf16.msra.mxu0 0
  %67 = vmatprep.subr.bf16.mxu0 0
  %68 = vmatpush1.bf16.msra.mxu0 0
  %69 = vmatprep.subr.bf16.mxu0 0
  %70 = vmatpush1.bf16.msra.mxu0 0
  %71 = vmatprep.subr.bf16.mxu0 0
  %72 = vmatpush1.bf16.msra.mxu0 %v49
  %73 = vmatprep.subr.bf16.mxu0 0
  %74 = vmatpush1.bf16.msra.mxu0 %v48
  %75 = vmatprep.subr.bf16.mxu0 0
  %76 = vmatpush2.bf16.msra.mxu0 0
  %77 = vmatprep.subr.bf16.mxu0 0
  %78 = vmatpush2.bf16.msra.mxu0 0
  %79 = vmatprep.subr.bf16.mxu0 0
  %80 = vmatpush2.bf16.msra.mxu0 0
  %81 = vmatprep.subr.bf16.mxu0 0
  %82 = vmatpush2.bf16.msra.mxu0 0
  %83 = vmatprep.subr.bf16.mxu0 0
  %84 = vmatpush2.bf16.msra.mxu0 0
  %85 = vmatprep.subr.bf16.mxu0 0
  %86 = vmatpush2.bf16.msra.mxu0 0
  %87 = vmatprep.subr.bf16.mxu0 0
  %88 = vmatpush2.bf16.msra.mxu0 0
  %89 = vmatprep.subr.bf16.mxu0 0
  %90 = vmatpush2.bf16.msra.mxu0 0
  %91 = vmatprep.mubr.bf16.mxu0 0
  %92 = vmatmul.mubr.bf16.gmra.mxu0 %v54
  %v93 = vpop.f32.mrf.mxu0
  %v94 = vadd.f32 %v28, %v93
  %v95 = vpop.f32.mrf.mxu0
  %v96 = vpop.f32.mrf.mxu0
  %v97 = vadd.f32 %v28, %v96
  %v98 = vpop.f32.mrf.mxu0
  %99 = vmatprep.mubr.bf16.mxu0 0
  %100 = vmatmul.mubr.bf16.gmra.mxu0 %v57
  %v101 = vpop.f32.mrf.mxu0
  %v102 = vadd.f32 %v28, %v101
  %v103 = vpop.f32.mrf.mxu0
  %v104 = vpop.f32.mrf.mxu0
  %v105 = vadd.f32 %v28, %v104
  %v106 = vpop.f32.mrf.mxu0
  %107 = vdwg.mxu0
  %v108 = vmax.f32 %v94, 0.0
  %v109 = vmax.f32 %v97, 0.0
  %v110 = vmax.f32 %v102, 0.0
  %v111 = vmax.f32 %v105, 0.0
  %v112 = vpack.c.bf16 %v109, %v108
  %v113 = vpack.c.bf16 %v111, %v110
  %v116 = vunpack.c.l.b16 %v112
  %v117 = vunpack.c.h.b16 %v112
  %v118 = vunpack.c.l.b16 %v113
  %v119 = vunpack.c.h.b16 %v113
  %v120 = vpack.c.b16 %v116, %v116
  %v121 = vpack.c.b16 %v117, %v117
  %v122 = vpack.c.b16 %v118, %v118
  %v123 = vpack.c.b16 %v119, %v119
  %vm128 = vcmask 60416
  %129 = vst.msk [vmem:[%s3] sm:$0xf] %vm128, %v120
  %130 = vst.msk [vmem:[%s3 + $0x4] sm:$0xf] %vm128, %v121
  %131 = vst.msk [vmem:[%s3 + $0x8] sm:$0xf] %vm128, %v122
  %132 = vst.msk [vmem:[%s3 + $0xc] sm:$0xf] %vm128, %v123
  // Predicated region
  $region14: #{change_detection_forward.15} parent=0 // pred_check
    _
  $region15: #{change_detection_forward.15} parent=0 // pred_check_branch
    %134 = sbr.rel (0) target = $region17
  $region16: #{change_detection_forward.15} parent=0 // pred_region
    _
  $region17: #{change_detection_forward.15} parent=0 // pred_fallthru
    _
  // Predicated region
  $region18: #{change_detection_forward.15} parent=0 // pred_check
    _
  $region19: #{change_detection_forward.15} parent=0 // pred_check_branch
    %136 = sbr.rel (0) target = $region21
  $region20: #{change_detection_forward.15} parent=0 // pred_region
    _
  $region21: #{change_detection_forward.15} parent=0 // pred_fallthru
    _

// kernel: change_detection_forward.16
$region0: #{change_detection_forward.16}
  #allocation0 [shape = 'u32[]', space=smem, size = 0x4, offset = 0x4, fixed_abs, tag = 'smem constant byte address 0x4 - core index']
  #allocation1 [shape = 'u32[144,128]{1,0:T(1,128)}', space=vmem, size = 0x12000, scoped, tag = 'internal scratch']
  %s0 = inlined_call_operand.vmem [shape: bf16[8,64], index: 0, kind: input, shape index: {}]
  %s1 = inlined_call_operand.vmem [shape: bf16[64,8], index: 1, kind: input, shape index: {}]
  %s2 = inlined_call_operand.vmem [shape: f32[1,8], index: 2, kind: input, shape index: {}]
  %s3 = inlined_call_operand.vmem [shape: bf16[8,8], index: 3, kind: output, shape index: {}]
  %s4 = sld [smem:[#allocation0]]
  $region22: #{change_detection_forward.16} parent=0
    _
  %s6 = ssub.s32 1, %s4
  %s7 = scalar_select 0, %s6, %s4
  // Predicated region
  $region2: #{change_detection_forward.16} parent=0 // pred_check
    _
  $region3: #{change_detection_forward.16} parent=0 // pred_check_branch
    %9 = sbr.rel (0) target = $region5
  $region4: #{change_detection_forward.16} parent=0 // pred_region
    _
  $region5: #{change_detection_forward.16} parent=0 // pred_fallthru
    _
  // Predicated region
  $region6: #{change_detection_forward.16} parent=0 // pred_check
    _
  $region7: #{change_detection_forward.16} parent=0 // pred_check_branch
    %11 = sbr.rel (0) target = $region9
  $region8: #{change_detection_forward.16} parent=0 // pred_region
    _
  $region9: #{change_detection_forward.16} parent=0 // pred_fallthru
    _
  // Predicated region
  $region10: #{change_detection_forward.16} parent=0 // pred_check
    _
  $region11: #{change_detection_forward.16} parent=0 // pred_check_branch
    %13 = sbr.rel (0) target = $region13
  $region12: #{change_detection_forward.16} parent=0 // pred_region
    _
  $region13: #{change_detection_forward.16} parent=0 // pred_fallthru
    _
  %v15 = vld [vmem:[%s0] sm:$0xf]
  %v16 = vld [vmem:[%s1] sm:$0xf]
  %v17 = vld [vmem:[%s1 + $0x4] sm:$0xf]
  %v18 = vld [vmem:[%s1 + $0x8] sm:$0xf]
  %v19 = vld [vmem:[%s1 + $0xc] sm:$0xf]
  %v20 = vld [vmem:[%s1 + $0x10] sm:$0xf]
  %v21 = vld [vmem:[%s1 + $0x14] sm:$0xf]
  %v22 = vld [vmem:[%s1 + $0x18] sm:$0xf]
  %v23 = vld [vmem:[%s1 + $0x1c] sm:$0xf]
  %v24 = vld [vmem:[%s2] sm:$0x1]
  %v26 = vlaneseq
  %v27 = vshrl.u32 %v26, 7
  %v28 = vsub.s32 0, %v27
  %v29 = vrot.slane %v24, %v28
  %v39 = vunpack.c.l.b16 %v16
  %v40 = vunpack.c.l.b16 %v17
  %v41 = vunpack.c.l.b16 %v18
  %v42 = vunpack.c.l.b16 %v19
  %v43 = vunpack.c.l.b16 %v20
  %v44 = vunpack.c.l.b16 %v21
  %v45 = vunpack.c.l.b16 %v22
  %v46 = vunpack.c.l.b16 %v23
  %v47 = vpack.c.b16 %v40, %v39
  %v48 = vpack.c.b16 %v42, %v41
  %v49 = vpack.c.b16 %v44, %v43
  %v50 = vpack.c.b16 %v46, %v45
  %vm55 = vcmask 523264
  %v57 = vsel %vm55, %v15, 0
  %59 = vmatprep.subr.bf16.mxu0 0
  %60 = vmatpush1.bf16.msra.mxu0 0
  %61 = vmatprep.subr.bf16.mxu0 0
  %62 = vmatpush1.bf16.msra.mxu0 0
  %63 = vmatprep.subr.bf16.mxu0 0
  %64 = vmatpush1.bf16.msra.mxu0 0
  %65 = vmatprep.subr.bf16.mxu0 0
  %66 = vmatpush1.bf16.msra.mxu0 0
  %67 = vmatprep.subr.bf16.mxu0 0
  %68 = vmatpush1.bf16.msra.mxu0 %v50
  %69 = vmatprep.subr.bf16.mxu0 0
  %70 = vmatpush1.bf16.msra.mxu0 %v49
  %71 = vmatprep.subr.bf16.mxu0 0
  %72 = vmatpush1.bf16.msra.mxu0 %v48
  %73 = vmatprep.subr.bf16.mxu0 0
  %74 = vmatpush1.bf16.msra.mxu0 %v47
  %75 = vmatprep.subr.bf16.mxu0 0
  %76 = vmatpush2.bf16.msra.mxu0 0
  %77 = vmatprep.subr.bf16.mxu0 0
  %78 = vmatpush2.bf16.msra.mxu0 0
  %79 = vmatprep.subr.bf16.mxu0 0
  %80 = vmatpush2.bf16.msra.mxu0 0
  %81 = vmatprep.subr.bf16.mxu0 0
  %82 = vmatpush2.bf16.msra.mxu0 0
  %83 = vmatprep.subr.bf16.mxu0 0
  %84 = vmatpush2.bf16.msra.mxu0 0
  %85 = vmatprep.subr.bf16.mxu0 0
  %86 = vmatpush2.bf16.msra.mxu0 0
  %87 = vmatprep.subr.bf16.mxu0 0
  %88 = vmatpush2.bf16.msra.mxu0 0
  %89 = vmatprep.subr.bf16.mxu0 0
  %90 = vmatpush2.bf16.msra.mxu0 0
  %91 = vmatprep.mubr.bf16.mxu0 0
  %92 = vmatmul.mubr.bf16.gmra.mxu0 %v57
  %v93 = vpop.f32.mrf.mxu0
  %v94 = vadd.f32 %v29, %v93
  %v95 = vpop.f32.mrf.mxu0
  %v96 = vpop.f32.mrf.mxu0
  %v97 = vpop.f32.mrf.mxu0
  %98 = vdwg.mxu0
  %v99 = vmax.f32 %v94, 0.0
  %v100 = vpack.c.bf16 %v99, %v99
  %vm101 = vcmask 60416
  %102 = vst.msk [vmem:[%s3] sm:$0xf] %vm101, %v100
  // Predicated region
  $region14: #{change_detection_forward.16} parent=0 // pred_check
    _
  $region15: #{change_detection_forward.16} parent=0 // pred_check_branch
    %104 = sbr.rel (0) target = $region17
  $region16: #{change_detection_forward.16} parent=0 // pred_region
    _
  $region17: #{change_detection_forward.16} parent=0 // pred_fallthru
    _
  // Predicated region
  $region18: #{change_detection_forward.16} parent=0 // pred_check
    _
  $region19: #{change_detection_forward.16} parent=0 // pred_check_branch
    %106 = sbr.rel (0) target = $region21
  $region20: #{change_detection_forward.16} parent=0 // pred_region
    _
  $region21: #{change_detection_forward.16} parent=0 // pred_fallthru
    _

// kernel: change_detection_forward.12
$region0: #{change_detection_forward.12}
  #allocation0 [shape = 'u32[]', space=smem, size = 0x4, offset = 0x4, fixed_abs, tag = 'smem constant byte address 0x4 - core index']
  #allocation1 [shape = 'u32[144,128]{1,0:T(1,128)}', space=vmem, size = 0x12000, scoped, tag = 'internal scratch']
  %s0 = inlined_call_operand.vmem [shape: bf16[16,144], index: 0, kind: input, shape index: {}]
  %s1 = inlined_call_operand.vmem [shape: bf16[144,32], index: 1, kind: input, shape index: {}]
  %s2 = inlined_call_operand.vmem [shape: f32[1,32], index: 2, kind: input, shape index: {}]
  %s3 = inlined_call_operand.vmem [shape: bf16[16,32], index: 3, kind: output, shape index: {}]
  %s4 = sld [smem:[#allocation0]]
  $region22: #{change_detection_forward.12} parent=0
    _
  %s6 = ssub.s32 1, %s4
  %s7 = scalar_select 0, %s6, %s4
  // Predicated region
  $region2: #{change_detection_forward.12} parent=0 // pred_check
    _
  $region3: #{change_detection_forward.12} parent=0 // pred_check_branch
    %9 = sbr.rel (0) target = $region5
  $region4: #{change_detection_forward.12} parent=0 // pred_region
    _
  $region5: #{change_detection_forward.12} parent=0 // pred_fallthru
    _
  // Predicated region
  $region6: #{change_detection_forward.12} parent=0 // pred_check
    _
  $region7: #{change_detection_forward.12} parent=0 // pred_check_branch
    %11 = sbr.rel (0) target = $region9
  $region8: #{change_detection_forward.12} parent=0 // pred_region
    _
  $region9: #{change_detection_forward.12} parent=0 // pred_fallthru
    _
  // Predicated region
  $region10: #{change_detection_forward.12} parent=0 // pred_check
    _
  $region11: #{change_detection_forward.12} parent=0 // pred_check_branch
    %13 = sbr.rel (0) target = $region13
  $region12: #{change_detection_forward.12} parent=0 // pred_region
    _
  $region13: #{change_detection_forward.12} parent=0 // pred_fallthru
    _
  %v15 = vld [vmem:[%s0] sm:$0xff]
  %v16 = vld [vmem:[%s0 + $0x8] sm:$0xff]
  %v17 = vld [vmem:[%s1] sm:$0xf]
  %v18 = vld [vmem:[%s1 + $0x4] sm:$0xf]
  %v19 = vld [vmem:[%s1 + $0x8] sm:$0xf]
  %v20 = vld [vmem:[%s1 + $0xc] sm:$0xf]
  %v21 = vld [vmem:[%s1 + $0x10] sm:$0xf]
  %v22 = vld [vmem:[%s1 + $0x14] sm:$0xf]
  %v23 = vld [vmem:[%s1 + $0x18] sm:$0xf]
  %v24 = vld [vmem:[%s1 + $0x1c] sm:$0xf]
  %v25 = vld [vmem:[%s1 + $0x20] sm:$0xf]
  %v26 = vld [vmem:[%s1 + $0x24] sm:$0xf]
  %v27 = vld [vmem:[%s1 + $0x28] sm:$0xf]
  %v28 = vld [vmem:[%s1 + $0x2c] sm:$0xf]
  %v29 = vld [vmem:[%s1 + $0x30] sm:$0xf]
  %v30 = vld [vmem:[%s1 + $0x34] sm:$0xf]
  %v31 = vld [vmem:[%s1 + $0x38] sm:$0xf]
  %v32 = vld [vmem:[%s1 + $0x3c] sm:$0xf]
  %v33 = vld [vmem:[%s1 + $0x40] sm:$0xf]
  %v34 = vld [vmem:[%s1 + $0x44] sm:$0xf]
  %v35 = vld [vmem:[%s2] sm:$0x1]
  %v37 = vlaneseq
  %v38 = vshrl.u32 %v37, 7
  %v39 = vsub.s32 0, %v38
  %v40 = vrot.slane %v35, %v39
  %v44 = vunpack.c.l.b16 %v15
  %v45 = vunpack.c.h.b16 %v15
  %v46 = vunpack.c.l.b16 %v16
  %v47 = vunpack.c.h.b16 %v16
  %v48 = vpack.c.b16 %v46, %v44
  %v49 = vpack.c.b16 %v47, %v45
  %v69 = vunpack.c.l.b16 %v17
  %v70 = vunpack.c.l.b16 %v18
  %v71 = vunpack.c.l.b16 %v19
  %v72 = vunpack.c.l.b16 %v20
  %v73 = vunpack.c.l.b16 %v21
  %v74 = vunpack.c.l.b16 %v22
  %v75 = vunpack.c.l.b16 %v23
  %v76 = vunpack.c.l.b16 %v24
  %v77 = vunpack.c.l.b16 %v25
  %v78 = vunpack.c.l.b16 %v26
  %v79 = vunpack.c.l.b16 %v27
  %v80 = vunpack.c.l.b16 %v28
  %v81 = vunpack.c.l.b16 %v29
  %v82 = vunpack.c.l.b16 %v30
  %v83 = vunpack.c.l.b16 %v31
  %v84 = vunpack.c.l.b16 %v32
  %v85 = vunpack.c.l.b16 %v33
  %v86 = vunpack.c.l.b16 %v34
  %v87 = vpack.c.b16 %v70, %v69
  %v88 = vpack.c.b16 %v72, %v71
  %v89 = vpack.c.b16 %v74, %v73
  %v90 = vpack.c.b16 %v76, %v75
  %v91 = vpack.c.b16 %v78, %v77
  %v92 = vpack.c.b16 %v80, %v79
  %v93 = vpack.c.b16 %v82, %v81
  %v94 = vpack.c.b16 %v84, %v83
  %v95 = vpack.c.b16 %v86, %v85
  %vm105 = vcmask 130048
  %v107 = vsel %vm105, %v49, 0
  %109 = vmatprep.subr.bf16.mxu0 0
  %110 = vmatpush1.bf16.msra.mxu0 %v94
  %111 = vmatprep.subr.bf16.mxu0 0
  %112 = vmatpush1.bf16.msra.mxu0 %v93
  %113 = vmatprep.subr.bf16.mxu0 0
  %114 = vmatpush1.bf16.msra.mxu0 %v92
  %115 = vmatprep.subr.bf16.mxu0 0
  %116 = vmatpush1.bf16.msra.mxu0 %v91
  %117 = vmatprep.subr.bf16.mxu0 0
  %118 = vmatpush1.bf16.msra.mxu0 %v90
  %119 = vmatprep.subr.bf16.mxu0 0
  %120 = vmatpush1.bf16.msra.mxu0 %v89
  %121 = vmatprep.subr.bf16.mxu0 0
  %122 = vmatpush1.bf16.msra.mxu0 %v88
  %123 = vmatprep.subr.bf16.mxu0 0
  %124 = vmatpush1.bf16.msra.mxu0 %v87
  %125 = vmatprep.subr.bf16.mxu0 0
  %126 = vmatpush2.bf16.msra.mxu0 0
  %127 = vmatprep.subr.bf16.mxu0 0
  %128 = vmatpush2.bf16.msra.mxu0 0
  %129 = vmatprep.subr.bf16.mxu0 0
  %130 = vmatpush2.bf16.msra.mxu0 0
  %131 = vmatprep.subr.bf16.mxu0 0
  %132 = vmatpush2.bf16.msra.mxu0 0
  %133 = vmatprep.subr.bf16.mxu0 0
  %134 = vmatpush2.bf16.msra.mxu0 0
  %135 = vmatprep.subr.bf16.mxu0 0
  %136 = vmatpush2.bf16.msra.mxu0 0
  %137 = vmatprep.subr.bf16.mxu0 0
  %138 = vmatpush2.bf16.msra.mxu0 0
  %139 = vmatprep.subr.bf16.mxu0 0
  %140 = vmatpush2.bf16.msra.mxu0 %v95
  %141 = vmatprep.mubr.bf16.mxu0 %v107
  %142 = vmatmul.mubr.bf16.gmra.mxu0 %v48
  %v143 = vpop.f32.mrf.mxu0
  %v144 = vadd.f32 %v40, %v143
  %v145 = vpop.f32.mrf.mxu0
  %v146 = vpop.f32.mrf.mxu0
  %v147 = vadd.f32 %v40, %v146
  %v148 = vpop.f32.mrf.mxu0
  %149 = vdwg.mxu0
  %v150 = vmax.f32 %v144, 0.0
  %v151 = vmax.f32 %v147, 0.0
  %v152 = vpack.c.bf16 %v151, %v150
  %v154 = vunpack.c.l.b16 %v152
  %v155 = vunpack.c.h.b16 %v152
  %v156 = vpack.c.b16 %v154, %v154
  %v157 = vpack.c.b16 %v155, %v155
  %vm160 = vcmask 257024
  %161 = vst.msk [vmem:[%s3] sm:$0xf] %vm160, %v156
  %162 = vst.msk [vmem:[%s3 + $0x4] sm:$0xf] %vm160, %v157
  // Predicated region
  $region14: #{change_detection_forward.12} parent=0 // pred_check
    _
  $region15: #{change_detection_forward.12} parent=0 // pred_check_branch
    %164 = sbr.rel (0) target = $region17
  $region16: #{change_detection_forward.12} parent=0 // pred_region
    _
  $region17: #{change_detection_forward.12} parent=0 // pred_fallthru
    _
  // Predicated region
  $region18: #{change_detection_forward.12} parent=0 // pred_check
    _
  $region19: #{change_detection_forward.12} parent=0 // pred_check_branch
    %166 = sbr.rel (0) target = $region21
  $region20: #{change_detection_forward.12} parent=0 // pred_region
    _
  $region21: #{change_detection_forward.12} parent=0 // pred_fallthru
    _

// kernel: change_detection_forward.13
$region0: #{change_detection_forward.13}
  #allocation0 [shape = 'u32[]', space=smem, size = 0x4, offset = 0x4, fixed_abs, tag = 'smem constant byte address 0x4 - core index']
  #allocation1 [shape = 'u32[144,128]{1,0:T(1,128)}', space=vmem, size = 0x12000, scoped, tag = 'internal scratch']
  %s0 = inlined_call_operand.vmem [shape: bf16[4,288], index: 0, kind: input, shape index: {}]
  %s1 = inlined_call_operand.vmem [shape: bf16[288,64], index: 1, kind: input, shape index: {}]
  %s2 = inlined_call_operand.vmem [shape: f32[1,64], index: 2, kind: input, shape index: {}]
  %s3 = inlined_call_operand.vmem [shape: bf16[4,64], index: 3, kind: output, shape index: {}]
  %s4 = sld [smem:[#allocation0]]
  $region22: #{change_detection_forward.13} parent=0
    _
  %s6 = ssub.s32 1, %s4
  %s7 = scalar_select 0, %s6, %s4
  // Predicated region
  $region2: #{change_detection_forward.13} parent=0 // pred_check
    _
  $region3: #{change_detection_forward.13} parent=0 // pred_check_branch
    %9 = sbr.rel (0) target = $region5
  $region4: #{change_detection_forward.13} parent=0 // pred_region
    _
  $region5: #{change_detection_forward.13} parent=0 // pred_fallthru
    _
  // Predicated region
  $region6: #{change_detection_forward.13} parent=0 // pred_check
    _
  $region7: #{change_detection_forward.13} parent=0 // pred_check_branch
    %11 = sbr.rel (0) target = $region9
  $region8: #{change_detection_forward.13} parent=0 // pred_region
    _
  $region9: #{change_detection_forward.13} parent=0 // pred_fallthru
    _
  // Predicated region
  $region10: #{change_detection_forward.13} parent=0 // pred_check
    _
  $region11: #{change_detection_forward.13} parent=0 // pred_check_branch
    %13 = sbr.rel (0) target = $region13
  $region12: #{change_detection_forward.13} parent=0 // pred_region
    _
  $region13: #{change_detection_forward.13} parent=0 // pred_fallthru
    _
  %v15 = vld [vmem:[%s0] sm:$0x3f]
  %v16 = vld [vmem:[%s1] sm:$0xf]
  %v17 = vld [vmem:[%s1 + $0x4] sm:$0xf]
  %v18 = vld [vmem:[%s1 + $0x8] sm:$0xf]
  %v19 = vld [vmem:[%s1 + $0xc] sm:$0xf]
  %v20 = vld [vmem:[%s1 + $0x10] sm:$0xf]
  %v21 = vld [vmem:[%s1 + $0x14] sm:$0xf]
  %v22 = vld [vmem:[%s1 + $0x18] sm:$0xf]
  %v23 = vld [vmem:[%s1 + $0x1c] sm:$0xf]
  %v24 = vld [vmem:[%s1 + $0x20] sm:$0xf]
  %v25 = vld [vmem:[%s1 + $0x24] sm:$0xf]
  %v26 = vld [vmem:[%s1 + $0x28] sm:$0xf]
  %v27 = vld [vmem:[%s1 + $0x2c] sm:$0xf]
  %v28 = vld [vmem:[%s1 + $0x30] sm:$0xf]
  %v29 = vld [vmem:[%s1 + $0x34] sm:$0xf]
  %v30 = vld [vmem:[%s1 + $0x38] sm:$0xf]
  %v31 = vld [vmem:[%s1 + $0x3c] sm:$0xf]
  %v32 = vld [vmem:[%s1 + $0x40] sm:$0xf]
  %v33 = vld [vmem:[%s1 + $0x44] sm:$0xf]
  %v34 = vld [vmem:[%s1 + $0x48] sm:$0xf]
  %v35 = vld [vmem:[%s1 + $0x4c] sm:$0xf]
  %v36 = vld [vmem:[%s1 + $0x50] sm:$0xf]
  %v37 = vld [vmem:[%s1 + $0x54] sm:$0xf]
  %v38 = vld [vmem:[%s1 + $0x58] sm:$0xf]
  %v39 = vld [vmem:[%s1 + $0x5c] sm:$0xf]
  %v40 = vld [vmem:[%s1 + $0x60] sm:$0xf]
  %v41 = vld [vmem:[%s1 + $0x64] sm:$0xf]
  %v42 = vld [vmem:[%s1 + $0x68] sm:$0xf]
  %v43 = vld [vmem:[%s1 + $0x6c] sm:$0xf]
  %v44 = vld [vmem:[%s1 + $0x70] sm:$0xf]
  %v45 = vld [vmem:[%s1 + $0x74] sm:$0xf]
  %v46 = vld [vmem:[%s1 + $0x78] sm:$0xf]
  %v47 = vld [vmem:[%s1 + $0x7c] sm:$0xf]
  %v48 = vld [vmem:[%s1 + $0x80] sm:$0xf]
  %v49 = vld [vmem:[%s1 + $0x84] sm:$0xf]
  %v50 = vld [vmem:[%s1 + $0x88] sm:$0xf]
  %v51 = vld [vmem:[%s1 + $0x8c] sm:$0xf]
  %v52 = vld [vmem:[%s2] sm:$0x1]
  %v54 = vlaneseq
  %v55 = vshrl.u32 %v54, 7
  %v56 = vsub.s32 0, %v55
  %v57 = vrot.slane %v52, %v56
  %v60 = vcombine.high %v15, %v15
  %v62 = vunpack.c.l.s4 1983009808
  %v63 = vunpack.c.0.s8 %v62
  %v64 = vlaneseq
  %v65 = vshrl.u32 %v64, 7
  %v66 = vsub.s32 %v63, %v65
  %v67 = vrot.slane %v15, %v66
  %v69 = vunpack.c.l.s4 1983009808
  %v70 = vunpack.c.0.s8 %v69
  %v71 = vlaneseq
  %v72 = vshrl.u32 %v71, 7
  %v73 = vsub.s32 %v70, %v72
  %v74 = vrot.slane %v60, %v73
  %v75 = vcombine.high %v67, %v67
  %v114 = vunpack.c.l.b16 %v16
  %v115 = vunpack.c.l.b16 %v17
  %v116 = vunpack.c.l.b16 %v18
  %v117 = vunpack.c.l.b16 %v19
  %v118 = vunpack.c.l.b16 %v20
  %v119 = vunpack.c.l.b16 %v21
  %v120 = vunpack.c.l.b16 %v22
  %v121 = vunpack.c.l.b16 %v23
  %v122 = vunpack.c.l.b16 %v24
  %v123 = vunpack.c.l.b16 %v25
  %v124 = vunpack.c.l.b16 %v26
  %v125 = vunpack.c.l.b16 %v27
  %v126 = vunpack.c.l.b16 %v28
  %v127 = vunpack.c.l.b16 %v29
  %v128 = vunpack.c.l.b16 %v30
  %v129 = vunpack.c.l.b16 %v31
  %v130 = vunpack.c.l.b16 %v32
  %v131 = vunpack.c.l.b16 %v33
  %v132 = vunpack.c.l.b16 %v34
  %v133 = vunpack.c.l.b16 %v35
  %v134 = vunpack.c.l.b16 %v36
  %v135 = vunpack.c.l.b16 %v37
  %v136 = vunpack.c.l.b16 %v38
  %v137 = vunpack.c.l.b16 %v39
  %v138 = vunpack.c.l.b16 %v40
  %v139 = vunpack.c.l.b16 %v41
  %v140 = vunpack.c.l.b16 %v42
  %v141 = vunpack.c.l.b16 %v43
  %v142 = vunpack.c.l.b16 %v44
  %v143 = vunpack.c.l.b16 %v45
  %v144 = vunpack.c.l.b16 %v46
  %v145 = vunpack.c.l.b16 %v47
  %v146 = vunpack.c.l.b16 %v48
  %v147 = vunpack.c.l.b16 %v49
  %v148 = vunpack.c.l.b16 %v50
  %v149 = vunpack.c.l.b16 %v51
  %v150 = vpack.c.b16 %v115, %v114
  %v151 = vpack.c.b16 %v117, %v116
  %v152 = vpack.c.b16 %v119, %v118
  %v153 = vpack.c.b16 %v121, %v120
  %v154 = vpack.c.b16 %v123, %v122
  %v155 = vpack.c.b16 %v125, %v124
  %v156 = vpack.c.b16 %v127, %v126
  %v157 = vpack.c.b16 %v129, %v128
  %v158 = vpack.c.b16 %v131, %v130
  %v159 = vpack.c.b16 %v133, %v132
  %v160 = vpack.c.b16 %v135, %v134
  %v161 = vpack.c.b16 %v137, %v136
  %v162 = vpack.c.b16 %v139, %v138
  %v163 = vpack.c.b16 %v141, %v140
  %v164 = vpack.c.b16 %v143, %v142
  %v165 = vpack.c.b16 %v145, %v144
  %v166 = vpack.c.b16 %v147, %v146
  %v167 = vpack.c.b16 %v149, %v148
  %vm186 = vcmask 261120
  %v188 = vsel %vm186, %v74, 0
  %190 = vmatprep.subr.bf16.mxu0 0
  %191 = vmatpush1.bf16.msra.mxu0 %v157
  %192 = vmatprep.subr.bf16.mxu0 0
  %193 = vmatpush1.bf16.msra.mxu0 %v156
  %194 = vmatprep.subr.bf16.mxu0 0
  %195 = vmatpush1.bf16.msra.mxu0 %v155
  %196 = vmatprep.subr.bf16.mxu0 0
  %197 = vmatpush1.bf16.msra.mxu0 %v154
  %198 = vmatprep.subr.bf16.mxu0 0
  %199 = vmatpush1.bf16.msra.mxu0 %v153
  %200 = vmatprep.subr.bf16.mxu0 0
  %201 = vmatpush1.bf16.msra.mxu0 %v152
  %202 = vmatprep.subr.bf16.mxu0 0
  %203 = vmatpush1.bf16.msra.mxu0 %v151
  %204 = vmatprep.subr.bf16.mxu0 0
  %205 = vmatpush1.bf16.msra.mxu0 %v150
  %206 = vmatprep.subr.bf16.mxu0 0
  %207 = vmatpush2.bf16.msra.mxu0 %v165
  %208 = vmatprep.subr.bf16.mxu0 0
  %209 = vmatpush2.bf16.msra.mxu0 %v164
  %210 = vmatprep.subr.bf16.mxu0 0
  %211 = vmatpush2.bf16.msra.mxu0 %v163
  %212 = vmatprep.subr.bf16.mxu0 0
  %213 = vmatpush2.bf16.msra.mxu0 %v162
  %214 = vmatprep.subr.bf16.mxu0 0
  %215 = vmatpush2.bf16.msra.mxu0 %v161
  %216 = vmatprep.subr.bf16.mxu0 0
  %217 = vmatpush2.bf16.msra.mxu0 %v160
  %218 = vmatprep.subr.bf16.mxu0 0
  %219 = vmatpush2.bf16.msra.mxu0 %v159
  %220 = vmatprep.subr.bf16.mxu0 0
  %221 = vmatpush2.bf16.msra.mxu0 %v158
  %222 = vmatprep.mubr.bf16.mxu0 %v75
  %223 = vmatmul.mubr.bf16.gmra.mxu0 %v67
  %v224 = vpop.f32.mrf.mxu0
  %v225 = vadd.f32 %v57, %v224
  %v226 = vpop.f32.mrf.mxu0
  %v227 = vpop.f32.mrf.mxu0
  %v228 = vpop.f32.mrf.mxu0
  %229 = vdwg.mxu0
  %230 = vmatprep.subr.bf16.mxu0 0
  %231 = vmatpush1.bf16.msra.mxu0 0
  %232 = vmatprep.subr.bf16.mxu0 0
  %233 = vmatpush1.bf16.msra.mxu0 0
  %234 = vmatprep.subr.bf16.mxu0 0
  %235 = vmatpush1.bf16.msra.mxu0 0
  %236 = vmatprep.subr.bf16.mxu0 0
  %237 = vmatpush1.bf16.msra.mxu0 0
  %238 = vmatprep.subr.bf16.mxu0 0
  %239 = vmatpush1.bf16.msra.mxu0 0
  %240 = vmatprep.subr.bf16.mxu0 0
  %241 = vmatpush1.bf16.msra.mxu0 0
  %242 = vmatprep.subr.bf16.mxu0 0
  %243 = vmatpush1.bf16.msra.mxu0 %v167
  %244 = vmatprep.subr.bf16.mxu0 0
  %245 = vmatpush1.bf16.msra.mxu0 %v166
  %246 = vmatprep.subr.bf16.mxu0 0
  %247 = vmatpush2.bf16.msra.mxu0 0
  %248 = vmatprep.subr.bf16.mxu0 0
  %249 = vmatpush2.bf16.msra.mxu0 0
  %250 = vmatprep.subr.bf16.mxu0 0
  %251 = vmatpush2.bf16.msra.mxu0 0
  %252 = vmatprep.subr.bf16.mxu0 0
  %253 = vmatpush2.bf16.msra.mxu0 0
  %254 = vmatprep.subr.bf16.mxu0 0
  %255 = vmatpush2.bf16.msra.mxu0 0
  %256 = vmatprep.subr.bf16.mxu0 0
  %257 = vmatpush2.bf16.msra.mxu0 0
  %258 = vmatprep.subr.bf16.mxu0 0
  %259 = vmatpush2.bf16.msra.mxu0 0
  %260 = vmatprep.subr.bf16.mxu0 0
  %261 = vmatpush2.bf16.msra.mxu0 0
  %262 = vmatprep.mubr.bf16.mxu0 0
  %263 = vmatmul.mubr.bf16.gmra.mxu0 %v188
  %v264 = vpop.f32.mrf.mxu0
  %v265 = vadd.f32 %v225, %v264
  %v266 = vpop.f32.mrf.mxu0
  %v267 = vpop.f32.mrf.mxu0
  %v268 = vpop.f32.mrf.mxu0
  %269 = vdwg.mxu0
  %v270 = vmax.f32 %v265, 0.0
  %v271 = vpack.c.bf16 %v270, %v270
  %vm272 = vcmask 517120
  %273 = vst.msk [vmem:[%s3] sm:$0x3] %vm272, %v271
  // Predicated region
  $region14: #{change_detection_forward.13} parent=0 // pred_check
    _
  $region15: #{change_detection_forward.13} parent=0 // pred_check_branch
    %275 = sbr.rel (0) target = $region17
  $region16: #{change_detection_forward.13} parent=0 // pred_region
    _
  $region17: #{change_detection_forward.13} parent=0 // pred_fallthru
    _
  // Predicated region
  $region18: #{change_detection_forward.13} parent=0 // pred_check
    _
  $region19: #{change_detection_forward.13} parent=0 // pred_check_branch
    %277 = sbr.rel (0) target = $region21
  $region20: #{change_detection_forward.13} parent=0 // pred_region
    _
  $region21: #{change_detection_forward.13} parent=0 // pred_fallthru
    _

// kernel: change_detection_forward.17
$region0: #{change_detection_forward.17}
  #allocation0 [shape = 'u32[]', space=smem, size = 0x4, offset = 0x4, fixed_abs, tag = 'smem constant byte address 0x4 - core index']
  #allocation1 [shape = 'u32[144,128]{1,0:T(1,128)}', space=vmem, size = 0x12000, scoped, tag = 'internal scratch']
  %s0 = inlined_call_operand.vmem [shape: bf16[2,128], index: 0, kind: input, shape index: {}]
  %s1 = inlined_call_operand.vmem [shape: bf16[128,8], index: 1, kind: input, shape index: {}]
  %s2 = inlined_call_operand.vmem [shape: f32[1,8], index: 2, kind: input, shape index: {}]
  %s3 = inlined_call_operand.vmem [shape: bf16[2,8], index: 3, kind: output, shape index: {}]
  %s4 = sld [smem:[#allocation0]]
  $region22: #{change_detection_forward.17} parent=0
    _
  %s6 = ssub.s32 1, %s4
  %s7 = scalar_select 0, %s6, %s4
  // Predicated region
  $region2: #{change_detection_forward.17} parent=0 // pred_check
    _
  $region3: #{change_detection_forward.17} parent=0 // pred_check_branch
    %9 = sbr.rel (0) target = $region5
  $region4: #{change_detection_forward.17} parent=0 // pred_region
    _
  $region5: #{change_detection_forward.17} parent=0 // pred_fallthru
    _
  // Predicated region
  $region6: #{change_detection_forward.17} parent=0 // pred_check
    _
  $region7: #{change_detection_forward.17} parent=0 // pred_check_branch
    %11 = sbr.rel (0) target = $region9
  $region8: #{change_detection_forward.17} parent=0 // pred_region
    _
  $region9: #{change_detection_forward.17} parent=0 // pred_fallthru
    _
  // Predicated region
  $region10: #{change_detection_forward.17} parent=0 // pred_check
    _
  $region11: #{change_detection_forward.17} parent=0 // pred_check_branch
    %13 = sbr.rel (0) target = $region13
  $region12: #{change_detection_forward.17} parent=0 // pred_region
    _
  $region13: #{change_detection_forward.17} parent=0 // pred_fallthru
    _
  %v15 = vld [vmem:[%s0] sm:$0x1]
  %v16 = vld [vmem:[%s1] sm:$0xf]
  %v17 = vld [vmem:[%s1 + $0x4] sm:$0xf]
  %v18 = vld [vmem:[%s1 + $0x8] sm:$0xf]
  %v19 = vld [vmem:[%s1 + $0xc] sm:$0xf]
  %v20 = vld [vmem:[%s1 + $0x10] sm:$0xf]
  %v21 = vld [vmem:[%s1 + $0x14] sm:$0xf]
  %v22 = vld [vmem:[%s1 + $0x18] sm:$0xf]
  %v23 = vld [vmem:[%s1 + $0x1c] sm:$0xf]
  %v24 = vld [vmem:[%s1 + $0x20] sm:$0xf]
  %v25 = vld [vmem:[%s1 + $0x24] sm:$0xf]
  %v26 = vld [vmem:[%s1 + $0x28] sm:$0xf]
  %v27 = vld [vmem:[%s1 + $0x2c] sm:$0xf]
  %v28 = vld [vmem:[%s1 + $0x30] sm:$0xf]
  %v29 = vld [vmem:[%s1 + $0x34] sm:$0xf]
  %v30 = vld [vmem:[%s1 + $0x38] sm:$0xf]
  %v31 = vld [vmem:[%s1 + $0x3c] sm:$0xf]
  %v32 = vld [vmem:[%s2] sm:$0x1]
  %v34 = vlaneseq
  %v35 = vshrl.u32 %v34, 7
  %v36 = vsub.s32 0, %v35
  %v37 = vrot.slane %v32, %v36
  %v55 = vunpack.c.l.b16 %v16
  %v56 = vunpack.c.l.b16 %v17
  %v57 = vunpack.c.l.b16 %v18
  %v58 = vunpack.c.l.b16 %v19
  %v59 = vunpack.c.l.b16 %v20
  %v60 = vunpack.c.l.b16 %v21
  %v61 = vunpack.c.l.b16 %v22
  %v62 = vunpack.c.l.b16 %v23
  %v63 = vunpack.c.l.b16 %v24
  %v64 = vunpack.c.l.b16 %v25
  %v65 = vunpack.c.l.b16 %v26
  %v66 = vunpack.c.l.b16 %v27
  %v67 = vunpack.c.l.b16 %v28
  %v68 = vunpack.c.l.b16 %v29
  %v69 = vunpack.c.l.b16 %v30
  %v70 = vunpack.c.l.b16 %v31
  %v71 = vpack.c.b16 %v56, %v55
  %v72 = vpack.c.b16 %v58, %v57
  %v73 = vpack.c.b16 %v60, %v59
  %v74 = vpack.c.b16 %v62, %v61
  %v75 = vpack.c.b16 %v64, %v63
  %v76 = vpack.c.b16 %v66, %v65
  %v77 = vpack.c.b16 %v68, %v67
  %v78 = vpack.c.b16 %v70, %v69
  %87 = vmatprep.subr.bf16.mxu0 0
  %88 = vmatpush1.bf16.msra.mxu0 %v78
  %89 = vmatprep.subr.bf16.mxu0 0
  %90 = vmatpush1.bf16.msra.mxu0 %v77
  %91 = vmatprep.subr.bf16.mxu0 0
  %92 = vmatpush1.bf16.msra.mxu0 %v76
  %93 = vmatprep.subr.bf16.mxu0 0
  %94 = vmatpush1.bf16.msra.mxu0 %v75
  %95 = vmatprep.subr.bf16.mxu0 0
  %96 = vmatpush1.bf16.msra.mxu0 %v74
  %97 = vmatprep.subr.bf16.mxu0 0
  %98 = vmatpush1.bf16.msra.mxu0 %v73
  %99 = vmatprep.subr.bf16.mxu0 0
  %100 = vmatpush1.bf16.msra.mxu0 %v72
  %101 = vmatprep.subr.bf16.mxu0 0
  %102 = vmatpush1.bf16.msra.mxu0 %v71
  %103 = vmatprep.subr.bf16.mxu0 0
  %104 = vmatpush2.bf16.msra.mxu0 0
  %105 = vmatprep.subr.bf16.mxu0 0
  %106 = vmatpush2.bf16.msra.mxu0 0
  %107 = vmatprep.subr.bf16.mxu0 0
  %108 = vmatpush2.bf16.msra.mxu0 0
  %109 = vmatprep.subr.bf16.mxu0 0
  %110 = vmatpush2.bf16.msra.mxu0 0
  %111 = vmatprep.subr.bf16.mxu0 0
  %112 = vmatpush2.bf16.msra.mxu0 0
  %113 = vmatprep.subr.bf16.mxu0 0
  %114 = vmatpush2.bf16.msra.mxu0 0
  %115 = vmatprep.subr.bf16.mxu0 0
  %116 = vmatpush2.bf16.msra.mxu0 0
  %117 = vmatprep.subr.bf16.mxu0 0
  %118 = vmatpush2.bf16.msra.mxu0 0
  %119 = vmatprep.mubr.bf16.mxu0 0
  %120 = vmatmul.mubr.bf16.gmra.mxu0 %v15
  %v121 = vpop.f32.mrf.mxu0
  %v122 = vadd.f32 %v37, %v121
  %v123 = vpop.f32.mrf.mxu0
  %v124 = vpop.f32.mrf.mxu0
  %v125 = vpop.f32.mrf.mxu0
  %126 = vdwg.mxu0
  %v127 = vmax.f32 %v122, 0.0
  %v128 = vpack.c.bf16 %v127, %v127
  %vm129 = vcmask 57344
  %130 = vst.msk [vmem:[%s3] sm:$0x1] %vm129, %v128
  // Predicated region
  $region14: #{change_detection_forward.17} parent=0 // pred_check
    _
  $region15: #{change_detection_forward.17} parent=0 // pred_check_branch
    %132 = sbr.rel (0) target = $region17
  $region16: #{change_detection_forward.17} parent=0 // pred_region
    _
  $region17: #{change_detection_forward.17} parent=0 // pred_fallthru
    _
  // Predicated region
  $region18: #{change_detection_forward.17} parent=0 // pred_check
    _
  $region19: #{change_detection_forward.17} parent=0 // pred_check_branch
    %134 = sbr.rel (0) target = $region21
  $region20: #{change_detection_forward.17} parent=0 // pred_region
    _
  $region21: #{change_detection_forward.17} parent=0 // pred_fallthru
    _

// kernel: change_detection_forward.18
$region0: #{change_detection_forward.18}
  #allocation0 [shape = 'u32[]', space=smem, size = 0x4, offset = 0x4, fixed_abs, tag = 'smem constant byte address 0x4 - core index']
  #allocation1 [shape = 'u32[144,128]{1,0:T(1,128)}', space=vmem, size = 0x12000, scoped, tag = 'internal scratch']
  %s0 = inlined_call_operand.vmem [shape: bf16[2,110,8], index: 0, kind: input, shape index: {}]
  %s1 = inlined_call_operand.vmem [shape: bf16[9,8,8], index: 1, kind: input, shape index: {}]
  %s2 = inlined_call_operand.vmem [shape: f32[1,8], index: 2, kind: input, shape index: {}]
  %s3 = inlined_call_operand.vmem [shape: bf16[2,80,8], index: 3, kind: output, shape index: {}]
  %s4 = sld [smem:[#allocation0]]
  $region45: #{change_detection_forward.18} parent=0
    _
  %s6 = ssub.s32 1, %s4
  %s7 = scalar_select 0, %s6, %s4
  loop: start=0, step=1, limit=4
  $region2: #{change_detection_forward.18} parent=0 // loop_pre_header
    _
  $region3: #{change_detection_forward.18} parent=0 // loop_header
    %s9 = sphi 0, %s13
    %p10 = scmp.ge.s32.totalorder %s9, 4
    %s19 = sphi 0, %s21
    %s22 = sphi 0, %s19
    %s23 = sphi 0, %s22
    %s39 = sphi 0, %s23
    %s43 = sphi 0, %s43
    %s45 = sphi 0, %s43
    %s46 = sphi 0, %s45
    %s60 = sphi 0, %s46
    %s64 = sphi 0, %s64
    %s66 = sphi 0, %s64
    %s67 = sphi 0, %s66
    %s81 = sphi 0, %s67
    %s87 = sphi 0, %s89
    %s90 = sphi 0, %s87
    %s91 = sphi 0, %s90
    %s107 = sphi 0, %s91
  $region4: #{change_detection_forward.18} parent=0 // loop_header_branch
    %12 = sbr.rel (%p10) target = $region8
  $region5: #{change_detection_forward.18} parent=0 // loop_body
    %s14 = ssub.s32 %s9, 1
    %s15 = ssub.s32 %s9, 2
    %s16 = sadd.s32 %s9, 1
    %s17 = ssub.s32 %s9, %s16
    %p18 = scmp.eq.s32.totalorder %s17, 0
    %s20 = sadd.s32 %s19, 1
    %s21 = scalar_select %p18, %s19, %s20
    %p24 = pneg %p18
    %p25 = scmp.eq.s32.totalorder %s9, 1
    %p26 = por %p24, %p25
    %p27 = scmp.ne.s32.totalorder %s19, %s22
    %p28 = scmp.eq.s32.totalorder %s9, 0
    %p29 = por %p27, %p28
    %p30 = scmp.ne.s32.totalorder %s19, %s22
    %p31 = scmp.eq.s32.totalorder %s14, 1
    %p32 = por %p30, %p31
    %p33 = scmp.ne.s32.totalorder %s22, %s23
    %p34 = scmp.eq.s32.totalorder %s14, 0
    %p35 = por %p33, %p34
    %p36 = scmp.ne.s32.totalorder %s22, %s23
    %p37 = scmp.eq.s32.totalorder %s15, 1
    %p38 = por %p36, %p37
    %p40 = scmp.ne.s32.totalorder %s23, %s39
    %p41 = scmp.eq.s32.totalorder %s15, 0
    %p42 = por %p40, %p41
    %s44 = sadd.s32 %s43, 1
    %p47 = scmp.eq.s32.totalorder %s9, 1
    %p48 = scmp.ne.s32.totalorder %s43, %s45
    %p49 = scmp.eq.s32.totalorder %s9, 0
    %p50 = por %p48, %p49
    %p51 = scmp.ne.s32.totalorder %s43, %s45
    %p52 = scmp.eq.s32.totalorder %s14, 1
    %p53 = por %p51, %p52
    %p54 = scmp.ne.s32.totalorder %s45, %s46
    %p55 = scmp.eq.s32.totalorder %s14, 0
    %p56 = por %p54, %p55
    %p57 = scmp.ne.s32.totalorder %s45, %s46
    %p58 = scmp.eq.s32.totalorder %s15, 1
    %p59 = por %p57, %p58
    %p61 = scmp.ne.s32.totalorder %s46, %s60
    %p62 = scmp.eq.s32.totalorder %s15, 0
    %p63 = por %p61, %p62
    %s65 = sadd.s32 %s64, 1
    %p68 = scmp.eq.s32.totalorder %s9, 1
    %p69 = scmp.ne.s32.totalorder %s64, %s66
    %p70 = scmp.eq.s32.totalorder %s9, 0
    %p71 = por %p69, %p70
    %p72 = scmp.ne.s32.totalorder %s64, %s66
    %p73 = scmp.eq.s32.totalorder %s14, 1
    %p74 = por %p72, %p73
    %p75 = scmp.ne.s32.totalorder %s66, %s67
    %p76 = scmp.eq.s32.totalorder %s14, 0
    %p77 = por %p75, %p76
    %p78 = scmp.ne.s32.totalorder %s66, %s67
    %p79 = scmp.eq.s32.totalorder %s15, 1
    %p80 = por %p78, %p79
    %p82 = scmp.ne.s32.totalorder %s67, %s81
    %p83 = scmp.eq.s32.totalorder %s15, 0
    %p84 = por %p82, %p83
    %s85 = ssub.s32 %s9, %s16
    %p86 = scmp.eq.s32.totalorder %s85, 0
    %s88 = sadd.s32 %s87, 1
    %s89 = scalar_select %p86, %s87, %s88
    %p92 = pneg %p86
    %p93 = scmp.eq.s32.totalorder %s9, 1
    %p94 = por %p92, %p93
    %p95 = scmp.ne.s32.totalorder %s87, %s90
    %p96 = scmp.eq.s32.totalorder %s9, 0
    %p97 = por %p95, %p96
    %p98 = scmp.ne.s32.totalorder %s87, %s90
    %p99 = scmp.eq.s32.totalorder %s14, 1
    %p100 = por %p98, %p99
    %p101 = scmp.ne.s32.totalorder %s90, %s91
    %p102 = scmp.eq.s32.totalorder %s14, 0
    %p103 = por %p101, %p102
    %p104 = scmp.ne.s32.totalorder %s90, %s91
    %p105 = scmp.eq.s32.totalorder %s15, 1
    %p106 = por %p104, %p105
    %p108 = scmp.ne.s32.totalorder %s91, %s107
    %p109 = scmp.eq.s32.totalorder %s15, 0
    %p110 = por %p108, %p109
    %p111 = scmp.le.s32.totalorder 1, %s9
    %p112 = scmp.lt.s32.totalorder %s9, 3
    %p113 = pnand %p111, %p112
    %p114 = pneg %p113
    // Predicated region
    $region9: #{change_detection_forward.18} parent=5 // pred_check
      _
    $region10: #{change_detection_forward.18} parent=5 // pred_check_branch
      %116 = sbr.rel (%p113) target = $region12
    $region11: #{change_detection_forward.18} parent=5 // pred_region
      %s117 = ssub.s32 %s9, 1
      // Predicated region
      $region13: #{change_detection_forward.18} parent=11 // pred_check
        %p118 = pneg %p56
      $region14: #{change_detection_forward.18} parent=11 // pred_check_branch
        %120 = sbr.rel (%p118) target = $region16
      $region15: #{change_detection_forward.18} parent=11 // pred_region
        _
      $region16: #{change_detection_forward.18} parent=11 // pred_fallthru
        _
      // Predicated region
      $region17: #{change_detection_forward.18} parent=11 // pred_check
        %p121 = pneg %p77
      $region18: #{change_detection_forward.18} parent=11 // pred_check_branch
        %123 = sbr.rel (%p121) target = $region20
      $region19: #{change_detection_forward.18} parent=11 // pred_region
        _
      $region20: #{change_detection_forward.18} parent=11 // pred_fallthru
        _
    $region12: #{change_detection_forward.18} parent=5 // pred_fallthru
      _
    %p124 = scmp.lt.s32.totalorder %s9, 2
    // Predicated region
    $region21: #{change_detection_forward.18} parent=5 // pred_check
      %p125 = pneg %p124
    $region22: #{change_detection_forward.18} parent=5 // pred_check_branch
      %127 = sbr.rel (%p125) target = $region24
    $region23: #{change_detection_forward.18} parent=5 // pred_region
      // Predicated region
      $region25: #{change_detection_forward.18} parent=23 // pred_check
        %p128 = pneg %p29
      $region26: #{change_detection_forward.18} parent=23 // pred_check_branch
        %130 = sbr.rel (%p128) target = $region28
      $region27: #{change_detection_forward.18} parent=23 // pred_region
        %p131 = scmp.lt.s32.totalorder %s9, 1
        %s132 = scalar_select %p131, %s9, 1
        %s133 = smul.addr %s132, 14
        %s134 = smul.addr %s133, 4
        %s135 = scalar_lea.vmem %s0, %s134
      $region28: #{change_detection_forward.18} parent=23 // pred_fallthru
        _
    $region24: #{change_detection_forward.18} parent=5 // pred_fallthru
      _
    %p136 = scmp.le.s32.totalorder 1, %s9
    %p137 = scmp.lt.s32.totalorder %s9, 3
    %p138 = pnand %p136, %p137
    %p139 = pneg %p138
    // Predicated region
    $region29: #{change_detection_forward.18} parent=5 // pred_check
      _
    $region30: #{change_detection_forward.18} parent=5 // pred_check_branch
      %141 = sbr.rel (%p138) target = $region32
    $region31: #{change_detection_forward.18} parent=5 // pred_region
      %s142 = ssub.s32 %s9, 1
      %p143 = scmp.lt.s32.totalorder %s14, 1
      %s144 = scalar_select %p143, %s14, 1
      %s145 = smul.addr %s144, 14
      %s146 = smul.addr %s145, 4
      %s147 = scalar_lea.vmem %s0, %s146
      %p148 = pneg %p35
      %p149 = pneg %p32
      %p150 = pneg %p56
      %p151 = pneg %p53
      %p152 = pneg %p77
      %p153 = pneg %p74
      %p154 = pneg %p103
      %p155 = pneg %p100
      %p156 = scmp.lt.s32.totalorder %s14, 1
      %s157 = scalar_select %p156, %s14, 1
      %s158 = smul.addr %s157, 10
      %s159 = smul.addr %s158, 4
      %s160 = scalar_lea.vmem %s3, %s159
      %p161 = scmp.lt.s32.totalorder %s14, 1
      %s162 = scalar_select %p161, %s14, 1
      %s163 = smul.addr %s162, 14
      %s164 = smul.addr %s163, 4
      %s165 = scalar_lea.vmem %s0, %s164
      %p166 = scmp.lt.s32.totalorder %s14, 1
      %s167 = scalar_select %p166, %s14, 1
      %s168 = smul.addr %s167, 10
      %s169 = smul.addr %s168, 4
      %s170 = scalar_lea.vmem %s3, %s169
      %v172 = vld [vmem:[%s165] sm:$0xf]
      %v173 = vld [vmem:[%s165 + $0x4] sm:$0xf]
      %v174 = vld [vmem:[%s165 + $0x8] sm:$0xf]
      %v175 = vld [vmem:[%s165 + $0xc] sm:$0xf]
      %v176 = vld [vmem:[%s165 + $0x10] sm:$0xf]
      %v177 = vld [vmem:[%s165 + $0x14] sm:$0xf]
      %v178 = vld [vmem:[%s165 + $0x18] sm:$0xf]
      %v179 = vld [vmem:[%s165 + $0x1c] sm:$0xf]
      %v180 = vld [vmem:[%s165 + $0x20] sm:$0xf]
      %v181 = vld [vmem:[%s165 + $0x24] sm:$0xf]
      %v182 = vld [vmem:[%s1] sm:$0xf]
      %v183 = vld [vmem:[%s165 + $0x28] sm:$0x1]
      %s184 = scalar_lea.vmem %s1, 4
      %v185 = vld [vmem:[%s184] sm:$0xf]
      %v197 = vunpack.c.l.b16 %v172
      %v198 = vunpack.c.l.b16 %v173
      %v199 = vunpack.c.l.b16 %v174
      %v200 = vunpack.c.l.b16 %v175
      %v201 = vunpack.c.l.b16 %v176
      %v202 = vunpack.c.l.b16 %v177
      %v203 = vunpack.c.l.b16 %v178
      %v204 = vunpack.c.l.b16 %v179
      %v205 = vunpack.c.l.b16 %v180
      %v206 = vunpack.c.l.b16 %v181
      %v207 = vunpack.c.l.b16 %v183
      %v208 = vpack.c.b16 %v198, %v197
      %v209 = vpack.c.b16 %v200, %v199
      %v210 = vpack.c.b16 %v202, %v201
      %v211 = vpack.c.b16 %v204, %v203
      %v212 = vpack.c.b16 %v206, %v205
      %v213 = vpack.c.b16 %v207, %v207
      %vm214 = vsmask.f32 7424
      %v216 = vshrl.u32 %v208, 16
      %v218 = vshll.u32 %v208, 16
      %v220 = vrot.slane %v218, 1
      %v221 = vor.u32 %v216, %v220
      %v223 = vshll.u32 %v209, 16
      %v225 = vrot.slane %v223, 1
      %v226 = vsel %vm214, %v221, %v225
      %v227 = vshrl.u32 %v209, 16
      %v229 = vor.u32 %v227, %v225
      %v231 = vshll.u32 %v210, 16
      %v233 = vrot.slane %v231, 1
      %v234 = vsel %vm214, %v229, %v233
      %v235 = vshrl.u32 %v210, 16
      %v237 = vor.u32 %v235, %v233
      %v239 = vshll.u32 %v211, 16
      %v241 = vrot.slane %v239, 1
      %v242 = vsel %vm214, %v237, %v241
      %v243 = vshrl.u32 %v211, 16
      %v245 = vor.u32 %v243, %v241
      %v247 = vshll.u32 %v212, 16
      %v249 = vrot.slane %v247, 1
      %v250 = vsel %vm214, %v245, %v249
      %v251 = vshrl.u32 %v212, 16
      %v253 = vor.u32 %v251, %v249
      %v255 = vshll.u32 %v213, 16
      %v257 = vrot.slane %v255, 1
      %v258 = vsel %vm214, %v253, %v257
      %vm259 = vcmask 64512
      %v261 = vsel %vm259, %v226, 0
      %v264 = vsel %vm259, %v234, 0
      %v267 = vsel %vm259, %v242, 0
      %v270 = vsel %vm259, %v250, 0
      %v273 = vsel %vm259, %v258, 0
      %vm275 = vcmask 1043456
      %v277 = vsel %vm275, %v185, 0
      %279 = vmatprep.subr.bf16.mxu0 0
      %280 = vmatpush1.bf16.msra.mxu0 0
      %281 = vmatprep.subr.bf16.mxu0 0
      %282 = vmatpush1.bf16.msra.mxu0 0
      %283 = vmatprep.subr.bf16.mxu0 0
      %284 = vmatpush1.bf16.msra.mxu0 0
      %285 = vmatprep.subr.bf16.mxu0 0
      %286 = vmatpush1.bf16.msra.mxu0 0
      %287 = vmatprep.subr.bf16.mxu0 0
      %288 = vmatpush1.bf16.msra.mxu0 0
      %289 = vmatprep.subr.bf16.mxu0 0
      %290 = vmatpush1.bf16.msra.mxu0 0
      %291 = vmatprep.subr.bf16.mxu0 0
      %292 = vmatpush1.bf16.msra.mxu0 0
      %293 = vmatprep.subr.bf16.mxu0 0
      %294 = vmatpush1.bf16.msra.mxu0 %v277
      %295 = vmatprep.subr.bf16.mxu0 0
      %296 = vmatpush2.bf16.msra.mxu0 0
      %297 = vmatprep.subr.bf16.mxu0 0
      %298 = vmatpush2.bf16.msra.mxu0 0
      %299 = vmatprep.subr.bf16.mxu0 0
      %300 = vmatpush2.bf16.msra.mxu0 0
      %301 = vmatprep.subr.bf16.mxu0 0
      %302 = vmatpush2.bf16.msra.mxu0 0
      %303 = vmatprep.subr.bf16.mxu0 0
      %304 = vmatpush2.bf16.msra.mxu0 0
      %305 = vmatprep.subr.bf16.mxu0 0
      %306 = vmatpush2.bf16.msra.mxu0 0
      %307 = vmatprep.subr.bf16.mxu0 0
      %308 = vmatpush2.bf16.msra.mxu0 0
      %309 = vmatprep.subr.bf16.mxu0 0
      %310 = vmatpush2.bf16.msra.mxu0 0
      %311 = vmatprep.mubr.bf16.mxu0 0
      %312 = vmatmul.mubr.bf16.gmra.mxu0 %v261
      %v313 = vpop.f32.mrf.mxu0
      %v314 = vadd.f32 0.0, %v313
      %v315 = vpop.f32.mrf.mxu0
      %v316 = vpop.f32.mrf.mxu0
      %v317 = vadd.f32 0.0, %v316
      %v318 = vpop.f32.mrf.mxu0
      %319 = vmatprep.mubr.bf16.mxu0 0
      %320 = vmatmul.mubr.bf16.gmra.mxu0 %v264
      %v321 = vpop.f32.mrf.mxu0
      %v322 = vadd.f32 0.0, %v321
      %v323 = vpop.f32.mrf.mxu0
      %v324 = vpop.f32.mrf.mxu0
      %v325 = vadd.f32 0.0, %v324
      %v326 = vpop.f32.mrf.mxu0
      %327 = vmatprep.mubr.bf16.mxu0 0
      %328 = vmatmul.mubr.bf16.gmra.mxu0 %v267
      %v329 = vpop.f32.mrf.mxu0
      %v330 = vadd.f32 0.0, %v329
      %v331 = vpop.f32.mrf.mxu0
      %v332 = vpop.f32.mrf.mxu0
      %v333 = vadd.f32 0.0, %v332
      %v334 = vpop.f32.mrf.mxu0
      %335 = vmatprep.mubr.bf16.mxu0 0
      %336 = vmatmul.mubr.bf16.gmra.mxu0 %v270
      %v337 = vpop.f32.mrf.mxu0
      %v338 = vadd.f32 0.0, %v337
      %v339 = vpop.f32.mrf.mxu0
      %v340 = vpop.f32.mrf.mxu0
      %v341 = vadd.f32 0.0, %v340
      %v342 = vpop.f32.mrf.mxu0
      %343 = vmatprep.mubr.bf16.mxu0 0
      %344 = vmatmul.mubr.bf16.gmra.mxu0 %v273
      %v345 = vpop.f32.mrf.mxu0
      %v346 = vadd.f32 0.0, %v345
      %v347 = vpop.f32.mrf.mxu0
      %v348 = vpop.f32.mrf.mxu0
      %v349 = vadd.f32 0.0, %v348
      %v350 = vpop.f32.mrf.mxu0
      %351 = vdwg.mxu0
      %v352 = vsel %vm259, %v208, 0
      %v354 = vsel %vm259, %v209, 0
      %v356 = vsel %vm259, %v210, 0
      %v358 = vsel %vm259, %v211, 0
      %v360 = vsel %vm259, %v212, 0
      %v363 = vsel %vm275, %v182, 0
      %365 = vmatprep.subr.bf16.mxu0 0
      %366 = vmatpush1.bf16.msra.mxu0 0
      %367 = vmatprep.subr.bf16.mxu0 0
      %368 = vmatpush1.bf16.msra.mxu0 0
      %369 = vmatprep.subr.bf16.mxu0 0
      %370 = vmatpush1.bf16.msra.mxu0 0
      %371 = vmatprep.subr.bf16.mxu0 0
      %372 = vmatpush1.bf16.msra.mxu0 0
      %373 = vmatprep.subr.bf16.mxu0 0
      %374 = vmatpush1.bf16.msra.mxu0 0
      %375 = vmatprep.subr.bf16.mxu0 0
      %376 = vmatpush1.bf16.msra.mxu0 0
      %377 = vmatprep.subr.bf16.mxu0 0
      %378 = vmatpush1.bf16.msra.mxu0 0
      %379 = vmatprep.subr.bf16.mxu0 0
      %380 = vmatpush1.bf16.msra.mxu0 %v363
      %381 = vmatprep.subr.bf16.mxu0 0
      %382 = vmatpush2.bf16.msra.mxu0 0
      %383 = vmatprep.subr.bf16.mxu0 0
      %384 = vmatpush2.bf16.msra.mxu0 0
      %385 = vmatprep.subr.bf16.mxu0 0
      %386 = vmatpush2.bf16.msra.mxu0 0
      %387 = vmatprep.subr.bf16.mxu0 0
      %388 = vmatpush2.bf16.msra.mxu0 0
      %389 = vmatprep.subr.bf16.mxu0 0
      %390 = vmatpush2.bf16.msra.mxu0 0
      %391 = vmatprep.subr.bf16.mxu0 0
      %392 = vmatpush2.bf16.msra.mxu0 0
      %393 = vmatprep.subr.bf16.mxu0 0
      %394 = vmatpush2.bf16.msra.mxu0 0
      %395 = vmatprep.subr.bf16.mxu0 0
      %396 = vmatpush2.bf16.msra.mxu0 0
      %397 = vmatprep.mubr.bf16.mxu0 0
      %398 = vmatmul.mubr.bf16.gmra.mxu0 %v352
      %v399 = vpop.f32.mrf.mxu0
      %v400 = vadd.f32 %v314, %v399
      %v401 = vpop.f32.mrf.mxu0
      %v402 = vpop.f32.mrf.mxu0
      %v403 = vadd.f32 %v317, %v402
      %v404 = vpop.f32.mrf.mxu0
      %405 = vmatprep.mubr.bf16.mxu0 0
      %406 = vmatmul.mubr.bf16.gmra.mxu0 %v354
      %v407 = vpop.f32.mrf.mxu0
      %v408 = vadd.f32 %v322, %v407
      %v409 = vpop.f32.mrf.mxu0
      %v410 = vpop.f32.mrf.mxu0
      %v411 = vadd.f32 %v325, %v410
      %v412 = vpop.f32.mrf.mxu0
      %413 = vmatprep.mubr.bf16.mxu0 0
      %414 = vmatmul.mubr.bf16.gmra.mxu0 %v356
      %v415 = vpop.f32.mrf.mxu0
      %v416 = vadd.f32 %v330, %v415
      %v417 = vpop.f32.mrf.mxu0
      %v418 = vpop.f32.mrf.mxu0
      %v419 = vadd.f32 %v333, %v418
      %v420 = vpop.f32.mrf.mxu0
      %421 = vmatprep.mubr.bf16.mxu0 0
      %422 = vmatmul.mubr.bf16.gmra.mxu0 %v358
      %v423 = vpop.f32.mrf.mxu0
      %v424 = vadd.f32 %v338, %v423
      %v425 = vpop.f32.mrf.mxu0
      %v426 = vpop.f32.mrf.mxu0
      %v427 = vadd.f32 %v341, %v426
      %v428 = vpop.f32.mrf.mxu0
      %429 = vmatprep.mubr.bf16.mxu0 0
      %430 = vmatmul.mubr.bf16.gmra.mxu0 %v360
      %v431 = vpop.f32.mrf.mxu0
      %v432 = vadd.f32 %v346, %v431
      %v433 = vpop.f32.mrf.mxu0
      %v434 = vpop.f32.mrf.mxu0
      %v435 = vadd.f32 %v349, %v434
      %v436 = vpop.f32.mrf.mxu0
      %437 = vdwg.mxu0
      %v438 = vld [vmem:[%s165] sm:$0xe]
      %s439 = scalar_lea.vmem %s1, 8
      %v440 = vld [vmem:[%s439] sm:$0xf]
      %v442 = vunpack.c.l.b16 %v438
      %v443 = vpack.c.b16 %v198, %v442
      %vm444 = vcmask 1046528
      %v445 = vrot.slane %v443, 1
      %v446 = vrot.slane %v209, 1
      %v447 = vsel %vm444, %v445, %v446
      %v448 = vrot.slane %v210, 1
      %v449 = vsel %vm444, %v446, %v448
      %v450 = vrot.slane %v211, 1
      %v451 = vsel %vm444, %v448, %v450
      %v452 = vrot.slane %v212, 1
      %v453 = vsel %vm444, %v450, %v452
      %v454 = vrot.slane %v213, 1
      %v455 = vsel %vm444, %v452, %v454
      %v457 = vsel %vm259, %v447, 0
      %v460 = vsel %vm259, %v449, 0
      %v463 = vsel %vm259, %v451, 0
      %v466 = vsel %vm259, %v453, 0
      %v469 = vsel %vm259, %v455, 0
      %v472 = vsel %vm275, %v440, 0
      %474 = vmatprep.subr.bf16.mxu0 0
      %475 = vmatpush1.bf16.msra.mxu0 0
      %476 = vmatprep.subr.bf16.mxu0 0
      %477 = vmatpush1.bf16.msra.mxu0 0
      %478 = vmatprep.subr.bf16.mxu0 0
      %479 = vmatpush1.bf16.msra.mxu0 0
      %480 = vmatprep.subr.bf16.mxu0 0
      %481 = vmatpush1.bf16.msra.mxu0 0
      %482 = vmatprep.subr.bf16.mxu0 0
      %483 = vmatpush1.bf16.msra.mxu0 0
      %484 = vmatprep.subr.bf16.mxu0 0
      %485 = vmatpush1.bf16.msra.mxu0 0
      %486 = vmatprep.subr.bf16.mxu0 0
      %487 = vmatpush1.bf16.msra.mxu0 0
      %488 = vmatprep.subr.bf16.mxu0 0
      %489 = vmatpush1.bf16.msra.mxu0 %v472
      %490 = vmatprep.subr.bf16.mxu0 0
      %491 = vmatpush2.bf16.msra.mxu0 0
      %492 = vmatprep.subr.bf16.mxu0 0
      %493 = vmatpush2.bf16.msra.mxu0 0
      %494 = vmatprep.subr.bf16.mxu0 0
      %495 = vmatpush2.bf16.msra.mxu0 0
      %496 = vmatprep.subr.bf16.mxu0 0
      %497 = vmatpush2.bf16.msra.mxu0 0
      %498 = vmatprep.subr.bf16.mxu0 0
      %499 = vmatpush2.bf16.msra.mxu0 0
      %500 = vmatprep.subr.bf16.mxu0 0
      %501 = vmatpush2.bf16.msra.mxu0 0
      %502 = vmatprep.subr.bf16.mxu0 0
      %503 = vmatpush2.bf16.msra.mxu0 0
      %504 = vmatprep.subr.bf16.mxu0 0
      %505 = vmatpush2.bf16.msra.mxu0 0
      %506 = vmatprep.mubr.bf16.mxu0 0
      %507 = vmatmul.mubr.bf16.gmra.mxu0 %v457
      %v508 = vpop.f32.mrf.mxu0
      %v509 = vadd.f32 0.0, %v508
      %v510 = vpop.f32.mrf.mxu0
      %v511 = vpop.f32.mrf.mxu0
      %v512 = vadd.f32 0.0, %v511
      %v513 = vpop.f32.mrf.mxu0
      %514 = vmatprep.mubr.bf16.mxu0 0
      %515 = vmatmul.mubr.bf16.gmra.mxu0 %v460
      %v516 = vpop.f32.mrf.mxu0
      %v517 = vadd.f32 0.0, %v516
      %v518 = vpop.f32.mrf.mxu0
      %v519 = vpop.f32.mrf.mxu0
      %v520 = vadd.f32 0.0, %v519
      %v521 = vpop.f32.mrf.mxu0
      %522 = vmatprep.mubr.bf16.mxu0 0
      %523 = vmatmul.mubr.bf16.gmra.mxu0 %v463
      %v524 = vpop.f32.mrf.mxu0
      %v525 = vadd.f32 0.0, %v524
      %v526 = vpop.f32.mrf.mxu0
      %v527 = vpop.f32.mrf.mxu0
      %v528 = vadd.f32 0.0, %v527
      %v529 = vpop.f32.mrf.mxu0
      %530 = vmatprep.mubr.bf16.mxu0 0
      %531 = vmatmul.mubr.bf16.gmra.mxu0 %v466
      %v532 = vpop.f32.mrf.mxu0
      %v533 = vadd.f32 0.0, %v532
      %v534 = vpop.f32.mrf.mxu0
      %v535 = vpop.f32.mrf.mxu0
      %v536 = vadd.f32 0.0, %v535
      %v537 = vpop.f32.mrf.mxu0
      %538 = vmatprep.mubr.bf16.mxu0 0
      %539 = vmatmul.mubr.bf16.gmra.mxu0 %v469
      %v540 = vpop.f32.mrf.mxu0
      %v541 = vadd.f32 0.0, %v540
      %v542 = vpop.f32.mrf.mxu0
      %v543 = vpop.f32.mrf.mxu0
      %v544 = vadd.f32 0.0, %v543
      %v545 = vpop.f32.mrf.mxu0
      %546 = vdwg.mxu0
      %v547 = vadd.f32 %v400, %v509
      %v548 = vadd.f32 %v403, %v512
      %v549 = vadd.f32 %v408, %v517
      %v550 = vadd.f32 %v411, %v520
      %v551 = vadd.f32 %v416, %v525
      %v552 = vadd.f32 %v419, %v528
      %v553 = vadd.f32 %v424, %v533
      %v554 = vadd.f32 %v427, %v536
      %v555 = vadd.f32 %v432, %v541
      %v556 = vadd.f32 %v435, %v544
      %v557 = vld [vmem:[%s165 + $0x4] sm:$0xe]
      %v558 = vld [vmem:[%s165 + $0x8] sm:$0xf]
      %v559 = vld [vmem:[%s165 + $0xc] sm:$0xf]
      %v560 = vld [vmem:[%s165 + $0x10] sm:$0xf]
      %v561 = vld [vmem:[%s165 + $0x14] sm:$0xf]
      %v562 = vld [vmem:[%s165 + $0x18] sm:$0xf]
      %v563 = vld [vmem:[%s165 + $0x1c] sm:$0xf]
      %v564 = vld [vmem:[%s165 + $0x20] sm:$0xf]
      %v565 = vld [vmem:[%s165 + $0x24] sm:$0xf]
      %v566 = vld [vmem:[%s165 + $0x28] sm:$0xf]
      %v567 = vld [vmem:[%s165 + $0x2c] sm:$0x1]
      %s568 = scalar_lea.vmem %s1, 12
      %v569 = vld [vmem:[%s568] sm:$0xf]
      %v581 = vunpack.c.l.b16 %v557
      %v582 = vunpack.c.l.b16 %v558
      %v583 = vunpack.c.l.b16 %v559
      %v584 = vunpack.c.l.b16 %v560
      %v585 = vunpack.c.l.b16 %v561
      %v586 = vunpack.c.l.b16 %v562
      %v587 = vunpack.c.l.b16 %v563
      %v588 = vunpack.c.l.b16 %v564
      %v589 = vunpack.c.l.b16 %v565
      %v590 = vunpack.c.l.b16 %v566
      %v591 = vunpack.c.l.b16 %v567
      %v592 = vpack.c.b16 %v582, %v581
      %v593 = vpack.c.b16 %v584, %v583
      %v594 = vpack.c.b16 %v586, %v585
      %v595 = vpack.c.b16 %v588, %v587
      %v596 = vpack.c.b16 %v590, %v589
      %v597 = vpack.c.b16 %v591, %v591
      %v598 = vrot.slane %v592, 1
      %v599 = vrot.slane %v593, 1
      %v600 = vsel %vm444, %v598, %v599
      %v601 = vrot.slane %v594, 1
      %v602 = vsel %vm444, %v599, %v601
      %v603 = vrot.slane %v595, 1
      %v604 = vsel %vm444, %v601, %v603
      %v605 = vrot.slane %v596, 1
      %v606 = vsel %vm444, %v603, %v605
      %v607 = vrot.slane %v597, 1
      %v608 = vsel %vm444, %v605, %v607
      %v610 = vsel %vm259, %v600, 0
      %v613 = vsel %vm259, %v602, 0
      %v616 = vsel %vm259, %v604, 0
      %v619 = vsel %vm259, %v606, 0
      %v622 = vsel %vm259, %v608, 0
      %v625 = vsel %vm275, %v569, 0
      %627 = vmatprep.subr.bf16.mxu0 0
      %628 = vmatpush1.bf16.msra.mxu0 0
      %629 = vmatprep.subr.bf16.mxu0 0
      %630 = vmatpush1.bf16.msra.mxu0 0
      %631 = vmatprep.subr.bf16.mxu0 0
      %632 = vmatpush1.bf16.msra.mxu0 0
      %633 = vmatprep.subr.bf16.mxu0 0
      %634 = vmatpush1.bf16.msra.mxu0 0
      %635 = vmatprep.subr.bf16.mxu0 0
      %636 = vmatpush1.bf16.msra.mxu0 0
      %637 = vmatprep.subr.bf16.mxu0 0
      %638 = vmatpush1.bf16.msra.mxu0 0
      %639 = vmatprep.subr.bf16.mxu0 0
      %640 = vmatpush1.bf16.msra.mxu0 0
      %641 = vmatprep.subr.bf16.mxu0 0
      %642 = vmatpush1.bf16.msra.mxu0 %v625
      %643 = vmatprep.subr.bf16.mxu0 0
      %644 = vmatpush2.bf16.msra.mxu0 0
      %645 = vmatprep.subr.bf16.mxu0 0
      %646 = vmatpush2.bf16.msra.mxu0 0
      %647 = vmatprep.subr.bf16.mxu0 0
      %648 = vmatpush2.bf16.msra.mxu0 0
      %649 = vmatprep.subr.bf16.mxu0 0
      %650 = vmatpush2.bf16.msra.mxu0 0
      %651 = vmatprep.subr.bf16.mxu0 0
      %652 = vmatpush2.bf16.msra.mxu0 0
      %653 = vmatprep.subr.bf16.mxu0 0
      %654 = vmatpush2.bf16.msra.mxu0 0
      %655 = vmatprep.subr.bf16.mxu0 0
      %656 = vmatpush2.bf16.msra.mxu0 0
      %657 = vmatprep.subr.bf16.mxu0 0
      %658 = vmatpush2.bf16.msra.mxu0 0
      %659 = vmatprep.mubr.bf16.mxu0 0
      %660 = vmatmul.mubr.bf16.gmra.mxu0 %v610
      %v661 = vpop.f32.mrf.mxu0
      %v662 = vadd.f32 0.0, %v661
      %v663 = vpop.f32.mrf.mxu0
      %v664 = vpop.f32.mrf.mxu0
      %v665 = vadd.f32 0.0, %v664
      %v666 = vpop.f32.mrf.mxu0
      %667 = vmatprep.mubr.bf16.mxu0 0
      %668 = vmatmul.mubr.bf16.gmra.mxu0 %v613
      %v669 = vpop.f32.mrf.mxu0
      %v670 = vadd.f32 0.0, %v669
      %v671 = vpop.f32.mrf.mxu0
      %v672 = vpop.f32.mrf.mxu0
      %v673 = vadd.f32 0.0, %v672
      %v674 = vpop.f32.mrf.mxu0
      %675 = vmatprep.mubr.bf16.mxu0 0
      %676 = vmatmul.mubr.bf16.gmra.mxu0 %v616
      %v677 = vpop.f32.mrf.mxu0
      %v678 = vadd.f32 0.0, %v677
      %v679 = vpop.f32.mrf.mxu0
      %v680 = vpop.f32.mrf.mxu0
      %v681 = vadd.f32 0.0, %v680
      %v682 = vpop.f32.mrf.mxu0
      %683 = vmatprep.mubr.bf16.mxu0 0
      %684 = vmatmul.mubr.bf16.gmra.mxu0 %v619
      %v685 = vpop.f32.mrf.mxu0
      %v686 = vadd.f32 0.0, %v685
      %v687 = vpop.f32.mrf.mxu0
      %v688 = vpop.f32.mrf.mxu0
      %v689 = vadd.f32 0.0, %v688
      %v690 = vpop.f32.mrf.mxu0
      %691 = vmatprep.mubr.bf16.mxu0 0
      %692 = vmatmul.mubr.bf16.gmra.mxu0 %v622
      %v693 = vpop.f32.mrf.mxu0
      %v694 = vadd.f32 0.0, %v693
      %v695 = vpop.f32.mrf.mxu0
      %v696 = vpop.f32.mrf.mxu0
      %v697 = vadd.f32 0.0, %v696
      %v698 = vpop.f32.mrf.mxu0
      %699 = vdwg.mxu0
      %v700 = vadd.f32 %v547, %v662
      %v701 = vadd.f32 %v548, %v665
      %v702 = vadd.f32 %v549, %v670
      %v703 = vadd.f32 %v550, %v673
      %v704 = vadd.f32 %v551, %v678
      %v705 = vadd.f32 %v552, %v681
      %v706 = vadd.f32 %v553, %v686
      %v707 = vadd.f32 %v554, %v689
      %v708 = vadd.f32 %v555, %v694
      %v709 = vadd.f32 %v556, %v697
      %v710 = vld [vmem:[%s165 + $0x2c] sm:$0x3]
      %s711 = scalar_lea.vmem %s1, 16
      %v712 = vld [vmem:[%s711] sm:$0xf]
      %v714 = vunpack.c.l.b16 %v710
      %v715 = vpack.c.b16 %v714, %v714
      %vm716 = vsmask.f32 6400
      %v718 = vshrl.u32 %v592, 16
      %v720 = vrot.slane %v718, 1
      %v721 = vshll.u32 %v592, 16
      %v723 = vrot.slane %v721, 2
      %v724 = vor.u32 %v720, %v723
      %v726 = vshrl.u32 %v593, 16
      %v728 = vrot.slane %v726, 1
      %v729 = vshll.u32 %v593, 16
      %v731 = vrot.slane %v729, 2
      %v732 = vor.u32 %v728, %v731
      %v733 = vsel %vm716, %v724, %v732
      %v735 = vshrl.u32 %v594, 16
      %v737 = vrot.slane %v735, 1
      %v738 = vshll.u32 %v594, 16
      %v740 = vrot.slane %v738, 2
      %v741 = vor.u32 %v737, %v740
      %v742 = vsel %vm716, %v732, %v741
      %v744 = vshrl.u32 %v595, 16
      %v746 = vrot.slane %v744, 1
      %v747 = vshll.u32 %v595, 16
      %v749 = vrot.slane %v747, 2
      %v750 = vor.u32 %v746, %v749
      %v751 = vsel %vm716, %v741, %v750
      %v753 = vshrl.u32 %v596, 16
      %v755 = vrot.slane %v753, 1
      %v756 = vshll.u32 %v596, 16
      %v758 = vrot.slane %v756, 2
      %v759 = vor.u32 %v755, %v758
      %v760 = vsel %vm716, %v750, %v759
      %v762 = vshrl.u32 %v715, 16
      %v764 = vrot.slane %v762, 1
      %v765 = vshll.u32 %v715, 16
      %v767 = vrot.slane %v765, 2
      %v768 = vor.u32 %v764, %v767
      %v769 = vsel %vm716, %v759, %v768
      %v771 = vsel %vm259, %v733, 0
      %v774 = vsel %vm259, %v742, 0
      %v777 = vsel %vm259, %v751, 0
      %v780 = vsel %vm259, %v760, 0
      %v783 = vsel %vm259, %v769, 0
      %v786 = vsel %vm275, %v712, 0
      %788 = vmatprep.subr.bf16.mxu0 0
      %789 = vmatpush1.bf16.msra.mxu0 0
      %790 = vmatprep.subr.bf16.mxu0 0
      %791 = vmatpush1.bf16.msra.mxu0 0
      %792 = vmatprep.subr.bf16.mxu0 0
      %793 = vmatpush1.bf16.msra.mxu0 0
      %794 = vmatprep.subr.bf16.mxu0 0
      %795 = vmatpush1.bf16.msra.mxu0 0
      %796 = vmatprep.subr.bf16.mxu0 0
      %797 = vmatpush1.bf16.msra.mxu0 0
      %798 = vmatprep.subr.bf16.mxu0 0
      %799 = vmatpush1.bf16.msra.mxu0 0
      %800 = vmatprep.subr.bf16.mxu0 0
      %801 = vmatpush1.bf16.msra.mxu0 0
      %802 = vmatprep.subr.bf16.mxu0 0
      %803 = vmatpush1.bf16.msra.mxu0 %v786
      %804 = vmatprep.subr.bf16.mxu0 0
      %805 = vmatpush2.bf16.msra.mxu0 0
      %806 = vmatprep.subr.bf16.mxu0 0
      %807 = vmatpush2.bf16.msra.mxu0 0
      %808 = vmatprep.subr.bf16.mxu0 0
      %809 = vmatpush2.bf16.msra.mxu0 0
      %810 = vmatprep.subr.bf16.mxu0 0
      %811 = vmatpush2.bf16.msra.mxu0 0
      %812 = vmatprep.subr.bf16.mxu0 0
      %813 = vmatpush2.bf16.msra.mxu0 0
      %814 = vmatprep.subr.bf16.mxu0 0
      %815 = vmatpush2.bf16.msra.mxu0 0
      %816 = vmatprep.subr.bf16.mxu0 0
      %817 = vmatpush2.bf16.msra.mxu0 0
      %818 = vmatprep.subr.bf16.mxu0 0
      %819 = vmatpush2.bf16.msra.mxu0 0
      %820 = vmatprep.mubr.bf16.mxu0 0
      %821 = vmatmul.mubr.bf16.gmra.mxu0 %v771
      %v822 = vpop.f32.mrf.mxu0
      %v823 = vadd.f32 0.0, %v822
      %v824 = vpop.f32.mrf.mxu0
      %v825 = vpop.f32.mrf.mxu0
      %v826 = vadd.f32 0.0, %v825
      %v827 = vpop.f32.mrf.mxu0
      %828 = vmatprep.mubr.bf16.mxu0 0
      %829 = vmatmul.mubr.bf16.gmra.mxu0 %v774
      %v830 = vpop.f32.mrf.mxu0
      %v831 = vadd.f32 0.0, %v830
      %v832 = vpop.f32.mrf.mxu0
      %v833 = vpop.f32.mrf.mxu0
      %v834 = vadd.f32 0.0, %v833
      %v835 = vpop.f32.mrf.mxu0
      %836 = vmatprep.mubr.bf16.mxu0 0
      %837 = vmatmul.mubr.bf16.gmra.mxu0 %v777
      %v838 = vpop.f32.mrf.mxu0
      %v839 = vadd.f32 0.0, %v838
      %v840 = vpop.f32.mrf.mxu0
      %v841 = vpop.f32.mrf.mxu0
      %v842 = vadd.f32 0.0, %v841
      %v843 = vpop.f32.mrf.mxu0
      %844 = vmatprep.mubr.bf16.mxu0 0
      %845 = vmatmul.mubr.bf16.gmra.mxu0 %v780
      %v846 = vpop.f32.mrf.mxu0
      %v847 = vadd.f32 0.0, %v846
      %v848 = vpop.f32.mrf.mxu0
      %v849 = vpop.f32.mrf.mxu0
      %v850 = vadd.f32 0.0, %v849
      %v851 = vpop.f32.mrf.mxu0
      %852 = vmatprep.mubr.bf16.mxu0 0
      %853 = vmatmul.mubr.bf16.gmra.mxu0 %v783
      %v854 = vpop.f32.mrf.mxu0
      %v855 = vadd.f32 0.0, %v854
      %v856 = vpop.f32.mrf.mxu0
      %v857 = vpop.f32.mrf.mxu0
      %v858 = vadd.f32 0.0, %v857
      %v859 = vpop.f32.mrf.mxu0
      %860 = vdwg.mxu0
      %v861 = vadd.f32 %v700, %v823
      %v862 = vadd.f32 %v701, %v826
      %v863 = vadd.f32 %v702, %v831
      %v864 = vadd.f32 %v703, %v834
      %v865 = vadd.f32 %v704, %v839
      %v866 = vadd.f32 %v705, %v842
      %v867 = vadd.f32 %v706, %v847
      %v868 = vadd.f32 %v707, %v850
      %v869 = vadd.f32 %v708, %v855
      %v870 = vadd.f32 %v709, %v858
      %v871 = vld [vmem:[%s165 + $0x4] sm:$0xc]
      %s872 = scalar_lea.vmem %s1, 20
      %v873 = vld [vmem:[%s872] sm:$0xf]
      %v875 = vunpack.c.l.b16 %v871
      %v876 = vpack.c.b16 %v582, %v875
      %vm877 = vcmask 1045504
      %v878 = vrot.slane %v876, 2
      %v879 = vrot.slane %v593, 2
      %v880 = vsel %vm877, %v878, %v879
      %v881 = vrot.slane %v594, 2
      %v882 = vsel %vm877, %v879, %v881
      %v883 = vrot.slane %v595, 2
      %v884 = vsel %vm877, %v881, %v883
      %v885 = vrot.slane %v596, 2
      %v886 = vsel %vm877, %v883, %v885
      %v887 = vrot.slane %v715, 2
      %v888 = vsel %vm877, %v885, %v887
      %v890 = vsel %vm259, %v880, 0
      %v893 = vsel %vm259, %v882, 0
      %v896 = vsel %vm259, %v884, 0
      %v899 = vsel %vm259, %v886, 0
      %v902 = vsel %vm259, %v888, 0
      %v905 = vsel %vm275, %v873, 0
      %907 = vmatprep.subr.bf16.mxu0 0
      %908 = vmatpush1.bf16.msra.mxu0 0
      %909 = vmatprep.subr.bf16.mxu0 0
      %910 = vmatpush1.bf16.msra.mxu0 0
      %911 = vmatprep.subr.bf16.mxu0 0
      %912 = vmatpush1.bf16.msra.mxu0 0
      %913 = vmatprep.subr.bf16.mxu0 0
      %914 = vmatpush1.bf16.msra.mxu0 0
      %915 = vmatprep.subr.bf16.mxu0 0
      %916 = vmatpush1.bf16.msra.mxu0 0
      %917 = vmatprep.subr.bf16.mxu0 0
      %918 = vmatpush1.bf16.msra.mxu0 0
      %919 = vmatprep.subr.bf16.mxu0 0
      %920 = vmatpush1.bf16.msra.mxu0 0
      %921 = vmatprep.subr.bf16.mxu0 0
      %922 = vmatpush1.bf16.msra.mxu0 %v905
      %923 = vmatprep.subr.bf16.mxu0 0
      %924 = vmatpush2.bf16.msra.mxu0 0
      %925 = vmatprep.subr.bf16.mxu0 0
      %926 = vmatpush2.bf16.msra.mxu0 0
      %927 = vmatprep.subr.bf16.mxu0 0
      %928 = vmatpush2.bf16.msra.mxu0 0
      %929 = vmatprep.subr.bf16.mxu0 0
      %930 = vmatpush2.bf16.msra.mxu0 0
      %931 = vmatprep.subr.bf16.mxu0 0
      %932 = vmatpush2.bf16.msra.mxu0 0
      %933 = vmatprep.subr.bf16.mxu0 0
      %934 = vmatpush2.bf16.msra.mxu0 0
      %935 = vmatprep.subr.bf16.mxu0 0
      %936 = vmatpush2.bf16.msra.mxu0 0
      %937 = vmatprep.subr.bf16.mxu0 0
      %938 = vmatpush2.bf16.msra.mxu0 0
      %939 = vmatprep.mubr.bf16.mxu0 0
      %940 = vmatmul.mubr.bf16.gmra.mxu0 %v890
      %v941 = vpop.f32.mrf.mxu0
      %v942 = vadd.f32 0.0, %v941
      %v943 = vpop.f32.mrf.mxu0
      %v944 = vpop.f32.mrf.mxu0
      %v945 = vadd.f32 0.0, %v944
      %v946 = vpop.f32.mrf.mxu0
      %947 = vmatprep.mubr.bf16.mxu0 0
      %948 = vmatmul.mubr.bf16.gmra.mxu0 %v893
      %v949 = vpop.f32.mrf.mxu0
      %v950 = vadd.f32 0.0, %v949
      %v951 = vpop.f32.mrf.mxu0
      %v952 = vpop.f32.mrf.mxu0
      %v953 = vadd.f32 0.0, %v952
      %v954 = vpop.f32.mrf.mxu0
      %955 = vmatprep.mubr.bf16.mxu0 0
      %956 = vmatmul.mubr.bf16.gmra.mxu0 %v896
      %v957 = vpop.f32.mrf.mxu0
      %v958 = vadd.f32 0.0, %v957
      %v959 = vpop.f32.mrf.mxu0
      %v960 = vpop.f32.mrf.mxu0
      %v961 = vadd.f32 0.0, %v960
      %v962 = vpop.f32.mrf.mxu0
      %963 = vmatprep.mubr.bf16.mxu0 0
      %964 = vmatmul.mubr.bf16.gmra.mxu0 %v899
      %v965 = vpop.f32.mrf.mxu0
      %v966 = vadd.f32 0.0, %v965
      %v967 = vpop.f32.mrf.mxu0
      %v968 = vpop.f32.mrf.mxu0
      %v969 = vadd.f32 0.0, %v968
      %v970 = vpop.f32.mrf.mxu0
      %971 = vmatprep.mubr.bf16.mxu0 0
      %972 = vmatmul.mubr.bf16.gmra.mxu0 %v902
      %v973 = vpop.f32.mrf.mxu0
      %v974 = vadd.f32 0.0, %v973
      %v975 = vpop.f32.mrf.mxu0
      %v976 = vpop.f32.mrf.mxu0
      %v977 = vadd.f32 0.0, %v976
      %v978 = vpop.f32.mrf.mxu0
      %979 = vdwg.mxu0
      %v980 = vadd.f32 %v861, %v942
      %v981 = vadd.f32 %v862, %v945
      %v982 = vadd.f32 %v863, %v950
      %v983 = vadd.f32 %v864, %v953
      %v984 = vadd.f32 %v865, %v958
      %v985 = vadd.f32 %v866, %v961
      %v986 = vadd.f32 %v867, %v966
      %v987 = vadd.f32 %v868, %v969
      %v988 = vadd.f32 %v869, %v974
      %v989 = vadd.f32 %v870, %v977
      %v990 = vld [vmem:[%s165 + $0x8] sm:$0xc]
      %v991 = vld [vmem:[%s165 + $0xc] sm:$0xf]
      %v992 = vld [vmem:[%s165 + $0x10] sm:$0xf]
      %v993 = vld [vmem:[%s165 + $0x14] sm:$0xf]
      %v994 = vld [vmem:[%s165 + $0x18] sm:$0xf]
      %v995 = vld [vmem:[%s165 + $0x1c] sm:$0xf]
      %v996 = vld [vmem:[%s165 + $0x20] sm:$0xf]
      %v997 = vld [vmem:[%s165 + $0x24] sm:$0xf]
      %v998 = vld [vmem:[%s165 + $0x28] sm:$0xf]
      %v999 = vld [vmem:[%s165 + $0x2c] sm:$0xf]
      %v1000 = vld [vmem:[%s165 + $0x30] sm:$0x3]
      %s1001 = scalar_lea.vmem %s1, 24
      %v1002 = vld [vmem:[%s1001] sm:$0xf]
      %v1014 = vunpack.c.l.b16 %v990
      %v1015 = vunpack.c.l.b16 %v991
      %v1016 = vunpack.c.l.b16 %v992
      %v1017 = vunpack.c.l.b16 %v993
      %v1018 = vunpack.c.l.b16 %v994
      %v1019 = vunpack.c.l.b16 %v995
      %v1020 = vunpack.c.l.b16 %v996
      %v1021 = vunpack.c.l.b16 %v997
      %v1022 = vunpack.c.l.b16 %v998
      %v1023 = vunpack.c.l.b16 %v999
      %v1024 = vunpack.c.l.b16 %v1000
      %v1025 = vpack.c.b16 %v1015, %v1014
      %v1026 = vpack.c.b16 %v1017, %v1016
      %v1027 = vpack.c.b16 %v1019, %v1018
      %v1028 = vpack.c.b16 %v1021, %v1020
      %v1029 = vpack.c.b16 %v1023, %v1022
      %v1030 = vpack.c.b16 %v1024, %v1024
      %v1031 = vrot.slane %v1025, 2
      %v1032 = vrot.slane %v1026, 2
      %v1033 = vsel %vm877, %v1031, %v1032
      %v1034 = vrot.slane %v1027, 2
      %v1035 = vsel %vm877, %v1032, %v1034
      %v1036 = vrot.slane %v1028, 2
      %v1037 = vsel %vm877, %v1034, %v1036
      %v1038 = vrot.slane %v1029, 2
      %v1039 = vsel %vm877, %v1036, %v1038
      %v1040 = vrot.slane %v1030, 2
      %v1041 = vsel %vm877, %v1038, %v1040
      %v1043 = vsel %vm259, %v1033, 0
      %v1046 = vsel %vm259, %v1035, 0
      %v1049 = vsel %vm259, %v1037, 0
      %v1052 = vsel %vm259, %v1039, 0
      %v1055 = vsel %vm259, %v1041, 0
      %v1058 = vsel %vm275, %v1002, 0
      %1060 = vmatprep.subr.bf16.mxu0 0
      %1061 = vmatpush1.bf16.msra.mxu0 0
      %1062 = vmatprep.subr.bf16.mxu0 0
      %1063 = vmatpush1.bf16.msra.mxu0 0
      %1064 = vmatprep.subr.bf16.mxu0 0
      %1065 = vmatpush1.bf16.msra.mxu0 0
      %1066 = vmatprep.subr.bf16.mxu0 0
      %1067 = vmatpush1.bf16.msra.mxu0 0
      %1068 = vmatprep.subr.bf16.mxu0 0
      %1069 = vmatpush1.bf16.msra.mxu0 0
      %1070 = vmatprep.subr.bf16.mxu0 0
      %1071 = vmatpush1.bf16.msra.mxu0 0
      %1072 = vmatprep.subr.bf16.mxu0 0
      %1073 = vmatpush1.bf16.msra.mxu0 0
      %1074 = vmatprep.subr.bf16.mxu0 0
      %1075 = vmatpush1.bf16.msra.mxu0 %v1058
      %1076 = vmatprep.subr.bf16.mxu0 0
      %1077 = vmatpush2.bf16.msra.mxu0 0
      %1078 = vmatprep.subr.bf16.mxu0 0
      %1079 = vmatpush2.bf16.msra.mxu0 0
      %1080 = vmatprep.subr.bf16.mxu0 0
      %1081 = vmatpush2.bf16.msra.mxu0 0
      %1082 = vmatprep.subr.bf16.mxu0 0
      %1083 = vmatpush2.bf16.msra.mxu0 0
      %1084 = vmatprep.subr.bf16.mxu0 0
      %1085 = vmatpush2.bf16.msra.mxu0 0
      %1086 = vmatprep.subr.bf16.mxu0 0
      %1087 = vmatpush2.bf16.msra.mxu0 0
      %1088 = vmatprep.subr.bf16.mxu0 0
      %1089 = vmatpush2.bf16.msra.mxu0 0
      %1090 = vmatprep.subr.bf16.mxu0 0
      %1091 = vmatpush2.bf16.msra.mxu0 0
      %1092 = vmatprep.mubr.bf16.mxu0 0
      %1093 = vmatmul.mubr.bf16.gmra.mxu0 %v1043
      %v1094 = vpop.f32.mrf.mxu0
      %v1095 = vadd.f32 0.0, %v1094
      %v1096 = vpop.f32.mrf.mxu0
      %v1097 = vpop.f32.mrf.mxu0
      %v1098 = vadd.f32 0.0, %v1097
      %v1099 = vpop.f32.mrf.mxu0
      %1100 = vmatprep.mubr.bf16.mxu0 0
      %1101 = vmatmul.mubr.bf16.gmra.mxu0 %v1046
      %v1102 = vpop.f32.mrf.mxu0
      %v1103 = vadd.f32 0.0, %v1102
      %v1104 = vpop.f32.mrf.mxu0
      %v1105 = vpop.f32.mrf.mxu0
      %v1106 = vadd.f32 0.0, %v1105
      %v1107 = vpop.f32.mrf.mxu0
      %1108 = vmatprep.mubr.bf16.mxu0 0
      %1109 = vmatmul.mubr.bf16.gmra.mxu0 %v1049
      %v1110 = vpop.f32.mrf.mxu0
      %v1111 = vadd.f32 0.0, %v1110
      %v1112 = vpop.f32.mrf.mxu0
      %v1113 = vpop.f32.mrf.mxu0
      %v1114 = vadd.f32 0.0, %v1113
      %v1115 = vpop.f32.mrf.mxu0
      %1116 = vmatprep.mubr.bf16.mxu0 0
      %1117 = vmatmul.mubr.bf16.gmra.mxu0 %v1052
      %v1118 = vpop.f32.mrf.mxu0
      %v1119 = vadd.f32 0.0, %v1118
      %v1120 = vpop.f32.mrf.mxu0
      %v1121 = vpop.f32.mrf.mxu0
      %v1122 = vadd.f32 0.0, %v1121
      %v1123 = vpop.f32.mrf.mxu0
      %1124 = vmatprep.mubr.bf16.mxu0 0
      %1125 = vmatmul.mubr.bf16.gmra.mxu0 %v1055
      %v1126 = vpop.f32.mrf.mxu0
      %v1127 = vadd.f32 0.0, %v1126
      %v1128 = vpop.f32.mrf.mxu0
      %v1129 = vpop.f32.mrf.mxu0
      %v1130 = vadd.f32 0.0, %v1129
      %v1131 = vpop.f32.mrf.mxu0
      %1132 = vdwg.mxu0
      %v1133 = vadd.f32 %v980, %v1095
      %v1134 = vadd.f32 %v981, %v1098
      %v1135 = vadd.f32 %v982, %v1103
      %v1136 = vadd.f32 %v983, %v1106
      %v1137 = vadd.f32 %v984, %v1111
      %v1138 = vadd.f32 %v985, %v1114
      %v1139 = vadd.f32 %v986, %v1119
      %v1140 = vadd.f32 %v987, %v1122
      %v1141 = vadd.f32 %v988, %v1127
      %v1142 = vadd.f32 %v989, %v1130
      %v1143 = vld [vmem:[%s165 + $0x30] sm:$0x7]
      %s1144 = scalar_lea.vmem %s1, 28
      %v1145 = vld [vmem:[%s1144] sm:$0xf]
      %v1147 = vunpack.c.l.b16 %v1143
      %v1148 = vpack.c.b16 %v1147, %v1147
      %vm1149 = vsmask.f32 5376
      %v1151 = vshrl.u32 %v1025, 16
      %v1153 = vrot.slane %v1151, 2
      %v1154 = vshll.u32 %v1025, 16
      %v1156 = vrot.slane %v1154, 3
      %v1157 = vor.u32 %v1153, %v1156
      %v1159 = vshrl.u32 %v1026, 16
      %v1161 = vrot.slane %v1159, 2
      %v1162 = vshll.u32 %v1026, 16
      %v1164 = vrot.slane %v1162, 3
      %v1165 = vor.u32 %v1161, %v1164
      %v1166 = vsel %vm1149, %v1157, %v1165
      %v1168 = vshrl.u32 %v1027, 16
      %v1170 = vrot.slane %v1168, 2
      %v1171 = vshll.u32 %v1027, 16
      %v1173 = vrot.slane %v1171, 3
      %v1174 = vor.u32 %v1170, %v1173
      %v1175 = vsel %vm1149, %v1165, %v1174
      %v1177 = vshrl.u32 %v1028, 16
      %v1179 = vrot.slane %v1177, 2
      %v1180 = vshll.u32 %v1028, 16
      %v1182 = vrot.slane %v1180, 3
      %v1183 = vor.u32 %v1179, %v1182
      %v1184 = vsel %vm1149, %v1174, %v1183
      %v1186 = vshrl.u32 %v1029, 16
      %v1188 = vrot.slane %v1186, 2
      %v1189 = vshll.u32 %v1029, 16
      %v1191 = vrot.slane %v1189, 3
      %v1192 = vor.u32 %v1188, %v1191
      %v1193 = vsel %vm1149, %v1183, %v1192
      %v1195 = vshrl.u32 %v1148, 16
      %v1197 = vrot.slane %v1195, 2
      %v1198 = vshll.u32 %v1148, 16
      %v1200 = vrot.slane %v1198, 3
      %v1201 = vor.u32 %v1197, %v1200
      %v1202 = vsel %vm1149, %v1192, %v1201
      %v1204 = vsel %vm259, %v1166, 0
      %v1207 = vsel %vm259, %v1175, 0
      %v1210 = vsel %vm259, %v1184, 0
      %v1213 = vsel %vm259, %v1193, 0
      %v1216 = vsel %vm259, %v1202, 0
      %v1219 = vsel %vm275, %v1145, 0
      %1221 = vmatprep.subr.bf16.mxu0 0
      %1222 = vmatpush1.bf16.msra.mxu0 0
      %1223 = vmatprep.subr.bf16.mxu0 0
      %1224 = vmatpush1.bf16.msra.mxu0 0
      %1225 = vmatprep.subr.bf16.mxu0 0
      %1226 = vmatpush1.bf16.msra.mxu0 0
      %1227 = vmatprep.subr.bf16.mxu0 0
      %1228 = vmatpush1.bf16.msra.mxu0 0
      %1229 = vmatprep.subr.bf16.mxu0 0
      %1230 = vmatpush1.bf16.msra.mxu0 0
      %1231 = vmatprep.subr.bf16.mxu0 0
      %1232 = vmatpush1.bf16.msra.mxu0 0
      %1233 = vmatprep.subr.bf16.mxu0 0
      %1234 = vmatpush1.bf16.msra.mxu0 0
      %1235 = vmatprep.subr.bf16.mxu0 0
      %1236 = vmatpush1.bf16.msra.mxu0 %v1219
      %1237 = vmatprep.subr.bf16.mxu0 0
      %1238 = vmatpush2.bf16.msra.mxu0 0
      %1239 = vmatprep.subr.bf16.mxu0 0
      %1240 = vmatpush2.bf16.msra.mxu0 0
      %1241 = vmatprep.subr.bf16.mxu0 0
      %1242 = vmatpush2.bf16.msra.mxu0 0
      %1243 = vmatprep.subr.bf16.mxu0 0
      %1244 = vmatpush2.bf16.msra.mxu0 0
      %1245 = vmatprep.subr.bf16.mxu0 0
      %1246 = vmatpush2.bf16.msra.mxu0 0
      %1247 = vmatprep.subr.bf16.mxu0 0
      %1248 = vmatpush2.bf16.msra.mxu0 0
      %1249 = vmatprep.subr.bf16.mxu0 0
      %1250 = vmatpush2.bf16.msra.mxu0 0
      %1251 = vmatprep.subr.bf16.mxu0 0
      %1252 = vmatpush2.bf16.msra.mxu0 0
      %1253 = vmatprep.mubr.bf16.mxu0 0
      %1254 = vmatmul.mubr.bf16.gmra.mxu0 %v1204
      %v1255 = vpop.f32.mrf.mxu0
      %v1256 = vadd.f32 0.0, %v1255
      %v1257 = vpop.f32.mrf.mxu0
      %v1258 = vpop.f32.mrf.mxu0
      %v1259 = vadd.f32 0.0, %v1258
      %v1260 = vpop.f32.mrf.mxu0
      %1261 = vmatprep.mubr.bf16.mxu0 0
      %1262 = vmatmul.mubr.bf16.gmra.mxu0 %v1207
      %v1263 = vpop.f32.mrf.mxu0
      %v1264 = vadd.f32 0.0, %v1263
      %v1265 = vpop.f32.mrf.mxu0
      %v1266 = vpop.f32.mrf.mxu0
      %v1267 = vadd.f32 0.0, %v1266
      %v1268 = vpop.f32.mrf.mxu0
      %1269 = vmatprep.mubr.bf16.mxu0 0
      %1270 = vmatmul.mubr.bf16.gmra.mxu0 %v1210
      %v1271 = vpop.f32.mrf.mxu0
      %v1272 = vadd.f32 0.0, %v1271
      %v1273 = vpop.f32.mrf.mxu0
      %v1274 = vpop.f32.mrf.mxu0
      %v1275 = vadd.f32 0.0, %v1274
      %v1276 = vpop.f32.mrf.mxu0
      %1277 = vmatprep.mubr.bf16.mxu0 0
      %1278 = vmatmul.mubr.bf16.gmra.mxu0 %v1213
      %v1279 = vpop.f32.mrf.mxu0
      %v1280 = vadd.f32 0.0, %v1279
      %v1281 = vpop.f32.mrf.mxu0
      %v1282 = vpop.f32.mrf.mxu0
      %v1283 = vadd.f32 0.0, %v1282
      %v1284 = vpop.f32.mrf.mxu0
      %1285 = vmatprep.mubr.bf16.mxu0 0
      %1286 = vmatmul.mubr.bf16.gmra.mxu0 %v1216
      %v1287 = vpop.f32.mrf.mxu0
      %v1288 = vadd.f32 0.0, %v1287
      %v1289 = vpop.f32.mrf.mxu0
      %v1290 = vpop.f32.mrf.mxu0
      %v1291 = vadd.f32 0.0, %v1290
      %v1292 = vpop.f32.mrf.mxu0
      %1293 = vdwg.mxu0
      %v1294 = vadd.f32 %v1133, %v1256
      %v1295 = vadd.f32 %v1134, %v1259
      %v1296 = vadd.f32 %v1135, %v1264
      %v1297 = vadd.f32 %v1136, %v1267
      %v1298 = vadd.f32 %v1137, %v1272
      %v1299 = vadd.f32 %v1138, %v1275
      %v1300 = vadd.f32 %v1139, %v1280
      %v1301 = vadd.f32 %v1140, %v1283
      %v1302 = vadd.f32 %v1141, %v1288
      %v1303 = vadd.f32 %v1142, %v1291
      %v1304 = vld [vmem:[%s165 + $0x8] sm:$0x8]
      %s1305 = scalar_lea.vmem %s1, 32
      %v1306 = vld [vmem:[%s1305] sm:$0xf]
      %v1308 = vunpack.c.l.b16 %v1304
      %v1309 = vpack.c.b16 %v1015, %v1308
      %vm1310 = vcmask 1044480
      %v1311 = vrot.slane %v1309, 3
      %v1312 = vrot.slane %v1026, 3
      %v1313 = vsel %vm1310, %v1311, %v1312
      %v1314 = vrot.slane %v1027, 3
      %v1315 = vsel %vm1310, %v1312, %v1314
      %v1316 = vrot.slane %v1028, 3
      %v1317 = vsel %vm1310, %v1314, %v1316
      %v1318 = vrot.slane %v1029, 3
      %v1319 = vsel %vm1310, %v1316, %v1318
      %v1320 = vrot.slane %v1148, 3
      %v1321 = vsel %vm1310, %v1318, %v1320
      %v1323 = vsel %vm259, %v1313, 0
      %v1326 = vsel %vm259, %v1315, 0
      %v1329 = vsel %vm259, %v1317, 0
      %v1332 = vsel %vm259, %v1319, 0
      %v1335 = vsel %vm259, %v1321, 0
      %v1338 = vsel %vm275, %v1306, 0
      %1340 = vmatprep.subr.bf16.mxu0 0
      %1341 = vmatpush1.bf16.msra.mxu0 0
      %1342 = vmatprep.subr.bf16.mxu0 0
      %1343 = vmatpush1.bf16.msra.mxu0 0
      %1344 = vmatprep.subr.bf16.mxu0 0
      %1345 = vmatpush1.bf16.msra.mxu0 0
      %1346 = vmatprep.subr.bf16.mxu0 0
      %1347 = vmatpush1.bf16.msra.mxu0 0
      %1348 = vmatprep.subr.bf16.mxu0 0
      %1349 = vmatpush1.bf16.msra.mxu0 0
      %1350 = vmatprep.subr.bf16.mxu0 0
      %1351 = vmatpush1.bf16.msra.mxu0 0
      %1352 = vmatprep.subr.bf16.mxu0 0
      %1353 = vmatpush1.bf16.msra.mxu0 0
      %1354 = vmatprep.subr.bf16.mxu0 0
      %1355 = vmatpush1.bf16.msra.mxu0 %v1338
      %1356 = vmatprep.subr.bf16.mxu0 0
      %1357 = vmatpush2.bf16.msra.mxu0 0
      %1358 = vmatprep.subr.bf16.mxu0 0
      %1359 = vmatpush2.bf16.msra.mxu0 0
      %1360 = vmatprep.subr.bf16.mxu0 0
      %1361 = vmatpush2.bf16.msra.mxu0 0
      %1362 = vmatprep.subr.bf16.mxu0 0
      %1363 = vmatpush2.bf16.msra.mxu0 0
      %1364 = vmatprep.subr.bf16.mxu0 0
      %1365 = vmatpush2.bf16.msra.mxu0 0
      %1366 = vmatprep.subr.bf16.mxu0 0
      %1367 = vmatpush2.bf16.msra.mxu0 0
      %1368 = vmatprep.subr.bf16.mxu0 0
      %1369 = vmatpush2.bf16.msra.mxu0 0
      %1370 = vmatprep.subr.bf16.mxu0 0
      %1371 = vmatpush2.bf16.msra.mxu0 0
      %1372 = vmatprep.mubr.bf16.mxu0 0
      %1373 = vmatmul.mubr.bf16.gmra.mxu0 %v1323
      %v1374 = vpop.f32.mrf.mxu0
      %v1375 = vadd.f32 0.0, %v1374
      %v1376 = vpop.f32.mrf.mxu0
      %v1377 = vpop.f32.mrf.mxu0
      %v1378 = vadd.f32 0.0, %v1377
      %v1379 = vpop.f32.mrf.mxu0
      %1380 = vmatprep.mubr.bf16.mxu0 0
      %1381 = vmatmul.mubr.bf16.gmra.mxu0 %v1326
      %v1382 = vpop.f32.mrf.mxu0
      %v1383 = vadd.f32 0.0, %v1382
      %v1384 = vpop.f32.mrf.mxu0
      %v1385 = vpop.f32.mrf.mxu0
      %v1386 = vadd.f32 0.0, %v1385
      %v1387 = vpop.f32.mrf.mxu0
      %1388 = vmatprep.mubr.bf16.mxu0 0
      %1389 = vmatmul.mubr.bf16.gmra.mxu0 %v1329
      %v1390 = vpop.f32.mrf.mxu0
      %v1391 = vadd.f32 0.0, %v1390
      %v1392 = vpop.f32.mrf.mxu0
      %v1393 = vpop.f32.mrf.mxu0
      %v1394 = vadd.f32 0.0, %v1393
      %v1395 = vpop.f32.mrf.mxu0
      %1396 = vmatprep.mubr.bf16.mxu0 0
      %1397 = vmatmul.mubr.bf16.gmra.mxu0 %v1332
      %v1398 = vpop.f32.mrf.mxu0
      %v1399 = vadd.f32 0.0, %v1398
      %v1400 = vpop.f32.mrf.mxu0
      %v1401 = vpop.f32.mrf.mxu0
      %v1402 = vadd.f32 0.0, %v1401
      %v1403 = vpop.f32.mrf.mxu0
      %1404 = vmatprep.mubr.bf16.mxu0 0
      %1405 = vmatmul.mubr.bf16.gmra.mxu0 %v1335
      %v1406 = vpop.f32.mrf.mxu0
      %v1407 = vadd.f32 0.0, %v1406
      %v1408 = vpop.f32.mrf.mxu0
      %v1409 = vpop.f32.mrf.mxu0
      %v1410 = vadd.f32 0.0, %v1409
      %v1411 = vpop.f32.mrf.mxu0
      %1412 = vdwg.mxu0
      %v1413 = vadd.f32 %v1294, %v1375
      %v1414 = vadd.f32 %v1295, %v1378
      %v1415 = vadd.f32 %v1296, %v1383
      %v1416 = vadd.f32 %v1297, %v1386
      %v1417 = vadd.f32 %v1298, %v1391
      %v1418 = vadd.f32 %v1299, %v1394
      %v1419 = vadd.f32 %v1300, %v1399
      %v1420 = vadd.f32 %v1301, %v1402
      %v1421 = vadd.f32 %v1302, %v1407
      %v1422 = vadd.f32 %v1303, %v1410
      %v1423 = vld [vmem:[%s2] sm:$0x1]
      %v1425 = vlaneseq
      %v1426 = vshrl.u32 %v1425, 7
      %v1427 = vsub.s32 0, %v1426
      %v1428 = vrot.slane %v1423, %v1427
      %v1430 = vadd.f32 %v1413, %v1428
      %v1431 = vadd.f32 %v1414, %v1428
      %v1432 = vadd.f32 %v1415, %v1428
      %v1433 = vadd.f32 %v1416, %v1428
      %v1434 = vadd.f32 %v1417, %v1428
      %v1435 = vadd.f32 %v1418, %v1428
      %v1436 = vadd.f32 %v1419, %v1428
      %v1437 = vadd.f32 %v1420, %v1428
      %v1438 = vadd.f32 %v1421, %v1428
      %v1439 = vadd.f32 %v1422, %v1428
      %v1440 = vmax.f32 %v1430, 0.0
      %v1441 = vmax.f32 %v1431, 0.0
      %v1442 = vmax.f32 %v1432, 0.0
      %v1443 = vmax.f32 %v1433, 0.0
      %v1444 = vmax.f32 %v1434, 0.0
      %v1445 = vmax.f32 %v1435, 0.0
      %v1446 = vmax.f32 %v1436, 0.0
      %v1447 = vmax.f32 %v1437, 0.0
      %v1448 = vmax.f32 %v1438, 0.0
      %v1449 = vmax.f32 %v1439, 0.0
      %v1450 = vpack.c.bf16 %v1441, %v1440
      %v1451 = vpack.c.bf16 %v1443, %v1442
      %v1452 = vpack.c.bf16 %v1445, %v1444
      %v1453 = vpack.c.bf16 %v1447, %v1446
      %v1454 = vpack.c.bf16 %v1449, %v1448
      %v1460 = vunpack.c.l.b16 %v1450
      %v1461 = vunpack.c.h.b16 %v1450
      %v1462 = vunpack.c.l.b16 %v1451
      %v1463 = vunpack.c.h.b16 %v1451
      %v1464 = vunpack.c.l.b16 %v1452
      %v1465 = vunpack.c.h.b16 %v1452
      %v1466 = vunpack.c.l.b16 %v1453
      %v1467 = vunpack.c.h.b16 %v1453
      %v1468 = vunpack.c.l.b16 %v1454
      %v1469 = vunpack.c.h.b16 %v1454
      %v1470 = vpack.c.b16 %v1460, %v1460
      %v1471 = vpack.c.b16 %v1461, %v1461
      %v1472 = vpack.c.b16 %v1462, %v1462
      %v1473 = vpack.c.b16 %v1463, %v1463
      %v1474 = vpack.c.b16 %v1464, %v1464
      %v1475 = vpack.c.b16 %v1465, %v1465
      %v1476 = vpack.c.b16 %v1466, %v1466
      %v1477 = vpack.c.b16 %v1467, %v1467
      %v1478 = vpack.c.b16 %v1468, %v1468
      %v1479 = vpack.c.b16 %v1469, %v1469
      %vm1490 = vcmask 60416
      %1491 = vst.msk [vmem:[%s170] sm:$0xf] %vm1490, %v1470
      %1492 = vst.msk [vmem:[%s170 + $0x4] sm:$0xf] %vm1490, %v1471
      %1493 = vst.msk [vmem:[%s170 + $0x8] sm:$0xf] %vm1490, %v1472
      %1494 = vst.msk [vmem:[%s170 + $0xc] sm:$0xf] %vm1490, %v1473
      %1495 = vst.msk [vmem:[%s170 + $0x10] sm:$0xf] %vm1490, %v1474
      %1496 = vst.msk [vmem:[%s170 + $0x14] sm:$0xf] %vm1490, %v1475
      %1497 = vst.msk [vmem:[%s170 + $0x18] sm:$0xf] %vm1490, %v1476
      %1498 = vst.msk [vmem:[%s170 + $0x1c] sm:$0xf] %vm1490, %v1477
      %1499 = vst.msk [vmem:[%s170 + $0x20] sm:$0xf] %vm1490, %v1478
      %1500 = vst.msk [vmem:[%s170 + $0x24] sm:$0xf] %vm1490, %v1479
      %p1501 = scmp.lt.s32.totalorder %s14, 1
      %s1502 = scalar_select %p1501, %s14, 1
      %s1503 = smul.addr %s1502, 10
      %s1504 = smul.addr %s1503, 4
      %s1505 = scalar_lea.vmem %s3, %s1504
      // Predicated region
      $region33: #{change_detection_forward.18} parent=31 // pred_check
        %p1506 = pneg %p100
      $region34: #{change_detection_forward.18} parent=31 // pred_check_branch
        %1508 = sbr.rel (%p1506) target = $region36
      $region35: #{change_detection_forward.18} parent=31 // pred_region
        _
      $region36: #{change_detection_forward.18} parent=31 // pred_fallthru
        _
    $region32: #{change_detection_forward.18} parent=5 // pred_fallthru
      _
    %p1509 = scmp.le.s32.totalorder 2, %s9
    // Predicated region
    $region37: #{change_detection_forward.18} parent=5 // pred_check
      %p1510 = pneg %p1509
    $region38: #{change_detection_forward.18} parent=5 // pred_check_branch
      %1512 = sbr.rel (%p1510) target = $region40
    $region39: #{change_detection_forward.18} parent=5 // pred_region
      %s1513 = ssub.s32 %s9, 2
      // Predicated region
      $region41: #{change_detection_forward.18} parent=39 // pred_check
        %p1514 = pneg %p106
      $region42: #{change_detection_forward.18} parent=39 // pred_check_branch
        %1516 = sbr.rel (%p1514) target = $region44
      $region43: #{change_detection_forward.18} parent=39 // pred_region
        %p1517 = scmp.lt.s32.totalorder %s15, 1
        %s1518 = scalar_select %p1517, %s15, 1
        %s1519 = smul.addr %s1518, 10
        %s1520 = smul.addr %s1519, 4
        %s1521 = scalar_lea.vmem %s3, %s1520
      $region44: #{change_detection_forward.18} parent=39 // pred_fallthru
        _
    $region40: #{change_detection_forward.18} parent=5 // pred_fallthru
      _
  $region6: #{change_detection_forward.18} parent=0 // loop_footer
    %s13 = sadd.s32 1, %s9
  $region7: #{change_detection_forward.18} parent=0 // loop_footer_branch
    %8 = sbr.rel target = $region3
  $region8: #{change_detection_forward.18} parent=0 // loop_exit
    _

// kernel: change_detection_forward.19
$region0: #{change_detection_forward.19}
  #allocation0 [shape = 'u32[]', space=smem, size = 0x4, offset = 0x4, fixed_abs, tag = 'smem constant byte address 0x4 - core index']
  #allocation1 [shape = 'u32[144,128]{1,0:T(1,128)}', space=vmem, size = 0x12000, scoped, tag = 'internal scratch']
  %s0 = inlined_call_operand.vmem [shape: bf16[2,110,8], index: 0, kind: input, shape index: {}]
  %s1 = inlined_call_operand.vmem [shape: bf16[9,8,8], index: 1, kind: input, shape index: {}]
  %s2 = inlined_call_operand.vmem [shape: f32[1,8], index: 2, kind: input, shape index: {}]
  %s3 = inlined_call_operand.vmem [shape: bf16[8,2], index: 3, kind: input, shape index: {}]
  %s4 = inlined_call_operand.vmem [shape: f32[1,2], index: 4, kind: input, shape index: {}]
  %s5 = inlined_call_operand.vmem [shape: f32[2,80,2], index: 5, kind: output, shape index: {}]
  %s6 = sld [smem:[#allocation0]]
  $region53: #{change_detection_forward.19} parent=0
    _
  %s8 = ssub.s32 1, %s6
  %s9 = scalar_select 0, %s8, %s6
  loop: start=0, step=1, limit=4
  $region2: #{change_detection_forward.19} parent=0 // loop_pre_header
    _
  $region3: #{change_detection_forward.19} parent=0 // loop_header
    %s11 = sphi 0, %s15
    %p12 = scmp.ge.s32.totalorder %s11, 4
    %s21 = sphi 0, %s23
    %s24 = sphi 0, %s21
    %s25 = sphi 0, %s24
    %s41 = sphi 0, %s25
    %s45 = sphi 0, %s45
    %s47 = sphi 0, %s45
    %s48 = sphi 0, %s47
    %s62 = sphi 0, %s48
    %s66 = sphi 0, %s66
    %s68 = sphi 0, %s66
    %s69 = sphi 0, %s68
    %s83 = sphi 0, %s69
    %s87 = sphi 0, %s87
    %s89 = sphi 0, %s87
    %s90 = sphi 0, %s89
    %s104 = sphi 0, %s90
    %s108 = sphi 0, %s108
    %s110 = sphi 0, %s108
    %s111 = sphi 0, %s110
    %s125 = sphi 0, %s111
    %s131 = sphi 0, %s133
    %s134 = sphi 0, %s131
    %s135 = sphi 0, %s134
    %s151 = sphi 0, %s135
  $region4: #{change_detection_forward.19} parent=0 // loop_header_branch
    %14 = sbr.rel (%p12) target = $region8
  $region5: #{change_detection_forward.19} parent=0 // loop_body
    %s16 = ssub.s32 %s11, 1
    %s17 = ssub.s32 %s11, 2
    %s18 = sadd.s32 %s11, 1
    %s19 = ssub.s32 %s11, %s18
    %p20 = scmp.eq.s32.totalorder %s19, 0
    %s22 = sadd.s32 %s21, 1
    %s23 = scalar_select %p20, %s21, %s22
    %p26 = pneg %p20
    %p27 = scmp.eq.s32.totalorder %s11, 1
    %p28 = por %p26, %p27
    %p29 = scmp.ne.s32.totalorder %s21, %s24
    %p30 = scmp.eq.s32.totalorder %s11, 0
    %p31 = por %p29, %p30
    %p32 = scmp.ne.s32.totalorder %s21, %s24
    %p33 = scmp.eq.s32.totalorder %s16, 1
    %p34 = por %p32, %p33
    %p35 = scmp.ne.s32.totalorder %s24, %s25
    %p36 = scmp.eq.s32.totalorder %s16, 0
    %p37 = por %p35, %p36
    %p38 = scmp.ne.s32.totalorder %s24, %s25
    %p39 = scmp.eq.s32.totalorder %s17, 1
    %p40 = por %p38, %p39
    %p42 = scmp.ne.s32.totalorder %s25, %s41
    %p43 = scmp.eq.s32.totalorder %s17, 0
    %p44 = por %p42, %p43
    %s46 = sadd.s32 %s45, 1
    %p49 = scmp.eq.s32.totalorder %s11, 1
    %p50 = scmp.ne.s32.totalorder %s45, %s47
    %p51 = scmp.eq.s32.totalorder %s11, 0
    %p52 = por %p50, %p51
    %p53 = scmp.ne.s32.totalorder %s45, %s47
    %p54 = scmp.eq.s32.totalorder %s16, 1
    %p55 = por %p53, %p54
    %p56 = scmp.ne.s32.totalorder %s47, %s48
    %p57 = scmp.eq.s32.totalorder %s16, 0
    %p58 = por %p56, %p57
    %p59 = scmp.ne.s32.totalorder %s47, %s48
    %p60 = scmp.eq.s32.totalorder %s17, 1
    %p61 = por %p59, %p60
    %p63 = scmp.ne.s32.totalorder %s48, %s62
    %p64 = scmp.eq.s32.totalorder %s17, 0
    %p65 = por %p63, %p64
    %s67 = sadd.s32 %s66, 1
    %p70 = scmp.eq.s32.totalorder %s11, 1
    %p71 = scmp.ne.s32.totalorder %s66, %s68
    %p72 = scmp.eq.s32.totalorder %s11, 0
    %p73 = por %p71, %p72
    %p74 = scmp.ne.s32.totalorder %s66, %s68
    %p75 = scmp.eq.s32.totalorder %s16, 1
    %p76 = por %p74, %p75
    %p77 = scmp.ne.s32.totalorder %s68, %s69
    %p78 = scmp.eq.s32.totalorder %s16, 0
    %p79 = por %p77, %p78
    %p80 = scmp.ne.s32.totalorder %s68, %s69
    %p81 = scmp.eq.s32.totalorder %s17, 1
    %p82 = por %p80, %p81
    %p84 = scmp.ne.s32.totalorder %s69, %s83
    %p85 = scmp.eq.s32.totalorder %s17, 0
    %p86 = por %p84, %p85
    %s88 = sadd.s32 %s87, 1
    %p91 = scmp.eq.s32.totalorder %s11, 1
    %p92 = scmp.ne.s32.totalorder %s87, %s89
    %p93 = scmp.eq.s32.totalorder %s11, 0
    %p94 = por %p92, %p93
    %p95 = scmp.ne.s32.totalorder %s87, %s89
    %p96 = scmp.eq.s32.totalorder %s16, 1
    %p97 = por %p95, %p96
    %p98 = scmp.ne.s32.totalorder %s89, %s90
    %p99 = scmp.eq.s32.totalorder %s16, 0
    %p100 = por %p98, %p99
    %p101 = scmp.ne.s32.totalorder %s89, %s90
    %p102 = scmp.eq.s32.totalorder %s17, 1
    %p103 = por %p101, %p102
    %p105 = scmp.ne.s32.totalorder %s90, %s104
    %p106 = scmp.eq.s32.totalorder %s17, 0
    %p107 = por %p105, %p106
    %s109 = sadd.s32 %s108, 1
    %p112 = scmp.eq.s32.totalorder %s11, 1
    %p113 = scmp.ne.s32.totalorder %s108, %s110
    %p114 = scmp.eq.s32.totalorder %s11, 0
    %p115 = por %p113, %p114
    %p116 = scmp.ne.s32.totalorder %s108, %s110
    %p117 = scmp.eq.s32.totalorder %s16, 1
    %p118 = por %p116, %p117
    %p119 = scmp.ne.s32.totalorder %s110, %s111
    %p120 = scmp.eq.s32.totalorder %s16, 0
    %p121 = por %p119, %p120
    %p122 = scmp.ne.s32.totalorder %s110, %s111
    %p123 = scmp.eq.s32.totalorder %s17, 1
    %p124 = por %p122, %p123
    %p126 = scmp.ne.s32.totalorder %s111, %s125
    %p127 = scmp.eq.s32.totalorder %s17, 0
    %p128 = por %p126, %p127
    %s129 = ssub.s32 %s11, %s18
    %p130 = scmp.eq.s32.totalorder %s129, 0
    %s132 = sadd.s32 %s131, 1
    %s133 = scalar_select %p130, %s131, %s132
    %p136 = pneg %p130
    %p137 = scmp.eq.s32.totalorder %s11, 1
    %p138 = por %p136, %p137
    %p139 = scmp.ne.s32.totalorder %s131, %s134
    %p140 = scmp.eq.s32.totalorder %s11, 0
    %p141 = por %p139, %p140
    %p142 = scmp.ne.s32.totalorder %s131, %s134
    %p143 = scmp.eq.s32.totalorder %s16, 1
    %p144 = por %p142, %p143
    %p145 = scmp.ne.s32.totalorder %s134, %s135
    %p146 = scmp.eq.s32.totalorder %s16, 0
    %p147 = por %p145, %p146
    %p148 = scmp.ne.s32.totalorder %s134, %s135
    %p149 = scmp.eq.s32.totalorder %s17, 1
    %p150 = por %p148, %p149
    %p152 = scmp.ne.s32.totalorder %s135, %s151
    %p153 = scmp.eq.s32.totalorder %s17, 0
    %p154 = por %p152, %p153
    %p155 = scmp.le.s32.totalorder 1, %s11
    %p156 = scmp.lt.s32.totalorder %s11, 3
    %p157 = pnand %p155, %p156
    %p158 = pneg %p157
    // Predicated region
    $region9: #{change_detection_forward.19} parent=5 // pred_check
      _
    $region10: #{change_detection_forward.19} parent=5 // pred_check_branch
      %160 = sbr.rel (%p157) target = $region12
    $region11: #{change_detection_forward.19} parent=5 // pred_region
      %s161 = ssub.s32 %s11, 1
      // Predicated region
      $region13: #{change_detection_forward.19} parent=11 // pred_check
        %p162 = pneg %p58
      $region14: #{change_detection_forward.19} parent=11 // pred_check_branch
        %164 = sbr.rel (%p162) target = $region16
      $region15: #{change_detection_forward.19} parent=11 // pred_region
        _
      $region16: #{change_detection_forward.19} parent=11 // pred_fallthru
        _
      // Predicated region
      $region17: #{change_detection_forward.19} parent=11 // pred_check
        %p165 = pneg %p79
      $region18: #{change_detection_forward.19} parent=11 // pred_check_branch
        %167 = sbr.rel (%p165) target = $region20
      $region19: #{change_detection_forward.19} parent=11 // pred_region
        _
      $region20: #{change_detection_forward.19} parent=11 // pred_fallthru
        _
      // Predicated region
      $region21: #{change_detection_forward.19} parent=11 // pred_check
        %p168 = pneg %p100
      $region22: #{change_detection_forward.19} parent=11 // pred_check_branch
        %170 = sbr.rel (%p168) target = $region24
      $region23: #{change_detection_forward.19} parent=11 // pred_region
        _
      $region24: #{change_detection_forward.19} parent=11 // pred_fallthru
        _
      // Predicated region
      $region25: #{change_detection_forward.19} parent=11 // pred_check
        %p171 = pneg %p121
      $region26: #{change_detection_forward.19} parent=11 // pred_check_branch
        %173 = sbr.rel (%p171) target = $region28
      $region27: #{change_detection_forward.19} parent=11 // pred_region
        _
      $region28: #{change_detection_forward.19} parent=11 // pred_fallthru
        _
    $region12: #{change_detection_forward.19} parent=5 // pred_fallthru
      _
    %p174 = scmp.lt.s32.totalorder %s11, 2
    // Predicated region
    $region29: #{change_detection_forward.19} parent=5 // pred_check
      %p175 = pneg %p174
    $region30: #{change_detection_forward.19} parent=5 // pred_check_branch
      %177 = sbr.rel (%p175) target = $region32
    $region31: #{change_detection_forward.19} parent=5 // pred_region
      // Predicated region
      $region33: #{change_detection_forward.19} parent=31 // pred_check
        %p178 = pneg %p31
      $region34: #{change_detection_forward.19} parent=31 // pred_check_branch
        %180 = sbr.rel (%p178) target = $region36
      $region35: #{change_detection_forward.19} parent=31 // pred_region
        %p181 = scmp.lt.s32.totalorder %s11, 1
        %s182 = scalar_select %p181, %s11, 1
        %s183 = smul.addr %s182, 14
        %s184 = smul.addr %s183, 4
        %s185 = scalar_lea.vmem %s0, %s184
      $region36: #{change_detection_forward.19} parent=31 // pred_fallthru
        _
    $region32: #{change_detection_forward.19} parent=5 // pred_fallthru
      _
    %p186 = scmp.le.s32.totalorder 1, %s11
    %p187 = scmp.lt.s32.totalorder %s11, 3
    %p188 = pnand %p186, %p187
    %p189 = pneg %p188
    // Predicated region
    $region37: #{change_detection_forward.19} parent=5 // pred_check
      _
    $region38: #{change_detection_forward.19} parent=5 // pred_check_branch
      %191 = sbr.rel (%p188) target = $region40
    $region39: #{change_detection_forward.19} parent=5 // pred_region
      %s192 = ssub.s32 %s11, 1
      %p193 = scmp.lt.s32.totalorder %s16, 1
      %s194 = scalar_select %p193, %s16, 1
      %s195 = smul.addr %s194, 14
      %s196 = smul.addr %s195, 4
      %s197 = scalar_lea.vmem %s0, %s196
      %p198 = pneg %p37
      %p199 = pneg %p34
      %p200 = pneg %p58
      %p201 = pneg %p55
      %p202 = pneg %p79
      %p203 = pneg %p76
      %p204 = pneg %p100
      %p205 = pneg %p97
      %p206 = pneg %p121
      %p207 = pneg %p118
      %p208 = pneg %p147
      %p209 = pneg %p144
      %p210 = scmp.lt.s32.totalorder %s16, 1
      %s211 = scalar_select %p210, %s16, 1
      %s212 = smul.addr %s211, 10
      %s213 = smul.addr %s212, 8
      %s214 = scalar_lea.vmem %s5, %s213
      %p215 = scmp.lt.s32.totalorder %s16, 1
      %s216 = scalar_select %p215, %s16, 1
      %s217 = smul.addr %s216, 14
      %s218 = smul.addr %s217, 4
      %s219 = scalar_lea.vmem %s0, %s218
      %p220 = scmp.lt.s32.totalorder %s16, 1
      %s221 = scalar_select %p220, %s16, 1
      %s222 = smul.addr %s221, 10
      %s223 = smul.addr %s222, 8
      %s224 = scalar_lea.vmem %s5, %s223
      %v226 = vld [vmem:[%s219] sm:$0xf]
      %v227 = vld [vmem:[%s219 + $0x4] sm:$0xf]
      %v228 = vld [vmem:[%s219 + $0x8] sm:$0xf]
      %v229 = vld [vmem:[%s219 + $0xc] sm:$0xf]
      %v230 = vld [vmem:[%s219 + $0x10] sm:$0xf]
      %v231 = vld [vmem:[%s219 + $0x14] sm:$0xf]
      %v232 = vld [vmem:[%s219 + $0x18] sm:$0xf]
      %v233 = vld [vmem:[%s219 + $0x1c] sm:$0xf]
      %v234 = vld [vmem:[%s219 + $0x20] sm:$0xf]
      %v235 = vld [vmem:[%s219 + $0x24] sm:$0xf]
      %v236 = vld [vmem:[%s1] sm:$0xf]
      %v237 = vld [vmem:[%s219 + $0x28] sm:$0x1]
      %s238 = scalar_lea.vmem %s1, 4
      %v239 = vld [vmem:[%s238] sm:$0xf]
      %v251 = vunpack.c.l.b16 %v226
      %v252 = vunpack.c.l.b16 %v227
      %v253 = vunpack.c.l.b16 %v228
      %v254 = vunpack.c.l.b16 %v229
      %v255 = vunpack.c.l.b16 %v230
      %v256 = vunpack.c.l.b16 %v231
      %v257 = vunpack.c.l.b16 %v232
      %v258 = vunpack.c.l.b16 %v233
      %v259 = vunpack.c.l.b16 %v234
      %v260 = vunpack.c.l.b16 %v235
      %v261 = vunpack.c.l.b16 %v237
      %v262 = vpack.c.b16 %v252, %v251
      %v263 = vpack.c.b16 %v254, %v253
      %v264 = vpack.c.b16 %v256, %v255
      %v265 = vpack.c.b16 %v258, %v257
      %v266 = vpack.c.b16 %v260, %v259
      %v267 = vpack.c.b16 %v261, %v261
      %vm268 = vsmask.f32 7424
      %v270 = vshrl.u32 %v262, 16
      %v272 = vshll.u32 %v262, 16
      %v274 = vrot.slane %v272, 1
      %v275 = vor.u32 %v270, %v274
      %v277 = vshll.u32 %v263, 16
      %v279 = vrot.slane %v277, 1
      %v280 = vsel %vm268, %v275, %v279
      %v281 = vshrl.u32 %v263, 16
      %v283 = vor.u32 %v281, %v279
      %v285 = vshll.u32 %v264, 16
      %v287 = vrot.slane %v285, 1
      %v288 = vsel %vm268, %v283, %v287
      %v289 = vshrl.u32 %v264, 16
      %v291 = vor.u32 %v289, %v287
      %v293 = vshll.u32 %v265, 16
      %v295 = vrot.slane %v293, 1
      %v296 = vsel %vm268, %v291, %v295
      %v297 = vshrl.u32 %v265, 16
      %v299 = vor.u32 %v297, %v295
      %v301 = vshll.u32 %v266, 16
      %v303 = vrot.slane %v301, 1
      %v304 = vsel %vm268, %v299, %v303
      %v305 = vshrl.u32 %v266, 16
      %v307 = vor.u32 %v305, %v303
      %v309 = vshll.u32 %v267, 16
      %v311 = vrot.slane %v309, 1
      %v312 = vsel %vm268, %v307, %v311
      %vm313 = vcmask 64512
      %v315 = vsel %vm313, %v280, 0
      %v318 = vsel %vm313, %v288, 0
      %v321 = vsel %vm313, %v296, 0
      %v324 = vsel %vm313, %v304, 0
      %v327 = vsel %vm313, %v312, 0
      %vm329 = vcmask 1043456
      %v331 = vsel %vm329, %v239, 0
      %333 = vmatprep.subr.bf16.mxu0 0
      %334 = vmatpush1.bf16.msra.mxu0 0
      %335 = vmatprep.subr.bf16.mxu0 0
      %336 = vmatpush1.bf16.msra.mxu0 0
      %337 = vmatprep.subr.bf16.mxu0 0
      %338 = vmatpush1.bf16.msra.mxu0 0
      %339 = vmatprep.subr.bf16.mxu0 0
      %340 = vmatpush1.bf16.msra.mxu0 0
      %341 = vmatprep.subr.bf16.mxu0 0
      %342 = vmatpush1.bf16.msra.mxu0 0
      %343 = vmatprep.subr.bf16.mxu0 0
      %344 = vmatpush1.bf16.msra.mxu0 0
      %345 = vmatprep.subr.bf16.mxu0 0
      %346 = vmatpush1.bf16.msra.mxu0 0
      %347 = vmatprep.subr.bf16.mxu0 0
      %348 = vmatpush1.bf16.msra.mxu0 %v331
      %349 = vmatprep.subr.bf16.mxu0 0
      %350 = vmatpush2.bf16.msra.mxu0 0
      %351 = vmatprep.subr.bf16.mxu0 0
      %352 = vmatpush2.bf16.msra.mxu0 0
      %353 = vmatprep.subr.bf16.mxu0 0
      %354 = vmatpush2.bf16.msra.mxu0 0
      %355 = vmatprep.subr.bf16.mxu0 0
      %356 = vmatpush2.bf16.msra.mxu0 0
      %357 = vmatprep.subr.bf16.mxu0 0
      %358 = vmatpush2.bf16.msra.mxu0 0
      %359 = vmatprep.subr.bf16.mxu0 0
      %360 = vmatpush2.bf16.msra.mxu0 0
      %361 = vmatprep.subr.bf16.mxu0 0
      %362 = vmatpush2.bf16.msra.mxu0 0
      %363 = vmatprep.subr.bf16.mxu0 0
      %364 = vmatpush2.bf16.msra.mxu0 0
      %365 = vmatprep.mubr.bf16.mxu0 0
      %366 = vmatmul.mubr.bf16.gmra.mxu0 %v315
      %v367 = vpop.f32.mrf.mxu0
      %v368 = vadd.f32 0.0, %v367
      %v369 = vpop.f32.mrf.mxu0
      %v370 = vpop.f32.mrf.mxu0
      %v371 = vadd.f32 0.0, %v370
      %v372 = vpop.f32.mrf.mxu0
      %373 = vmatprep.mubr.bf16.mxu0 0
      %374 = vmatmul.mubr.bf16.gmra.mxu0 %v318
      %v375 = vpop.f32.mrf.mxu0
      %v376 = vadd.f32 0.0, %v375
      %v377 = vpop.f32.mrf.mxu0
      %v378 = vpop.f32.mrf.mxu0
      %v379 = vadd.f32 0.0, %v378
      %v380 = vpop.f32.mrf.mxu0
      %381 = vmatprep.mubr.bf16.mxu0 0
      %382 = vmatmul.mubr.bf16.gmra.mxu0 %v321
      %v383 = vpop.f32.mrf.mxu0
      %v384 = vadd.f32 0.0, %v383
      %v385 = vpop.f32.mrf.mxu0
      %v386 = vpop.f32.mrf.mxu0
      %v387 = vadd.f32 0.0, %v386
      %v388 = vpop.f32.mrf.mxu0
      %389 = vmatprep.mubr.bf16.mxu0 0
      %390 = vmatmul.mubr.bf16.gmra.mxu0 %v324
      %v391 = vpop.f32.mrf.mxu0
      %v392 = vadd.f32 0.0, %v391
      %v393 = vpop.f32.mrf.mxu0
      %v394 = vpop.f32.mrf.mxu0
      %v395 = vadd.f32 0.0, %v394
      %v396 = vpop.f32.mrf.mxu0
      %397 = vmatprep.mubr.bf16.mxu0 0
      %398 = vmatmul.mubr.bf16.gmra.mxu0 %v327
      %v399 = vpop.f32.mrf.mxu0
      %v400 = vadd.f32 0.0, %v399
      %v401 = vpop.f32.mrf.mxu0
      %v402 = vpop.f32.mrf.mxu0
      %v403 = vadd.f32 0.0, %v402
      %v404 = vpop.f32.mrf.mxu0
      %405 = vdwg.mxu0
      %v406 = vsel %vm313, %v262, 0
      %v408 = vsel %vm313, %v263, 0
      %v410 = vsel %vm313, %v264, 0
      %v412 = vsel %vm313, %v265, 0
      %v414 = vsel %vm313, %v266, 0
      %v417 = vsel %vm329, %v236, 0
      %419 = vmatprep.subr.bf16.mxu0 0
      %420 = vmatpush1.bf16.msra.mxu0 0
      %421 = vmatprep.subr.bf16.mxu0 0
      %422 = vmatpush1.bf16.msra.mxu0 0
      %423 = vmatprep.subr.bf16.mxu0 0
      %424 = vmatpush1.bf16.msra.mxu0 0
      %425 = vmatprep.subr.bf16.mxu0 0
      %426 = vmatpush1.bf16.msra.mxu0 0
      %427 = vmatprep.subr.bf16.mxu0 0
      %428 = vmatpush1.bf16.msra.mxu0 0
      %429 = vmatprep.subr.bf16.mxu0 0
      %430 = vmatpush1.bf16.msra.mxu0 0
      %431 = vmatprep.subr.bf16.mxu0 0
      %432 = vmatpush1.bf16.msra.mxu0 0
      %433 = vmatprep.subr.bf16.mxu0 0
      %434 = vmatpush1.bf16.msra.mxu0 %v417
      %435 = vmatprep.subr.bf16.mxu0 0
      %436 = vmatpush2.bf16.msra.mxu0 0
      %437 = vmatprep.subr.bf16.mxu0 0
      %438 = vmatpush2.bf16.msra.mxu0 0
      %439 = vmatprep.subr.bf16.mxu0 0
      %440 = vmatpush2.bf16.msra.mxu0 0
      %441 = vmatprep.subr.bf16.mxu0 0
      %442 = vmatpush2.bf16.msra.mxu0 0
      %443 = vmatprep.subr.bf16.mxu0 0
      %444 = vmatpush2.bf16.msra.mxu0 0
      %445 = vmatprep.subr.bf16.mxu0 0
      %446 = vmatpush2.bf16.msra.mxu0 0
      %447 = vmatprep.subr.bf16.mxu0 0
      %448 = vmatpush2.bf16.msra.mxu0 0
      %449 = vmatprep.subr.bf16.mxu0 0
      %450 = vmatpush2.bf16.msra.mxu0 0
      %451 = vmatprep.mubr.bf16.mxu0 0
      %452 = vmatmul.mubr.bf16.gmra.mxu0 %v406
      %v453 = vpop.f32.mrf.mxu0
      %v454 = vadd.f32 %v368, %v453
      %v455 = vpop.f32.mrf.mxu0
      %v456 = vpop.f32.mrf.mxu0
      %v457 = vadd.f32 %v371, %v456
      %v458 = vpop.f32.mrf.mxu0
      %459 = vmatprep.mubr.bf16.mxu0 0
      %460 = vmatmul.mubr.bf16.gmra.mxu0 %v408
      %v461 = vpop.f32.mrf.mxu0
      %v462 = vadd.f32 %v376, %v461
      %v463 = vpop.f32.mrf.mxu0
      %v464 = vpop.f32.mrf.mxu0
      %v465 = vadd.f32 %v379, %v464
      %v466 = vpop.f32.mrf.mxu0
      %467 = vmatprep.mubr.bf16.mxu0 0
      %468 = vmatmul.mubr.bf16.gmra.mxu0 %v410
      %v469 = vpop.f32.mrf.mxu0
      %v470 = vadd.f32 %v384, %v469
      %v471 = vpop.f32.mrf.mxu0
      %v472 = vpop.f32.mrf.mxu0
      %v473 = vadd.f32 %v387, %v472
      %v474 = vpop.f32.mrf.mxu0
      %475 = vmatprep.mubr.bf16.mxu0 0
      %476 = vmatmul.mubr.bf16.gmra.mxu0 %v412
      %v477 = vpop.f32.mrf.mxu0
      %v478 = vadd.f32 %v392, %v477
      %v479 = vpop.f32.mrf.mxu0
      %v480 = vpop.f32.mrf.mxu0
      %v481 = vadd.f32 %v395, %v480
      %v482 = vpop.f32.mrf.mxu0
      %483 = vmatprep.mubr.bf16.mxu0 0
      %484 = vmatmul.mubr.bf16.gmra.mxu0 %v414
      %v485 = vpop.f32.mrf.mxu0
      %v486 = vadd.f32 %v400, %v485
      %v487 = vpop.f32.mrf.mxu0
      %v488 = vpop.f32.mrf.mxu0
      %v489 = vadd.f32 %v403, %v488
      %v490 = vpop.f32.mrf.mxu0
      %491 = vdwg.mxu0
      %v492 = vld [vmem:[%s219] sm:$0xe]
      %s493 = scalar_lea.vmem %s1, 8
      %v494 = vld [vmem:[%s493] sm:$0xf]
      %v496 = vunpack.c.l.b16 %v492
      %v497 = vpack.c.b16 %v252, %v496
      %vm498 = vcmask 1046528
      %v499 = vrot.slane %v497, 1
      %v500 = vrot.slane %v263, 1
      %v501 = vsel %vm498, %v499, %v500
      %v502 = vrot.slane %v264, 1
      %v503 = vsel %vm498, %v500, %v502
      %v504 = vrot.slane %v265, 1
      %v505 = vsel %vm498, %v502, %v504
      %v506 = vrot.slane %v266, 1
      %v507 = vsel %vm498, %v504, %v506
      %v508 = vrot.slane %v267, 1
      %v509 = vsel %vm498, %v506, %v508
      %v511 = vsel %vm313, %v501, 0
      %v514 = vsel %vm313, %v503, 0
      %v517 = vsel %vm313, %v505, 0
      %v520 = vsel %vm313, %v507, 0
      %v523 = vsel %vm313, %v509, 0
      %v526 = vsel %vm329, %v494, 0
      %528 = vmatprep.subr.bf16.mxu0 0
      %529 = vmatpush1.bf16.msra.mxu0 0
      %530 = vmatprep.subr.bf16.mxu0 0
      %531 = vmatpush1.bf16.msra.mxu0 0
      %532 = vmatprep.subr.bf16.mxu0 0
      %533 = vmatpush1.bf16.msra.mxu0 0
      %534 = vmatprep.subr.bf16.mxu0 0
      %535 = vmatpush1.bf16.msra.mxu0 0
      %536 = vmatprep.subr.bf16.mxu0 0
      %537 = vmatpush1.bf16.msra.mxu0 0
      %538 = vmatprep.subr.bf16.mxu0 0
      %539 = vmatpush1.bf16.msra.mxu0 0
      %540 = vmatprep.subr.bf16.mxu0 0
      %541 = vmatpush1.bf16.msra.mxu0 0
      %542 = vmatprep.subr.bf16.mxu0 0
      %543 = vmatpush1.bf16.msra.mxu0 %v526
      %544 = vmatprep.subr.bf16.mxu0 0
      %545 = vmatpush2.bf16.msra.mxu0 0
      %546 = vmatprep.subr.bf16.mxu0 0
      %547 = vmatpush2.bf16.msra.mxu0 0
      %548 = vmatprep.subr.bf16.mxu0 0
      %549 = vmatpush2.bf16.msra.mxu0 0
      %550 = vmatprep.subr.bf16.mxu0 0
      %551 = vmatpush2.bf16.msra.mxu0 0
      %552 = vmatprep.subr.bf16.mxu0 0
      %553 = vmatpush2.bf16.msra.mxu0 0
      %554 = vmatprep.subr.bf16.mxu0 0
      %555 = vmatpush2.bf16.msra.mxu0 0
      %556 = vmatprep.subr.bf16.mxu0 0
      %557 = vmatpush2.bf16.msra.mxu0 0
      %558 = vmatprep.subr.bf16.mxu0 0
      %559 = vmatpush2.bf16.msra.mxu0 0
      %560 = vmatprep.mubr.bf16.mxu0 0
      %561 = vmatmul.mubr.bf16.gmra.mxu0 %v511
      %v562 = vpop.f32.mrf.mxu0
      %v563 = vadd.f32 0.0, %v562
      %v564 = vpop.f32.mrf.mxu0
      %v565 = vpop.f32.mrf.mxu0
      %v566 = vadd.f32 0.0, %v565
      %v567 = vpop.f32.mrf.mxu0
      %568 = vmatprep.mubr.bf16.mxu0 0
      %569 = vmatmul.mubr.bf16.gmra.mxu0 %v514
      %v570 = vpop.f32.mrf.mxu0
      %v571 = vadd.f32 0.0, %v570
      %v572 = vpop.f32.mrf.mxu0
      %v573 = vpop.f32.mrf.mxu0
      %v574 = vadd.f32 0.0, %v573
      %v575 = vpop.f32.mrf.mxu0
      %576 = vmatprep.mubr.bf16.mxu0 0
      %577 = vmatmul.mubr.bf16.gmra.mxu0 %v517
      %v578 = vpop.f32.mrf.mxu0
      %v579 = vadd.f32 0.0, %v578
      %v580 = vpop.f32.mrf.mxu0
      %v581 = vpop.f32.mrf.mxu0
      %v582 = vadd.f32 0.0, %v581
      %v583 = vpop.f32.mrf.mxu0
      %584 = vmatprep.mubr.bf16.mxu0 0
      %585 = vmatmul.mubr.bf16.gmra.mxu0 %v520
      %v586 = vpop.f32.mrf.mxu0
      %v587 = vadd.f32 0.0, %v586
      %v588 = vpop.f32.mrf.mxu0
      %v589 = vpop.f32.mrf.mxu0
      %v590 = vadd.f32 0.0, %v589
      %v591 = vpop.f32.mrf.mxu0
      %592 = vmatprep.mubr.bf16.mxu0 0
      %593 = vmatmul.mubr.bf16.gmra.mxu0 %v523
      %v594 = vpop.f32.mrf.mxu0
      %v595 = vadd.f32 0.0, %v594
      %v596 = vpop.f32.mrf.mxu0
      %v597 = vpop.f32.mrf.mxu0
      %v598 = vadd.f32 0.0, %v597
      %v599 = vpop.f32.mrf.mxu0
      %600 = vdwg.mxu0
      %v601 = vadd.f32 %v454, %v563
      %v602 = vadd.f32 %v457, %v566
      %v603 = vadd.f32 %v462, %v571
      %v604 = vadd.f32 %v465, %v574
      %v605 = vadd.f32 %v470, %v579
      %v606 = vadd.f32 %v473, %v582
      %v607 = vadd.f32 %v478, %v587
      %v608 = vadd.f32 %v481, %v590
      %v609 = vadd.f32 %v486, %v595
      %v610 = vadd.f32 %v489, %v598
      %v611 = vld [vmem:[%s219 + $0x4] sm:$0xe]
      %v612 = vld [vmem:[%s219 + $0x8] sm:$0xf]
      %v613 = vld [vmem:[%s219 + $0xc] sm:$0xf]
      %v614 = vld [vmem:[%s219 + $0x10] sm:$0xf]
      %v615 = vld [vmem:[%s219 + $0x14] sm:$0xf]
      %v616 = vld [vmem:[%s219 + $0x18] sm:$0xf]
      %v617 = vld [vmem:[%s219 + $0x1c] sm:$0xf]
      %v618 = vld [vmem:[%s219 + $0x20] sm:$0xf]
      %v619 = vld [vmem:[%s219 + $0x24] sm:$0xf]
      %v620 = vld [vmem:[%s219 + $0x28] sm:$0xf]
      %v621 = vld [vmem:[%s219 + $0x2c] sm:$0x1]
      %s622 = scalar_lea.vmem %s1, 12
      %v623 = vld [vmem:[%s622] sm:$0xf]
      %v635 = vunpack.c.l.b16 %v611
      %v636 = vunpack.c.l.b16 %v612
      %v637 = vunpack.c.l.b16 %v613
      %v638 = vunpack.c.l.b16 %v614
      %v639 = vunpack.c.l.b16 %v615
      %v640 = vunpack.c.l.b16 %v616
      %v641 = vunpack.c.l.b16 %v617
      %v642 = vunpack.c.l.b16 %v618
      %v643 = vunpack.c.l.b16 %v619
      %v644 = vunpack.c.l.b16 %v620
      %v645 = vunpack.c.l.b16 %v621
      %v646 = vpack.c.b16 %v636, %v635
      %v647 = vpack.c.b16 %v638, %v637
      %v648 = vpack.c.b16 %v640, %v639
      %v649 = vpack.c.b16 %v642, %v641
      %v650 = vpack.c.b16 %v644, %v643
      %v651 = vpack.c.b16 %v645, %v645
      %v652 = vrot.slane %v646, 1
      %v653 = vrot.slane %v647, 1
      %v654 = vsel %vm498, %v652, %v653
      %v655 = vrot.slane %v648, 1
      %v656 = vsel %vm498, %v653, %v655
      %v657 = vrot.slane %v649, 1
      %v658 = vsel %vm498, %v655, %v657
      %v659 = vrot.slane %v650, 1
      %v660 = vsel %vm498, %v657, %v659
      %v661 = vrot.slane %v651, 1
      %v662 = vsel %vm498, %v659, %v661
      %v664 = vsel %vm313, %v654, 0
      %v667 = vsel %vm313, %v656, 0
      %v670 = vsel %vm313, %v658, 0
      %v673 = vsel %vm313, %v660, 0
      %v676 = vsel %vm313, %v662, 0
      %v679 = vsel %vm329, %v623, 0
      %681 = vmatprep.subr.bf16.mxu0 0
      %682 = vmatpush1.bf16.msra.mxu0 0
      %683 = vmatprep.subr.bf16.mxu0 0
      %684 = vmatpush1.bf16.msra.mxu0 0
      %685 = vmatprep.subr.bf16.mxu0 0
      %686 = vmatpush1.bf16.msra.mxu0 0
      %687 = vmatprep.subr.bf16.mxu0 0
      %688 = vmatpush1.bf16.msra.mxu0 0
      %689 = vmatprep.subr.bf16.mxu0 0
      %690 = vmatpush1.bf16.msra.mxu0 0
      %691 = vmatprep.subr.bf16.mxu0 0
      %692 = vmatpush1.bf16.msra.mxu0 0
      %693 = vmatprep.subr.bf16.mxu0 0
      %694 = vmatpush1.bf16.msra.mxu0 0
      %695 = vmatprep.subr.bf16.mxu0 0
      %696 = vmatpush1.bf16.msra.mxu0 %v679
      %697 = vmatprep.subr.bf16.mxu0 0
      %698 = vmatpush2.bf16.msra.mxu0 0
      %699 = vmatprep.subr.bf16.mxu0 0
      %700 = vmatpush2.bf16.msra.mxu0 0
      %701 = vmatprep.subr.bf16.mxu0 0
      %702 = vmatpush2.bf16.msra.mxu0 0
      %703 = vmatprep.subr.bf16.mxu0 0
      %704 = vmatpush2.bf16.msra.mxu0 0
      %705 = vmatprep.subr.bf16.mxu0 0
      %706 = vmatpush2.bf16.msra.mxu0 0
      %707 = vmatprep.subr.bf16.mxu0 0
      %708 = vmatpush2.bf16.msra.mxu0 0
      %709 = vmatprep.subr.bf16.mxu0 0
      %710 = vmatpush2.bf16.msra.mxu0 0
      %711 = vmatprep.subr.bf16.mxu0 0
      %712 = vmatpush2.bf16.msra.mxu0 0
      %713 = vmatprep.mubr.bf16.mxu0 0
      %714 = vmatmul.mubr.bf16.gmra.mxu0 %v664
      %v715 = vpop.f32.mrf.mxu0
      %v716 = vadd.f32 0.0, %v715
      %v717 = vpop.f32.mrf.mxu0
      %v718 = vpop.f32.mrf.mxu0
      %v719 = vadd.f32 0.0, %v718
      %v720 = vpop.f32.mrf.mxu0
      %721 = vmatprep.mubr.bf16.mxu0 0
      %722 = vmatmul.mubr.bf16.gmra.mxu0 %v667
      %v723 = vpop.f32.mrf.mxu0
      %v724 = vadd.f32 0.0, %v723
      %v725 = vpop.f32.mrf.mxu0
      %v726 = vpop.f32.mrf.mxu0
      %v727 = vadd.f32 0.0, %v726
      %v728 = vpop.f32.mrf.mxu0
      %729 = vmatprep.mubr.bf16.mxu0 0
      %730 = vmatmul.mubr.bf16.gmra.mxu0 %v670
      %v731 = vpop.f32.mrf.mxu0
      %v732 = vadd.f32 0.0, %v731
      %v733 = vpop.f32.mrf.mxu0
      %v734 = vpop.f32.mrf.mxu0
      %v735 = vadd.f32 0.0, %v734
      %v736 = vpop.f32.mrf.mxu0
      %737 = vmatprep.mubr.bf16.mxu0 0
      %738 = vmatmul.mubr.bf16.gmra.mxu0 %v673
      %v739 = vpop.f32.mrf.mxu0
      %v740 = vadd.f32 0.0, %v739
      %v741 = vpop.f32.mrf.mxu0
      %v742 = vpop.f32.mrf.mxu0
      %v743 = vadd.f32 0.0, %v742
      %v744 = vpop.f32.mrf.mxu0
      %745 = vmatprep.mubr.bf16.mxu0 0
      %746 = vmatmul.mubr.bf16.gmra.mxu0 %v676
      %v747 = vpop.f32.mrf.mxu0
      %v748 = vadd.f32 0.0, %v747
      %v749 = vpop.f32.mrf.mxu0
      %v750 = vpop.f32.mrf.mxu0
      %v751 = vadd.f32 0.0, %v750
      %v752 = vpop.f32.mrf.mxu0
      %753 = vdwg.mxu0
      %v754 = vadd.f32 %v601, %v716
      %v755 = vadd.f32 %v602, %v719
      %v756 = vadd.f32 %v603, %v724
      %v757 = vadd.f32 %v604, %v727
      %v758 = vadd.f32 %v605, %v732
      %v759 = vadd.f32 %v606, %v735
      %v760 = vadd.f32 %v607, %v740
      %v761 = vadd.f32 %v608, %v743
      %v762 = vadd.f32 %v609, %v748
      %v763 = vadd.f32 %v610, %v751
      %v764 = vld [vmem:[%s219 + $0x2c] sm:$0x3]
      %s765 = scalar_lea.vmem %s1, 16
      %v766 = vld [vmem:[%s765] sm:$0xf]
      %v768 = vunpack.c.l.b16 %v764
      %v769 = vpack.c.b16 %v768, %v768
      %vm770 = vsmask.f32 6400
      %v772 = vshrl.u32 %v646, 16
      %v774 = vrot.slane %v772, 1
      %v775 = vshll.u32 %v646, 16
      %v777 = vrot.slane %v775, 2
      %v778 = vor.u32 %v774, %v777
      %v780 = vshrl.u32 %v647, 16
      %v782 = vrot.slane %v780, 1
      %v783 = vshll.u32 %v647, 16
      %v785 = vrot.slane %v783, 2
      %v786 = vor.u32 %v782, %v785
      %v787 = vsel %vm770, %v778, %v786
      %v789 = vshrl.u32 %v648, 16
      %v791 = vrot.slane %v789, 1
      %v792 = vshll.u32 %v648, 16
      %v794 = vrot.slane %v792, 2
      %v795 = vor.u32 %v791, %v794
      %v796 = vsel %vm770, %v786, %v795
      %v798 = vshrl.u32 %v649, 16
      %v800 = vrot.slane %v798, 1
      %v801 = vshll.u32 %v649, 16
      %v803 = vrot.slane %v801, 2
      %v804 = vor.u32 %v800, %v803
      %v805 = vsel %vm770, %v795, %v804
      %v807 = vshrl.u32 %v650, 16
      %v809 = vrot.slane %v807, 1
      %v810 = vshll.u32 %v650, 16
      %v812 = vrot.slane %v810, 2
      %v813 = vor.u32 %v809, %v812
      %v814 = vsel %vm770, %v804, %v813
      %v816 = vshrl.u32 %v769, 16
      %v818 = vrot.slane %v816, 1
      %v819 = vshll.u32 %v769, 16
      %v821 = vrot.slane %v819, 2
      %v822 = vor.u32 %v818, %v821
      %v823 = vsel %vm770, %v813, %v822
      %v825 = vsel %vm313, %v787, 0
      %v828 = vsel %vm313, %v796, 0
      %v831 = vsel %vm313, %v805, 0
      %v834 = vsel %vm313, %v814, 0
      %v837 = vsel %vm313, %v823, 0
      %v840 = vsel %vm329, %v766, 0
      %842 = vmatprep.subr.bf16.mxu0 0
      %843 = vmatpush1.bf16.msra.mxu0 0
      %844 = vmatprep.subr.bf16.mxu0 0
      %845 = vmatpush1.bf16.msra.mxu0 0
      %846 = vmatprep.subr.bf16.mxu0 0
      %847 = vmatpush1.bf16.msra.mxu0 0
      %848 = vmatprep.subr.bf16.mxu0 0
      %849 = vmatpush1.bf16.msra.mxu0 0
      %850 = vmatprep.subr.bf16.mxu0 0
      %851 = vmatpush1.bf16.msra.mxu0 0
      %852 = vmatprep.subr.bf16.mxu0 0
      %853 = vmatpush1.bf16.msra.mxu0 0
      %854 = vmatprep.subr.bf16.mxu0 0
      %855 = vmatpush1.bf16.msra.mxu0 0
      %856 = vmatprep.subr.bf16.mxu0 0
      %857 = vmatpush1.bf16.msra.mxu0 %v840
      %858 = vmatprep.subr.bf16.mxu0 0
      %859 = vmatpush2.bf16.msra.mxu0 0
      %860 = vmatprep.subr.bf16.mxu0 0
      %861 = vmatpush2.bf16.msra.mxu0 0
      %862 = vmatprep.subr.bf16.mxu0 0
      %863 = vmatpush2.bf16.msra.mxu0 0
      %864 = vmatprep.subr.bf16.mxu0 0
      %865 = vmatpush2.bf16.msra.mxu0 0
      %866 = vmatprep.subr.bf16.mxu0 0
      %867 = vmatpush2.bf16.msra.mxu0 0
      %868 = vmatprep.subr.bf16.mxu0 0
      %869 = vmatpush2.bf16.msra.mxu0 0
      %870 = vmatprep.subr.bf16.mxu0 0
      %871 = vmatpush2.bf16.msra.mxu0 0
      %872 = vmatprep.subr.bf16.mxu0 0
      %873 = vmatpush2.bf16.msra.mxu0 0
      %874 = vmatprep.mubr.bf16.mxu0 0
      %875 = vmatmul.mubr.bf16.gmra.mxu0 %v825
      %v876 = vpop.f32.mrf.mxu0
      %v877 = vadd.f32 0.0, %v876
      %v878 = vpop.f32.mrf.mxu0
      %v879 = vpop.f32.mrf.mxu0
      %v880 = vadd.f32 0.0, %v879
      %v881 = vpop.f32.mrf.mxu0
      %882 = vmatprep.mubr.bf16.mxu0 0
      %883 = vmatmul.mubr.bf16.gmra.mxu0 %v828
      %v884 = vpop.f32.mrf.mxu0
      %v885 = vadd.f32 0.0, %v884
      %v886 = vpop.f32.mrf.mxu0
      %v887 = vpop.f32.mrf.mxu0
      %v888 = vadd.f32 0.0, %v887
      %v889 = vpop.f32.mrf.mxu0
      %890 = vmatprep.mubr.bf16.mxu0 0
      %891 = vmatmul.mubr.bf16.gmra.mxu0 %v831
      %v892 = vpop.f32.mrf.mxu0
      %v893 = vadd.f32 0.0, %v892
      %v894 = vpop.f32.mrf.mxu0
      %v895 = vpop.f32.mrf.mxu0
      %v896 = vadd.f32 0.0, %v895
      %v897 = vpop.f32.mrf.mxu0
      %898 = vmatprep.mubr.bf16.mxu0 0
      %899 = vmatmul.mubr.bf16.gmra.mxu0 %v834
      %v900 = vpop.f32.mrf.mxu0
      %v901 = vadd.f32 0.0, %v900
      %v902 = vpop.f32.mrf.mxu0
      %v903 = vpop.f32.mrf.mxu0
      %v904 = vadd.f32 0.0, %v903
      %v905 = vpop.f32.mrf.mxu0
      %906 = vmatprep.mubr.bf16.mxu0 0
      %907 = vmatmul.mubr.bf16.gmra.mxu0 %v837
      %v908 = vpop.f32.mrf.mxu0
      %v909 = vadd.f32 0.0, %v908
      %v910 = vpop.f32.mrf.mxu0
      %v911 = vpop.f32.mrf.mxu0
      %v912 = vadd.f32 0.0, %v911
      %v913 = vpop.f32.mrf.mxu0
      %914 = vdwg.mxu0
      %v915 = vadd.f32 %v754, %v877
      %v916 = vadd.f32 %v755, %v880
      %v917 = vadd.f32 %v756, %v885
      %v918 = vadd.f32 %v757, %v888
      %v919 = vadd.f32 %v758, %v893
      %v920 = vadd.f32 %v759, %v896
      %v921 = vadd.f32 %v760, %v901
      %v922 = vadd.f32 %v761, %v904
      %v923 = vadd.f32 %v762, %v909
      %v924 = vadd.f32 %v763, %v912
      %v925 = vld [vmem:[%s219 + $0x4] sm:$0xc]
      %s926 = scalar_lea.vmem %s1, 20
      %v927 = vld [vmem:[%s926] sm:$0xf]
      %v929 = vunpack.c.l.b16 %v925
      %v930 = vpack.c.b16 %v636, %v929
      %vm931 = vcmask 1045504
      %v932 = vrot.slane %v930, 2
      %v933 = vrot.slane %v647, 2
      %v934 = vsel %vm931, %v932, %v933
      %v935 = vrot.slane %v648, 2
      %v936 = vsel %vm931, %v933, %v935
      %v937 = vrot.slane %v649, 2
      %v938 = vsel %vm931, %v935, %v937
      %v939 = vrot.slane %v650, 2
      %v940 = vsel %vm931, %v937, %v939
      %v941 = vrot.slane %v769, 2
      %v942 = vsel %vm931, %v939, %v941
      %v944 = vsel %vm313, %v934, 0
      %v947 = vsel %vm313, %v936, 0
      %v950 = vsel %vm313, %v938, 0
      %v953 = vsel %vm313, %v940, 0
      %v956 = vsel %vm313, %v942, 0
      %v959 = vsel %vm329, %v927, 0
      %961 = vmatprep.subr.bf16.mxu0 0
      %962 = vmatpush1.bf16.msra.mxu0 0
      %963 = vmatprep.subr.bf16.mxu0 0
      %964 = vmatpush1.bf16.msra.mxu0 0
      %965 = vmatprep.subr.bf16.mxu0 0
      %966 = vmatpush1.bf16.msra.mxu0 0
      %967 = vmatprep.subr.bf16.mxu0 0
      %968 = vmatpush1.bf16.msra.mxu0 0
      %969 = vmatprep.subr.bf16.mxu0 0
      %970 = vmatpush1.bf16.msra.mxu0 0
      %971 = vmatprep.subr.bf16.mxu0 0
      %972 = vmatpush1.bf16.msra.mxu0 0
      %973 = vmatprep.subr.bf16.mxu0 0
      %974 = vmatpush1.bf16.msra.mxu0 0
      %975 = vmatprep.subr.bf16.mxu0 0
      %976 = vmatpush1.bf16.msra.mxu0 %v959
      %977 = vmatprep.subr.bf16.mxu0 0
      %978 = vmatpush2.bf16.msra.mxu0 0
      %979 = vmatprep.subr.bf16.mxu0 0
      %980 = vmatpush2.bf16.msra.mxu0 0
      %981 = vmatprep.subr.bf16.mxu0 0
      %982 = vmatpush2.bf16.msra.mxu0 0
      %983 = vmatprep.subr.bf16.mxu0 0
      %984 = vmatpush2.bf16.msra.mxu0 0
      %985 = vmatprep.subr.bf16.mxu0 0
      %986 = vmatpush2.bf16.msra.mxu0 0
      %987 = vmatprep.subr.bf16.mxu0 0
      %988 = vmatpush2.bf16.msra.mxu0 0
      %989 = vmatprep.subr.bf16.mxu0 0
      %990 = vmatpush2.bf16.msra.mxu0 0
      %991 = vmatprep.subr.bf16.mxu0 0
      %992 = vmatpush2.bf16.msra.mxu0 0
      %993 = vmatprep.mubr.bf16.mxu0 0
      %994 = vmatmul.mubr.bf16.gmra.mxu0 %v944
      %v995 = vpop.f32.mrf.mxu0
      %v996 = vadd.f32 0.0, %v995
      %v997 = vpop.f32.mrf.mxu0
      %v998 = vpop.f32.mrf.mxu0
      %v999 = vadd.f32 0.0, %v998
      %v1000 = vpop.f32.mrf.mxu0
      %1001 = vmatprep.mubr.bf16.mxu0 0
      %1002 = vmatmul.mubr.bf16.gmra.mxu0 %v947
      %v1003 = vpop.f32.mrf.mxu0
      %v1004 = vadd.f32 0.0, %v1003
      %v1005 = vpop.f32.mrf.mxu0
      %v1006 = vpop.f32.mrf.mxu0
      %v1007 = vadd.f32 0.0, %v1006
      %v1008 = vpop.f32.mrf.mxu0
      %1009 = vmatprep.mubr.bf16.mxu0 0
      %1010 = vmatmul.mubr.bf16.gmra.mxu0 %v950
      %v1011 = vpop.f32.mrf.mxu0
      %v1012 = vadd.f32 0.0, %v1011
      %v1013 = vpop.f32.mrf.mxu0
      %v1014 = vpop.f32.mrf.mxu0
      %v1015 = vadd.f32 0.0, %v1014
      %v1016 = vpop.f32.mrf.mxu0
      %1017 = vmatprep.mubr.bf16.mxu0 0
      %1018 = vmatmul.mubr.bf16.gmra.mxu0 %v953
      %v1019 = vpop.f32.mrf.mxu0
      %v1020 = vadd.f32 0.0, %v1019
      %v1021 = vpop.f32.mrf.mxu0
      %v1022 = vpop.f32.mrf.mxu0
      %v1023 = vadd.f32 0.0, %v1022
      %v1024 = vpop.f32.mrf.mxu0
      %1025 = vmatprep.mubr.bf16.mxu0 0
      %1026 = vmatmul.mubr.bf16.gmra.mxu0 %v956
      %v1027 = vpop.f32.mrf.mxu0
      %v1028 = vadd.f32 0.0, %v1027
      %v1029 = vpop.f32.mrf.mxu0
      %v1030 = vpop.f32.mrf.mxu0
      %v1031 = vadd.f32 0.0, %v1030
      %v1032 = vpop.f32.mrf.mxu0
      %1033 = vdwg.mxu0
      %v1034 = vadd.f32 %v915, %v996
      %v1035 = vadd.f32 %v916, %v999
      %v1036 = vadd.f32 %v917, %v1004
      %v1037 = vadd.f32 %v918, %v1007
      %v1038 = vadd.f32 %v919, %v1012
      %v1039 = vadd.f32 %v920, %v1015
      %v1040 = vadd.f32 %v921, %v1020
      %v1041 = vadd.f32 %v922, %v1023
      %v1042 = vadd.f32 %v923, %v1028
      %v1043 = vadd.f32 %v924, %v1031
      %v1044 = vld [vmem:[%s219 + $0x8] sm:$0xc]
      %v1045 = vld [vmem:[%s219 + $0xc] sm:$0xf]
      %v1046 = vld [vmem:[%s219 + $0x10] sm:$0xf]
      %v1047 = vld [vmem:[%s219 + $0x14] sm:$0xf]
      %v1048 = vld [vmem:[%s219 + $0x18] sm:$0xf]
      %v1049 = vld [vmem:[%s219 + $0x1c] sm:$0xf]
      %v1050 = vld [vmem:[%s219 + $0x20] sm:$0xf]
      %v1051 = vld [vmem:[%s219 + $0x24] sm:$0xf]
      %v1052 = vld [vmem:[%s219 + $0x28] sm:$0xf]
      %v1053 = vld [vmem:[%s219 + $0x2c] sm:$0xf]
      %v1054 = vld [vmem:[%s219 + $0x30] sm:$0x3]
      %s1055 = scalar_lea.vmem %s1, 24
      %v1056 = vld [vmem:[%s1055] sm:$0xf]
      %v1068 = vunpack.c.l.b16 %v1044
      %v1069 = vunpack.c.l.b16 %v1045
      %v1070 = vunpack.c.l.b16 %v1046
      %v1071 = vunpack.c.l.b16 %v1047
      %v1072 = vunpack.c.l.b16 %v1048
      %v1073 = vunpack.c.l.b16 %v1049
      %v1074 = vunpack.c.l.b16 %v1050
      %v1075 = vunpack.c.l.b16 %v1051
      %v1076 = vunpack.c.l.b16 %v1052
      %v1077 = vunpack.c.l.b16 %v1053
      %v1078 = vunpack.c.l.b16 %v1054
      %v1079 = vpack.c.b16 %v1069, %v1068
      %v1080 = vpack.c.b16 %v1071, %v1070
      %v1081 = vpack.c.b16 %v1073, %v1072
      %v1082 = vpack.c.b16 %v1075, %v1074
      %v1083 = vpack.c.b16 %v1077, %v1076
      %v1084 = vpack.c.b16 %v1078, %v1078
      %v1085 = vrot.slane %v1079, 2
      %v1086 = vrot.slane %v1080, 2
      %v1087 = vsel %vm931, %v1085, %v1086
      %v1088 = vrot.slane %v1081, 2
      %v1089 = vsel %vm931, %v1086, %v1088
      %v1090 = vrot.slane %v1082, 2
      %v1091 = vsel %vm931, %v1088, %v1090
      %v1092 = vrot.slane %v1083, 2
      %v1093 = vsel %vm931, %v1090, %v1092
      %v1094 = vrot.slane %v1084, 2
      %v1095 = vsel %vm931, %v1092, %v1094
      %v1097 = vsel %vm313, %v1087, 0
      %v1100 = vsel %vm313, %v1089, 0
      %v1103 = vsel %vm313, %v1091, 0
      %v1106 = vsel %vm313, %v1093, 0
      %v1109 = vsel %vm313, %v1095, 0
      %v1112 = vsel %vm329, %v1056, 0
      %1114 = vmatprep.subr.bf16.mxu0 0
      %1115 = vmatpush1.bf16.msra.mxu0 0
      %1116 = vmatprep.subr.bf16.mxu0 0
      %1117 = vmatpush1.bf16.msra.mxu0 0
      %1118 = vmatprep.subr.bf16.mxu0 0
      %1119 = vmatpush1.bf16.msra.mxu0 0
      %1120 = vmatprep.subr.bf16.mxu0 0
      %1121 = vmatpush1.bf16.msra.mxu0 0
      %1122 = vmatprep.subr.bf16.mxu0 0
      %1123 = vmatpush1.bf16.msra.mxu0 0
      %1124 = vmatprep.subr.bf16.mxu0 0
      %1125 = vmatpush1.bf16.msra.mxu0 0
      %1126 = vmatprep.subr.bf16.mxu0 0
      %1127 = vmatpush1.bf16.msra.mxu0 0
      %1128 = vmatprep.subr.bf16.mxu0 0
      %1129 = vmatpush1.bf16.msra.mxu0 %v1112
      %1130 = vmatprep.subr.bf16.mxu0 0
      %1131 = vmatpush2.bf16.msra.mxu0 0
      %1132 = vmatprep.subr.bf16.mxu0 0
      %1133 = vmatpush2.bf16.msra.mxu0 0
      %1134 = vmatprep.subr.bf16.mxu0 0
      %1135 = vmatpush2.bf16.msra.mxu0 0
      %1136 = vmatprep.subr.bf16.mxu0 0
      %1137 = vmatpush2.bf16.msra.mxu0 0
      %1138 = vmatprep.subr.bf16.mxu0 0
      %1139 = vmatpush2.bf16.msra.mxu0 0
      %1140 = vmatprep.subr.bf16.mxu0 0
      %1141 = vmatpush2.bf16.msra.mxu0 0
      %1142 = vmatprep.subr.bf16.mxu0 0
      %1143 = vmatpush2.bf16.msra.mxu0 0
      %1144 = vmatprep.subr.bf16.mxu0 0
      %1145 = vmatpush2.bf16.msra.mxu0 0
      %1146 = vmatprep.mubr.bf16.mxu0 0
      %1147 = vmatmul.mubr.bf16.gmra.mxu0 %v1097
      %v1148 = vpop.f32.mrf.mxu0
      %v1149 = vadd.f32 0.0, %v1148
      %v1150 = vpop.f32.mrf.mxu0
      %v1151 = vpop.f32.mrf.mxu0
      %v1152 = vadd.f32 0.0, %v1151
      %v1153 = vpop.f32.mrf.mxu0
      %1154 = vmatprep.mubr.bf16.mxu0 0
      %1155 = vmatmul.mubr.bf16.gmra.mxu0 %v1100
      %v1156 = vpop.f32.mrf.mxu0
      %v1157 = vadd.f32 0.0, %v1156
      %v1158 = vpop.f32.mrf.mxu0
      %v1159 = vpop.f32.mrf.mxu0
      %v1160 = vadd.f32 0.0, %v1159
      %v1161 = vpop.f32.mrf.mxu0
      %1162 = vmatprep.mubr.bf16.mxu0 0
      %1163 = vmatmul.mubr.bf16.gmra.mxu0 %v1103
      %v1164 = vpop.f32.mrf.mxu0
      %v1165 = vadd.f32 0.0, %v1164
      %v1166 = vpop.f32.mrf.mxu0
      %v1167 = vpop.f32.mrf.mxu0
      %v1168 = vadd.f32 0.0, %v1167
      %v1169 = vpop.f32.mrf.mxu0
      %1170 = vmatprep.mubr.bf16.mxu0 0
      %1171 = vmatmul.mubr.bf16.gmra.mxu0 %v1106
      %v1172 = vpop.f32.mrf.mxu0
      %v1173 = vadd.f32 0.0, %v1172
      %v1174 = vpop.f32.mrf.mxu0
      %v1175 = vpop.f32.mrf.mxu0
      %v1176 = vadd.f32 0.0, %v1175
      %v1177 = vpop.f32.mrf.mxu0
      %1178 = vmatprep.mubr.bf16.mxu0 0
      %1179 = vmatmul.mubr.bf16.gmra.mxu0 %v1109
      %v1180 = vpop.f32.mrf.mxu0
      %v1181 = vadd.f32 0.0, %v1180
      %v1182 = vpop.f32.mrf.mxu0
      %v1183 = vpop.f32.mrf.mxu0
      %v1184 = vadd.f32 0.0, %v1183
      %v1185 = vpop.f32.mrf.mxu0
      %1186 = vdwg.mxu0
      %v1187 = vadd.f32 %v1034, %v1149
      %v1188 = vadd.f32 %v1035, %v1152
      %v1189 = vadd.f32 %v1036, %v1157
      %v1190 = vadd.f32 %v1037, %v1160
      %v1191 = vadd.f32 %v1038, %v1165
      %v1192 = vadd.f32 %v1039, %v1168
      %v1193 = vadd.f32 %v1040, %v1173
      %v1194 = vadd.f32 %v1041, %v1176
      %v1195 = vadd.f32 %v1042, %v1181
      %v1196 = vadd.f32 %v1043, %v1184
      %v1197 = vld [vmem:[%s219 + $0x30] sm:$0x7]
      %s1198 = scalar_lea.vmem %s1, 28
      %v1199 = vld [vmem:[%s1198] sm:$0xf]
      %v1201 = vunpack.c.l.b16 %v1197
      %v1202 = vpack.c.b16 %v1201, %v1201
      %vm1203 = vsmask.f32 5376
      %v1205 = vshrl.u32 %v1079, 16
      %v1207 = vrot.slane %v1205, 2
      %v1208 = vshll.u32 %v1079, 16
      %v1210 = vrot.slane %v1208, 3
      %v1211 = vor.u32 %v1207, %v1210
      %v1213 = vshrl.u32 %v1080, 16
      %v1215 = vrot.slane %v1213, 2
      %v1216 = vshll.u32 %v1080, 16
      %v1218 = vrot.slane %v1216, 3
      %v1219 = vor.u32 %v1215, %v1218
      %v1220 = vsel %vm1203, %v1211, %v1219
      %v1222 = vshrl.u32 %v1081, 16
      %v1224 = vrot.slane %v1222, 2
      %v1225 = vshll.u32 %v1081, 16
      %v1227 = vrot.slane %v1225, 3
      %v1228 = vor.u32 %v1224, %v1227
      %v1229 = vsel %vm1203, %v1219, %v1228
      %v1231 = vshrl.u32 %v1082, 16
      %v1233 = vrot.slane %v1231, 2
      %v1234 = vshll.u32 %v1082, 16
      %v1236 = vrot.slane %v1234, 3
      %v1237 = vor.u32 %v1233, %v1236
      %v1238 = vsel %vm1203, %v1228, %v1237
      %v1240 = vshrl.u32 %v1083, 16
      %v1242 = vrot.slane %v1240, 2
      %v1243 = vshll.u32 %v1083, 16
      %v1245 = vrot.slane %v1243, 3
      %v1246 = vor.u32 %v1242, %v1245
      %v1247 = vsel %vm1203, %v1237, %v1246
      %v1249 = vshrl.u32 %v1202, 16
      %v1251 = vrot.slane %v1249, 2
      %v1252 = vshll.u32 %v1202, 16
      %v1254 = vrot.slane %v1252, 3
      %v1255 = vor.u32 %v1251, %v1254
      %v1256 = vsel %vm1203, %v1246, %v1255
      %v1258 = vsel %vm313, %v1220, 0
      %v1261 = vsel %vm313, %v1229, 0
      %v1264 = vsel %vm313, %v1238, 0
      %v1267 = vsel %vm313, %v1247, 0
      %v1270 = vsel %vm313, %v1256, 0
      %v1273 = vsel %vm329, %v1199, 0
      %1275 = vmatprep.subr.bf16.mxu0 0
      %1276 = vmatpush1.bf16.msra.mxu0 0
      %1277 = vmatprep.subr.bf16.mxu0 0
      %1278 = vmatpush1.bf16.msra.mxu0 0
      %1279 = vmatprep.subr.bf16.mxu0 0
      %1280 = vmatpush1.bf16.msra.mxu0 0
      %1281 = vmatprep.subr.bf16.mxu0 0
      %1282 = vmatpush1.bf16.msra.mxu0 0
      %1283 = vmatprep.subr.bf16.mxu0 0
      %1284 = vmatpush1.bf16.msra.mxu0 0
      %1285 = vmatprep.subr.bf16.mxu0 0
      %1286 = vmatpush1.bf16.msra.mxu0 0
      %1287 = vmatprep.subr.bf16.mxu0 0
      %1288 = vmatpush1.bf16.msra.mxu0 0
      %1289 = vmatprep.subr.bf16.mxu0 0
      %1290 = vmatpush1.bf16.msra.mxu0 %v1273
      %1291 = vmatprep.subr.bf16.mxu0 0
      %1292 = vmatpush2.bf16.msra.mxu0 0
      %1293 = vmatprep.subr.bf16.mxu0 0
      %1294 = vmatpush2.bf16.msra.mxu0 0
      %1295 = vmatprep.subr.bf16.mxu0 0
      %1296 = vmatpush2.bf16.msra.mxu0 0
      %1297 = vmatprep.subr.bf16.mxu0 0
      %1298 = vmatpush2.bf16.msra.mxu0 0
      %1299 = vmatprep.subr.bf16.mxu0 0
      %1300 = vmatpush2.bf16.msra.mxu0 0
      %1301 = vmatprep.subr.bf16.mxu0 0
      %1302 = vmatpush2.bf16.msra.mxu0 0
      %1303 = vmatprep.subr.bf16.mxu0 0
      %1304 = vmatpush2.bf16.msra.mxu0 0
      %1305 = vmatprep.subr.bf16.mxu0 0
      %1306 = vmatpush2.bf16.msra.mxu0 0
      %1307 = vmatprep.mubr.bf16.mxu0 0
      %1308 = vmatmul.mubr.bf16.gmra.mxu0 %v1258
      %v1309 = vpop.f32.mrf.mxu0
      %v1310 = vadd.f32 0.0, %v1309
      %v1311 = vpop.f32.mrf.mxu0
      %v1312 = vpop.f32.mrf.mxu0
      %v1313 = vadd.f32 0.0, %v1312
      %v1314 = vpop.f32.mrf.mxu0
      %1315 = vmatprep.mubr.bf16.mxu0 0
      %1316 = vmatmul.mubr.bf16.gmra.mxu0 %v1261
      %v1317 = vpop.f32.mrf.mxu0
      %v1318 = vadd.f32 0.0, %v1317
      %v1319 = vpop.f32.mrf.mxu0
      %v1320 = vpop.f32.mrf.mxu0
      %v1321 = vadd.f32 0.0, %v1320
      %v1322 = vpop.f32.mrf.mxu0
      %1323 = vmatprep.mubr.bf16.mxu0 0
      %1324 = vmatmul.mubr.bf16.gmra.mxu0 %v1264
      %v1325 = vpop.f32.mrf.mxu0
      %v1326 = vadd.f32 0.0, %v1325
      %v1327 = vpop.f32.mrf.mxu0
      %v1328 = vpop.f32.mrf.mxu0
      %v1329 = vadd.f32 0.0, %v1328
      %v1330 = vpop.f32.mrf.mxu0
      %1331 = vmatprep.mubr.bf16.mxu0 0
      %1332 = vmatmul.mubr.bf16.gmra.mxu0 %v1267
      %v1333 = vpop.f32.mrf.mxu0
      %v1334 = vadd.f32 0.0, %v1333
      %v1335 = vpop.f32.mrf.mxu0
      %v1336 = vpop.f32.mrf.mxu0
      %v1337 = vadd.f32 0.0, %v1336
      %v1338 = vpop.f32.mrf.mxu0
      %1339 = vmatprep.mubr.bf16.mxu0 0
      %1340 = vmatmul.mubr.bf16.gmra.mxu0 %v1270
      %v1341 = vpop.f32.mrf.mxu0
      %v1342 = vadd.f32 0.0, %v1341
      %v1343 = vpop.f32.mrf.mxu0
      %v1344 = vpop.f32.mrf.mxu0
      %v1345 = vadd.f32 0.0, %v1344
      %v1346 = vpop.f32.mrf.mxu0
      %1347 = vdwg.mxu0
      %v1348 = vadd.f32 %v1187, %v1310
      %v1349 = vadd.f32 %v1188, %v1313
      %v1350 = vadd.f32 %v1189, %v1318
      %v1351 = vadd.f32 %v1190, %v1321
      %v1352 = vadd.f32 %v1191, %v1326
      %v1353 = vadd.f32 %v1192, %v1329
      %v1354 = vadd.f32 %v1193, %v1334
      %v1355 = vadd.f32 %v1194, %v1337
      %v1356 = vadd.f32 %v1195, %v1342
      %v1357 = vadd.f32 %v1196, %v1345
      %v1358 = vld [vmem:[%s219 + $0x8] sm:$0x8]
      %s1359 = scalar_lea.vmem %s1, 32
      %v1360 = vld [vmem:[%s1359] sm:$0xf]
      %v1362 = vunpack.c.l.b16 %v1358
      %v1363 = vpack.c.b16 %v1069, %v1362
      %vm1364 = vcmask 1044480
      %v1365 = vrot.slane %v1363, 3
      %v1366 = vrot.slane %v1080, 3
      %v1367 = vsel %vm1364, %v1365, %v1366
      %v1368 = vrot.slane %v1081, 3
      %v1369 = vsel %vm1364, %v1366, %v1368
      %v1370 = vrot.slane %v1082, 3
      %v1371 = vsel %vm1364, %v1368, %v1370
      %v1372 = vrot.slane %v1083, 3
      %v1373 = vsel %vm1364, %v1370, %v1372
      %v1374 = vrot.slane %v1202, 3
      %v1375 = vsel %vm1364, %v1372, %v1374
      %v1377 = vsel %vm313, %v1367, 0
      %v1380 = vsel %vm313, %v1369, 0
      %v1383 = vsel %vm313, %v1371, 0
      %v1386 = vsel %vm313, %v1373, 0
      %v1389 = vsel %vm313, %v1375, 0
      %v1392 = vsel %vm329, %v1360, 0
      %1394 = vmatprep.subr.bf16.mxu0 0
      %1395 = vmatpush1.bf16.msra.mxu0 0
      %1396 = vmatprep.subr.bf16.mxu0 0
      %1397 = vmatpush1.bf16.msra.mxu0 0
      %1398 = vmatprep.subr.bf16.mxu0 0
      %1399 = vmatpush1.bf16.msra.mxu0 0
      %1400 = vmatprep.subr.bf16.mxu0 0
      %1401 = vmatpush1.bf16.msra.mxu0 0
      %1402 = vmatprep.subr.bf16.mxu0 0
      %1403 = vmatpush1.bf16.msra.mxu0 0
      %1404 = vmatprep.subr.bf16.mxu0 0
      %1405 = vmatpush1.bf16.msra.mxu0 0
      %1406 = vmatprep.subr.bf16.mxu0 0
      %1407 = vmatpush1.bf16.msra.mxu0 0
      %1408 = vmatprep.subr.bf16.mxu0 0
      %1409 = vmatpush1.bf16.msra.mxu0 %v1392
      %1410 = vmatprep.subr.bf16.mxu0 0
      %1411 = vmatpush2.bf16.msra.mxu0 0
      %1412 = vmatprep.subr.bf16.mxu0 0
      %1413 = vmatpush2.bf16.msra.mxu0 0
      %1414 = vmatprep.subr.bf16.mxu0 0
      %1415 = vmatpush2.bf16.msra.mxu0 0
      %1416 = vmatprep.subr.bf16.mxu0 0
      %1417 = vmatpush2.bf16.msra.mxu0 0
      %1418 = vmatprep.subr.bf16.mxu0 0
      %1419 = vmatpush2.bf16.msra.mxu0 0
      %1420 = vmatprep.subr.bf16.mxu0 0
      %1421 = vmatpush2.bf16.msra.mxu0 0
      %1422 = vmatprep.subr.bf16.mxu0 0
      %1423 = vmatpush2.bf16.msra.mxu0 0
      %1424 = vmatprep.subr.bf16.mxu0 0
      %1425 = vmatpush2.bf16.msra.mxu0 0
      %1426 = vmatprep.mubr.bf16.mxu0 0
      %1427 = vmatmul.mubr.bf16.gmra.mxu0 %v1377
      %v1428 = vpop.f32.mrf.mxu0
      %v1429 = vadd.f32 0.0, %v1428
      %v1430 = vpop.f32.mrf.mxu0
      %v1431 = vpop.f32.mrf.mxu0
      %v1432 = vadd.f32 0.0, %v1431
      %v1433 = vpop.f32.mrf.mxu0
      %1434 = vmatprep.mubr.bf16.mxu0 0
      %1435 = vmatmul.mubr.bf16.gmra.mxu0 %v1380
      %v1436 = vpop.f32.mrf.mxu0
      %v1437 = vadd.f32 0.0, %v1436
      %v1438 = vpop.f32.mrf.mxu0
      %v1439 = vpop.f32.mrf.mxu0
      %v1440 = vadd.f32 0.0, %v1439
      %v1441 = vpop.f32.mrf.mxu0
      %1442 = vmatprep.mubr.bf16.mxu0 0
      %1443 = vmatmul.mubr.bf16.gmra.mxu0 %v1383
      %v1444 = vpop.f32.mrf.mxu0
      %v1445 = vadd.f32 0.0, %v1444
      %v1446 = vpop.f32.mrf.mxu0
      %v1447 = vpop.f32.mrf.mxu0
      %v1448 = vadd.f32 0.0, %v1447
      %v1449 = vpop.f32.mrf.mxu0
      %1450 = vmatprep.mubr.bf16.mxu0 0
      %1451 = vmatmul.mubr.bf16.gmra.mxu0 %v1386
      %v1452 = vpop.f32.mrf.mxu0
      %v1453 = vadd.f32 0.0, %v1452
      %v1454 = vpop.f32.mrf.mxu0
      %v1455 = vpop.f32.mrf.mxu0
      %v1456 = vadd.f32 0.0, %v1455
      %v1457 = vpop.f32.mrf.mxu0
      %1458 = vmatprep.mubr.bf16.mxu0 0
      %1459 = vmatmul.mubr.bf16.gmra.mxu0 %v1389
      %v1460 = vpop.f32.mrf.mxu0
      %v1461 = vadd.f32 0.0, %v1460
      %v1462 = vpop.f32.mrf.mxu0
      %v1463 = vpop.f32.mrf.mxu0
      %v1464 = vadd.f32 0.0, %v1463
      %v1465 = vpop.f32.mrf.mxu0
      %1466 = vdwg.mxu0
      %v1467 = vadd.f32 %v1348, %v1429
      %v1468 = vadd.f32 %v1349, %v1432
      %v1469 = vadd.f32 %v1350, %v1437
      %v1470 = vadd.f32 %v1351, %v1440
      %v1471 = vadd.f32 %v1352, %v1445
      %v1472 = vadd.f32 %v1353, %v1448
      %v1473 = vadd.f32 %v1354, %v1453
      %v1474 = vadd.f32 %v1355, %v1456
      %v1475 = vadd.f32 %v1356, %v1461
      %v1476 = vadd.f32 %v1357, %v1464
      %v1477 = vld [vmem:[%s2] sm:$0x1]
      %v1479 = vlaneseq
      %v1480 = vshrl.u32 %v1479, 7
      %v1481 = vsub.s32 0, %v1480
      %v1482 = vrot.slane %v1477, %v1481
      %v1484 = vadd.f32 %v1467, %v1482
      %v1485 = vadd.f32 %v1468, %v1482
      %v1486 = vadd.f32 %v1469, %v1482
      %v1487 = vadd.f32 %v1470, %v1482
      %v1488 = vadd.f32 %v1471, %v1482
      %v1489 = vadd.f32 %v1472, %v1482
      %v1490 = vadd.f32 %v1473, %v1482
      %v1491 = vadd.f32 %v1474, %v1482
      %v1492 = vadd.f32 %v1475, %v1482
      %v1493 = vadd.f32 %v1476, %v1482
      %v1494 = vmax.f32 %v1484, 0.0
      %v1495 = vmax.f32 %v1485, 0.0
      %v1496 = vmax.f32 %v1486, 0.0
      %v1497 = vmax.f32 %v1487, 0.0
      %v1498 = vmax.f32 %v1488, 0.0
      %v1499 = vmax.f32 %v1489, 0.0
      %v1500 = vmax.f32 %v1490, 0.0
      %v1501 = vmax.f32 %v1491, 0.0
      %v1502 = vmax.f32 %v1492, 0.0
      %v1503 = vmax.f32 %v1493, 0.0
      %v1504 = vpack.c.bf16 %v1495, %v1494
      %v1505 = vpack.c.bf16 %v1497, %v1496
      %v1506 = vpack.c.bf16 %v1499, %v1498
      %v1507 = vpack.c.bf16 %v1501, %v1500
      %v1508 = vpack.c.bf16 %v1503, %v1502
      %v1509 = vld [vmem:[%s3] sm:$0xf]
      %v1510 = vld [vmem:[%s4] sm:$0x1]
      %v1512 = vlaneseq
      %v1513 = vshrl.u32 %v1512, 7
      %v1514 = vsub.s32 0, %v1513
      %v1515 = vrot.slane %v1510, %v1514
      %v1518 = vsel %vm313, %v1504, 0
      %v1521 = vsel %vm313, %v1505, 0
      %v1524 = vsel %vm313, %v1506, 0
      %v1527 = vsel %vm313, %v1507, 0
      %v1530 = vsel %vm313, %v1508, 0
      %v1533 = vsel %vm329, %v1509, 0
      %1535 = vmatprep.subr.bf16.mxu0 0
      %1536 = vmatpush1.bf16.msra.mxu0 0
      %1537 = vmatprep.subr.bf16.mxu0 0
      %1538 = vmatpush1.bf16.msra.mxu0 0
      %1539 = vmatprep.subr.bf16.mxu0 0
      %1540 = vmatpush1.bf16.msra.mxu0 0
      %1541 = vmatprep.subr.bf16.mxu0 0
      %1542 = vmatpush1.bf16.msra.mxu0 0
      %1543 = vmatprep.subr.bf16.mxu0 0
      %1544 = vmatpush1.bf16.msra.mxu0 0
      %1545 = vmatprep.subr.bf16.mxu0 0
      %1546 = vmatpush1.bf16.msra.mxu0 0
      %1547 = vmatprep.subr.bf16.mxu0 0
      %1548 = vmatpush1.bf16.msra.mxu0 0
      %1549 = vmatprep.subr.bf16.mxu0 0
      %1550 = vmatpush1.bf16.msra.mxu0 %v1533
      %1551 = vmatprep.subr.bf16.mxu0 0
      %1552 = vmatpush2.bf16.msra.mxu0 0
      %1553 = vmatprep.subr.bf16.mxu0 0
      %1554 = vmatpush2.bf16.msra.mxu0 0
      %1555 = vmatprep.subr.bf16.mxu0 0
      %1556 = vmatpush2.bf16.msra.mxu0 0
      %1557 = vmatprep.subr.bf16.mxu0 0
      %1558 = vmatpush2.bf16.msra.mxu0 0
      %1559 = vmatprep.subr.bf16.mxu0 0
      %1560 = vmatpush2.bf16.msra.mxu0 0
      %1561 = vmatprep.subr.bf16.mxu0 0
      %1562 = vmatpush2.bf16.msra.mxu0 0
      %1563 = vmatprep.subr.bf16.mxu0 0
      %1564 = vmatpush2.bf16.msra.mxu0 0
      %1565 = vmatprep.subr.bf16.mxu0 0
      %1566 = vmatpush2.bf16.msra.mxu0 0
      %1567 = vmatprep.mubr.bf16.mxu0 0
      %1568 = vmatmul.mubr.bf16.gmra.mxu0 %v1518
      %v1569 = vpop.f32.mrf.mxu0
      %v1570 = vadd.f32 %v1515, %v1569
      %v1571 = vpop.f32.mrf.mxu0
      %v1572 = vpop.f32.mrf.mxu0
      %v1573 = vadd.f32 %v1515, %v1572
      %v1574 = vpop.f32.mrf.mxu0
      %1575 = vmatprep.mubr.bf16.mxu0 0
      %1576 = vmatmul.mubr.bf16.gmra.mxu0 %v1521
      %v1577 = vpop.f32.mrf.mxu0
      %v1578 = vadd.f32 %v1515, %v1577
      %v1579 = vpop.f32.mrf.mxu0
      %v1580 = vpop.f32.mrf.mxu0
      %v1581 = vadd.f32 %v1515, %v1580
      %v1582 = vpop.f32.mrf.mxu0
      %1583 = vmatprep.mubr.bf16.mxu0 0
      %1584 = vmatmul.mubr.bf16.gmra.mxu0 %v1524
      %v1585 = vpop.f32.mrf.mxu0
      %v1586 = vadd.f32 %v1515, %v1585
      %v1587 = vpop.f32.mrf.mxu0
      %v1588 = vpop.f32.mrf.mxu0
      %v1589 = vadd.f32 %v1515, %v1588
      %v1590 = vpop.f32.mrf.mxu0
      %1591 = vmatprep.mubr.bf16.mxu0 0
      %1592 = vmatmul.mubr.bf16.gmra.mxu0 %v1527
      %v1593 = vpop.f32.mrf.mxu0
      %v1594 = vadd.f32 %v1515, %v1593
      %v1595 = vpop.f32.mrf.mxu0
      %v1596 = vpop.f32.mrf.mxu0
      %v1597 = vadd.f32 %v1515, %v1596
      %v1598 = vpop.f32.mrf.mxu0
      %1599 = vmatprep.mubr.bf16.mxu0 0
      %1600 = vmatmul.mubr.bf16.gmra.mxu0 %v1530
      %v1601 = vpop.f32.mrf.mxu0
      %v1602 = vadd.f32 %v1515, %v1601
      %v1603 = vpop.f32.mrf.mxu0
      %v1604 = vpop.f32.mrf.mxu0
      %v1605 = vadd.f32 %v1515, %v1604
      %v1606 = vpop.f32.mrf.mxu0
      %1607 = vdwg.mxu0
      %vm1608 = vcmask 15360
      %1609 = vst.msk [vmem:[%s224] sm:$0xff] %vm1608, %v1570
      %1610 = vst.msk [vmem:[%s224 + $0x8] sm:$0xff] %vm1608, %v1573
      %1611 = vst.msk [vmem:[%s224 + $0x10] sm:$0xff] %vm1608, %v1578
      %1612 = vst.msk [vmem:[%s224 + $0x18] sm:$0xff] %vm1608, %v1581
      %1613 = vst.msk [vmem:[%s224 + $0x20] sm:$0xff] %vm1608, %v1586
      %1614 = vst.msk [vmem:[%s224 + $0x28] sm:$0xff] %vm1608, %v1589
      %1615 = vst.msk [vmem:[%s224 + $0x30] sm:$0xff] %vm1608, %v1594
      %1616 = vst.msk [vmem:[%s224 + $0x38] sm:$0xff] %vm1608, %v1597
      %1617 = vst.msk [vmem:[%s224 + $0x40] sm:$0xff] %vm1608, %v1602
      %1618 = vst.msk [vmem:[%s224 + $0x48] sm:$0xff] %vm1608, %v1605
      %p1619 = scmp.lt.s32.totalorder %s16, 1
      %s1620 = scalar_select %p1619, %s16, 1
      %s1621 = smul.addr %s1620, 10
      %s1622 = smul.addr %s1621, 8
      %s1623 = scalar_lea.vmem %s5, %s1622
      // Predicated region
      $region41: #{change_detection_forward.19} parent=39 // pred_check
        %p1624 = pneg %p144
      $region42: #{change_detection_forward.19} parent=39 // pred_check_branch
        %1626 = sbr.rel (%p1624) target = $region44
      $region43: #{change_detection_forward.19} parent=39 // pred_region
        _
      $region44: #{change_detection_forward.19} parent=39 // pred_fallthru
        _
    $region40: #{change_detection_forward.19} parent=5 // pred_fallthru
      _
    %p1627 = scmp.le.s32.totalorder 2, %s11
    // Predicated region
    $region45: #{change_detection_forward.19} parent=5 // pred_check
      %p1628 = pneg %p1627
    $region46: #{change_detection_forward.19} parent=5 // pred_check_branch
      %1630 = sbr.rel (%p1628) target = $region48
    $region47: #{change_detection_forward.19} parent=5 // pred_region
      %s1631 = ssub.s32 %s11, 2
      // Predicated region
      $region49: #{change_detection_forward.19} parent=47 // pred_check
        %p1632 = pneg %p150
      $region50: #{change_detection_forward.19} parent=47 // pred_check_branch
        %1634 = sbr.rel (%p1632) target = $region52
      $region51: #{change_detection_forward.19} parent=47 // pred_region
        %p1635 = scmp.lt.s32.totalorder %s17, 1
        %s1636 = scalar_select %p1635, %s17, 1
        %s1637 = smul.addr %s1636, 10
        %s1638 = smul.addr %s1637, 8
        %s1639 = scalar_lea.vmem %s5, %s1638
      $region52: #{change_detection_forward.19} parent=47 // pred_fallthru
        _
    $region48: #{change_detection_forward.19} parent=5 // pred_fallthru
      _
  $region6: #{change_detection_forward.19} parent=0 // loop_footer
    %s15 = sadd.s32 1, %s11
  $region7: #{change_detection_forward.19} parent=0 // loop_footer_branch
    %10 = sbr.rel target = $region3
  $region8: #{change_detection_forward.19} parent=0 // loop_exit
    _

</llo_original>
